<compile_context>
chip_gen: v7x
topology: tpu7x:2x2x1
jax: 0.10.0
libtpu: 0.0.40
codegen_flags: <defaults>
</compile_context>

<pallas_src>
import math

import jax
import jax.numpy as jnp
from jax.experimental import pallas as pl
from jax.experimental.pallas import tpu as pltpu

# MLP layer sizes (from the nn.Sequential in the PyTorch module).
LAYER_SIZES = [5, 100, 200, 400, 100, 25, 5, 1]
# Padded sizes used inside the kernel.  Hidden dims are lane-aligned
# (multiples of 128) so every matmul is a clean MXU tile; the input (5) and
# output (1) dims are padded only to 8 lanes (legal as full-extent last dims)
# to keep the streamed HBM bytes per row tiny.
PADDED = [8, 128, 256, 512, 128, 128, 128, 8]

TB_MAX = 2048            # max batch-tile rows (multiple of 256)


def _round_up(n, m):
    return -(-n // m) * m


def _epilogue_dtype():
    """bf16 bias-add/ReLU on v6e/v7x (native bf16 VPU); f32 on v5e."""
    try:
        kind = jax.devices()[0].device_kind.lower()
    except Exception:
        return jnp.bfloat16
    if "v5 lite" in kind or "v5lite" in kind or "v5e" in kind:
        return jnp.float32
    return jnp.bfloat16


def _pick_tiling(batch):
    """Pick (tb, batch_p): tile rows (multiple of 256, <= TB_MAX) and padded
    batch.  Ensures >= 2 grid steps when there are >= 2 256-row chunks so the
    'parallel' batch axis can shard across v7x's two TensorCores."""
    batch_256 = _round_up(max(batch, 1), 256)
    n_chunks = batch_256 // 256
    if n_chunks >= 2:
        n_tiles = max(2, pl.cdiv(n_chunks, TB_MAX // 256))
        tb = 256 * pl.cdiv(n_chunks, n_tiles)
    else:
        tb = 256
    batch_p = _round_up(batch_256, tb)
    return tb, batch_p


def mlp_kernel(x_ref, *refs):
    """Fused 7-layer MLP forward on one (TB, 8) batch tile.

    refs = (w1, b1, ..., w7, b7, o_ref).  Weights are bf16 and zero-padded to
    PADDED shapes; biases are (1, out_pad) in the epilogue dtype.  Matmuls
    accumulate in f32 on the MXU; bias-add/ReLU run in the bias dtype.
    """
    o_ref = refs[-1]
    wb = refs[:-1]
    n_layers = len(wb) // 2

    h = x_ref[...]                                   # (TB, 8) bf16
    for l in range(n_layers):
        w_ref = wb[2 * l]
        b_ref = wb[2 * l + 1]
        acc = jnp.dot(h, w_ref[...], preferred_element_type=jnp.float32)
        y = acc.astype(b_ref.dtype) + b_ref[...]     # (1, out_pad) broadcast
        if l < n_layers - 1:
            h = jnp.maximum(y, 0).astype(jnp.bfloat16)
        else:
            o_ref[...] = y.astype(o_ref.dtype)       # (TB, 8) f32


def prepare_params(params, epilogue_dtype=None):
    """Pad + cast weights/biases ONCE (hoisted out of the per-call path).

    params: list of (W:(in,out), b:(out,)) f32.
    Returns a flat tuple (w1, b1, ..., w7, b7): weights bf16 zero-padded to
    (PADDED[l], PADDED[l+1]); biases (1, PADDED[l+1]) in the epilogue dtype.
    Zero padding is exact: zero weight rows/cols + zero bias + ReLU(0)=0.
    """
    if epilogue_dtype is None:
        epilogue_dtype = _epilogue_dtype()
    flat = []
    for l, (w, b) in enumerate(params):
        kp, npad = PADDED[l], PADDED[l + 1]
        w_p = jnp.zeros((kp, npad), jnp.bfloat16)
        w_p = w_p.at[:w.shape[0], :w.shape[1]].set(w.astype(jnp.bfloat16))
        b_p = jnp.zeros((1, npad), epilogue_dtype)
        b_p = b_p.at[:, :b.shape[-1]].set(
            b.reshape(1, -1).astype(epilogue_dtype))
        flat += [w_p, b_p]
    return tuple(flat)


@jax.jit
def feedforward_nn(x, flat_params):
    """x: (batch, 5) f32.  flat_params: output of prepare_params().

    Returns (batch, 1) f32.
    """
    batch = x.shape[0]
    tb, batch_p = _pick_tiling(batch)
    in_pad, out_pad = PADDED[0], PADDED[-1]
    n_layers = len(LAYER_SIZES) - 1

    # Narrow bf16 input slab: 16 B/row streamed instead of 512 B/row f32.
    x_p = jnp.zeros((batch_p, in_pad), jnp.bfloat16)
    x_p = x_p.at[:batch, :LAYER_SIZES[0]].set(x.astype(jnp.bfloat16))

    in_specs = [pl.BlockSpec((tb, in_pad), lambda i: (i, 0))]
    for l in range(n_layers):
        kp, npad = PADDED[l], PADDED[l + 1]
        # Constant block index every grid step -> weights/biases VMEM-resident.
        in_specs += [pl.BlockSpec((kp, npad), lambda i: (0, 0)),
                     pl.BlockSpec((1, npad), lambda i: (0, 0))]

    # Advisory cost estimate for XLA's scheduler.
    flops = 2 * batch_p * sum(PADDED[l] * PADDED[l + 1]
                              for l in range(n_layers))
    bytes_accessed = (batch_p * (in_pad * 2 + out_pad * 4)
                      + sum(PADDED[l] * PADDED[l + 1] * 2 + PADDED[l + 1] * 4
                            for l in range(n_layers)))

    out = pl.pallas_call(
        mlp_kernel,
        out_shape=jax.ShapeDtypeStruct((batch_p, out_pad), jnp.float32),
        grid=(batch_p // tb,),
        in_specs=in_specs,
        # Narrow (TB, 8) output block: only ~32 B/row written back.
        out_specs=pl.BlockSpec((tb, out_pad), lambda i: (i, 0)),
        compiler_params=pltpu.CompilerParams(
            dimension_semantics=("parallel",)),
        cost_estimate=pl.CostEstimate(flops=flops, transcendentals=0,
                                      bytes_accessed=bytes_accessed),
    )(x_p, *flat_params)

    # Strip batch + lane padding: real output is column 0.
    return out[:batch, :LAYER_SIZES[-1]]


def init_params(key, dtype=jnp.float32):
    """kaiming_uniform_(nonlinearity='relu') weights, zero biases — matches
    the PyTorch module's init_weights.  W stored as (in, out)."""
    params = []
    for fan_in, fan_out in zip(LAYER_SIZES[:-1], LAYER_SIZES[1:]):
        key, sub = jax.random.split(key)
        bound = math.sqrt(6.0 / fan_in)   # sqrt(2) * sqrt(3 / fan_in)
        w = jax.random.uniform(sub, (fan_in, fan_out), dtype=dtype,
                               minval=-bound, maxval=bound)
        b = jnp.zeros((fan_out,), dtype=dtype)
        params.append((w, b))
    return params


def reference_forward(x, params, epilogue_dtype):
    """Pure-JAX reference using the same bf16-operand / f32-accumulate math
    and the same epilogue dtype as the kernel."""
    h = x.astype(jnp.bfloat16)
    for i, (w, b) in enumerate(params):
        acc = jnp.dot(h, w.astype(jnp.bfloat16),
                      preferred_element_type=jnp.float32)
        y = acc.astype(epilogue_dtype) + b.reshape(1, -1).astype(epilogue_dtype)
        if i < len(params) - 1:
            h = jnp.maximum(y, 0).astype(jnp.bfloat16)
        else:
            h = y.astype(jnp.float32)
    return h


if __name__ == "__main__":
    key = jax.random.PRNGKey(0)
    pkey, xkey = jax.random.split(key)

    params = init_params(pkey)
    flat_params = prepare_params(params)          # pad/cast once, reused

    batch = 8
    x = jax.random.normal(xkey, (batch, LAYER_SIZES[0]), dtype=jnp.float32)

    out = feedforward_nn(x, flat_params)
    out = jax.block_until_ready(out)

    ref = reference_forward(x, params, flat_params[1].dtype)
    assert out.shape == (batch, 1), out.shape
    assert jnp.allclose(out, ref, atol=1e-3, rtol=1e-3), (out, ref)

    print("KERNEL_OK")
</pallas_src>

<mosaic_0001>
module attributes {stable_mosaic.version = 11 : i64} {
  func.func @mlp_kernel(%arg0: i32, %arg1: memref<256x8xbf16, #tpu.memory_space<vmem>>, %arg2: memref<8x128xbf16, #tpu.memory_space<vmem>>, %arg3: memref<1x128xbf16, #tpu.memory_space<vmem>>, %arg4: memref<128x256xbf16, #tpu.memory_space<vmem>>, %arg5: memref<1x256xbf16, #tpu.memory_space<vmem>>, %arg6: memref<256x512xbf16, #tpu.memory_space<vmem>>, %arg7: memref<1x512xbf16, #tpu.memory_space<vmem>>, %arg8: memref<512x128xbf16, #tpu.memory_space<vmem>>, %arg9: memref<1x128xbf16, #tpu.memory_space<vmem>>, %arg10: memref<128x128xbf16, #tpu.memory_space<vmem>>, %arg11: memref<1x128xbf16, #tpu.memory_space<vmem>>, %arg12: memref<128x128xbf16, #tpu.memory_space<vmem>>, %arg13: memref<1x128xbf16, #tpu.memory_space<vmem>>, %arg14: memref<128x8xbf16, #tpu.memory_space<vmem>>, %arg15: memref<1x8xbf16, #tpu.memory_space<vmem>>, %arg16: memref<256x8xf32, #tpu.memory_space<vmem>>) attributes {dimension_semantics = [#tpu.dimension_semantics<parallel>], iteration_bounds = array<i64: 1>, scalar_prefetch = 0 : i64, scratch_operands = 0 : i64, tpu.core_type = #tpu.core_type<tc>, window_params = [{transform_indices = @transform_0, window_bounds = array<i64: 256, 8>}, {pipeline_mode = #tpu.pipeline_mode<synchronous>, transform_indices = @transform_1, window_bounds = array<i64: 8, 128>}, {pipeline_mode = #tpu.pipeline_mode<synchronous>, transform_indices = @transform_2, window_bounds = array<i64: 1, 128>}, {pipeline_mode = #tpu.pipeline_mode<synchronous>, transform_indices = @transform_3, window_bounds = array<i64: 128, 256>}, {pipeline_mode = #tpu.pipeline_mode<synchronous>, transform_indices = @transform_4, window_bounds = array<i64: 1, 256>}, {pipeline_mode = #tpu.pipeline_mode<synchronous>, transform_indices = @transform_5, window_bounds = array<i64: 256, 512>}, {pipeline_mode = #tpu.pipeline_mode<synchronous>, transform_indices = @transform_6, window_bounds = array<i64: 1, 512>}, {pipeline_mode = #tpu.pipeline_mode<synchronous>, transform_indices = @transform_7, window_bounds = array<i64: 512, 128>}, {pipeline_mode = #tpu.pipeline_mode<synchronous>, transform_indices = @transform_8, window_bounds = array<i64: 1, 128>}, {pipeline_mode = #tpu.pipeline_mode<synchronous>, transform_indices = @transform_9, window_bounds = array<i64: 128, 128>}, {pipeline_mode = #tpu.pipeline_mode<synchronous>, transform_indices = @transform_10, window_bounds = array<i64: 1, 128>}, {pipeline_mode = #tpu.pipeline_mode<synchronous>, transform_indices = @transform_11, window_bounds = array<i64: 128, 128>}, {pipeline_mode = #tpu.pipeline_mode<synchronous>, transform_indices = @transform_12, window_bounds = array<i64: 1, 128>}, {pipeline_mode = #tpu.pipeline_mode<synchronous>, transform_indices = @transform_13, window_bounds = array<i64: 128, 8>}, {pipeline_mode = #tpu.pipeline_mode<synchronous>, transform_indices = @transform_14, window_bounds = array<i64: 1, 8>}, {transform_indices = @transform_15, window_bounds = array<i64: 256, 8>}]} {
    %c0 = arith.constant 0 : index
    %c0_0 = arith.constant 0 : index
    %0 = vector.load %arg1[%c0, %c0_0] : memref<256x8xbf16, #tpu.memory_space<vmem>>, vector<256x8xbf16>
    %c0_1 = arith.constant 0 : index
    %c0_2 = arith.constant 0 : index
    %1 = vector.load %arg2[%c0_1, %c0_2] : memref<8x128xbf16, #tpu.memory_space<vmem>>, vector<8x128xbf16>
    %cst = arith.constant dense<0.000000e+00> : vector<256x128xf32>
    %2 = tpu.matmul %0, %1, %cst {dimension_numbers = #tpu.dot_dimension_numbers<[1], [0], [0], [1], [0, 0, 1, 1], [], []>} : vector<256x8xbf16>, vector<8x128xbf16>, vector<256x128xf32> -> vector<256x128xf32>
    %3 = arith.truncf %2 : vector<256x128xf32> to vector<256x128xbf16>
    %c0_3 = arith.constant 0 : index
    %c0_4 = arith.constant 0 : index
    %4 = vector.load %arg3[%c0_3, %c0_4] : memref<1x128xbf16, #tpu.memory_space<vmem>>, vector<1x128xbf16>
    %5 = vector.broadcast %4 : vector<1x128xbf16> to vector<256x128xbf16>
    %6 = arith.addf %3, %5 : vector<256x128xbf16>
    %cst_5 = arith.constant 0.000000e+00 : bf16
    %7 = vector.broadcast %cst_5 : bf16 to vector<256x128xbf16>
    %8 = arith.maximumf %6, %7 : vector<256x128xbf16>
    %c0_6 = arith.constant 0 : index
    %c0_7 = arith.constant 0 : index
    %9 = vector.load %arg4[%c0_6, %c0_7] : memref<128x256xbf16, #tpu.memory_space<vmem>>, vector<128x256xbf16>
    %cst_8 = arith.constant dense<0.000000e+00> : vector<256x256xf32>
    %10 = tpu.matmul %8, %9, %cst_8 {dimension_numbers = #tpu.dot_dimension_numbers<[1], [0], [0], [1], [0, 0, 1, 1], [], []>} : vector<256x128xbf16>, vector<128x256xbf16>, vector<256x256xf32> -> vector<256x256xf32>
    %11 = arith.truncf %10 : vector<256x256xf32> to vector<256x256xbf16>
    %c0_9 = arith.constant 0 : index
    %c0_10 = arith.constant 0 : index
    %12 = vector.load %arg5[%c0_9, %c0_10] : memref<1x256xbf16, #tpu.memory_space<vmem>>, vector<1x256xbf16>
    %13 = vector.broadcast %12 : vector<1x256xbf16> to vector<256x256xbf16>
    %14 = arith.addf %11, %13 : vector<256x256xbf16>
    %cst_11 = arith.constant 0.000000e+00 : bf16
    %15 = vector.broadcast %cst_11 : bf16 to vector<256x256xbf16>
    %16 = arith.maximumf %14, %15 : vector<256x256xbf16>
    %c0_12 = arith.constant 0 : index
    %c0_13 = arith.constant 0 : index
    %17 = vector.load %arg6[%c0_12, %c0_13] : memref<256x512xbf16, #tpu.memory_space<vmem>>, vector<256x512xbf16>
    %cst_14 = arith.constant dense<0.000000e+00> : vector<256x512xf32>
    %18 = tpu.matmul %16, %17, %cst_14 {dimension_numbers = #tpu.dot_dimension_numbers<[1], [0], [0], [1], [0, 0, 1, 1], [], []>} : vector<256x256xbf16>, vector<256x512xbf16>, vector<256x512xf32> -> vector<256x512xf32>
    %19 = arith.truncf %18 : vector<256x512xf32> to vector<256x512xbf16>
    %c0_15 = arith.constant 0 : index
    %c0_16 = arith.constant 0 : index
    %20 = vector.load %arg7[%c0_15, %c0_16] : memref<1x512xbf16, #tpu.memory_space<vmem>>, vector<1x512xbf16>
    %21 = vector.broadcast %20 : vector<1x512xbf16> to vector<256x512xbf16>
    %22 = arith.addf %19, %21 : vector<256x512xbf16>
    %cst_17 = arith.constant 0.000000e+00 : bf16
    %23 = vector.broadcast %cst_17 : bf16 to vector<256x512xbf16>
    %24 = arith.maximumf %22, %23 : vector<256x512xbf16>
    %c0_18 = arith.constant 0 : index
    %c0_19 = arith.constant 0 : index
    %25 = vector.load %arg8[%c0_18, %c0_19] : memref<512x128xbf16, #tpu.memory_space<vmem>>, vector<512x128xbf16>
    %cst_20 = arith.constant dense<0.000000e+00> : vector<256x128xf32>
    %26 = tpu.matmul %24, %25, %cst_20 {dimension_numbers = #tpu.dot_dimension_numbers<[1], [0], [0], [1], [0, 0, 1, 1], [], []>} : vector<256x512xbf16>, vector<512x128xbf16>, vector<256x128xf32> -> vector<256x128xf32>
    %27 = arith.truncf %26 : vector<256x128xf32> to vector<256x128xbf16>
    %c0_21 = arith.constant 0 : index
    %c0_22 = arith.constant 0 : index
    %28 = vector.load %arg9[%c0_21, %c0_22] : memref<1x128xbf16, #tpu.memory_space<vmem>>, vector<1x128xbf16>
    %29 = vector.broadcast %28 : vector<1x128xbf16> to vector<256x128xbf16>
    %30 = arith.addf %27, %29 : vector<256x128xbf16>
    %cst_23 = arith.constant 0.000000e+00 : bf16
    %31 = vector.broadcast %cst_23 : bf16 to vector<256x128xbf16>
    %32 = arith.maximumf %30, %31 : vector<256x128xbf16>
    %c0_24 = arith.constant 0 : index
    %c0_25 = arith.constant 0 : index
    %33 = vector.load %arg10[%c0_24, %c0_25] : memref<128x128xbf16, #tpu.memory_space<vmem>>, vector<128x128xbf16>
    %cst_26 = arith.constant dense<0.000000e+00> : vector<256x128xf32>
    %34 = tpu.matmul %32, %33, %cst_26 {dimension_numbers = #tpu.dot_dimension_numbers<[1], [0], [0], [1], [0, 0, 1, 1], [], []>} : vector<256x128xbf16>, vector<128x128xbf16>, vector<256x128xf32> -> vector<256x128xf32>
    %35 = arith.truncf %34 : vector<256x128xf32> to vector<256x128xbf16>
    %c0_27 = arith.constant 0 : index
    %c0_28 = arith.constant 0 : index
    %36 = vector.load %arg11[%c0_27, %c0_28] : memref<1x128xbf16, #tpu.memory_space<vmem>>, vector<1x128xbf16>
    %37 = vector.broadcast %36 : vector<1x128xbf16> to vector<256x128xbf16>
    %38 = arith.addf %35, %37 : vector<256x128xbf16>
    %cst_29 = arith.constant 0.000000e+00 : bf16
    %39 = vector.broadcast %cst_29 : bf16 to vector<256x128xbf16>
    %40 = arith.maximumf %38, %39 : vector<256x128xbf16>
    %c0_30 = arith.constant 0 : index
    %c0_31 = arith.constant 0 : index
    %41 = vector.load %arg12[%c0_30, %c0_31] : memref<128x128xbf16, #tpu.memory_space<vmem>>, vector<128x128xbf16>
    %cst_32 = arith.constant dense<0.000000e+00> : vector<256x128xf32>
    %42 = tpu.matmul %40, %41, %cst_32 {dimension_numbers = #tpu.dot_dimension_numbers<[1], [0], [0], [1], [0, 0, 1, 1], [], []>} : vector<256x128xbf16>, vector<128x128xbf16>, vector<256x128xf32> -> vector<256x128xf32>
    %43 = arith.truncf %42 : vector<256x128xf32> to vector<256x128xbf16>
    %c0_33 = arith.constant 0 : index
    %c0_34 = arith.constant 0 : index
    %44 = vector.load %arg13[%c0_33, %c0_34] : memref<1x128xbf16, #tpu.memory_space<vmem>>, vector<1x128xbf16>
    %45 = vector.broadcast %44 : vector<1x128xbf16> to vector<256x128xbf16>
    %46 = arith.addf %43, %45 : vector<256x128xbf16>
    %cst_35 = arith.constant 0.000000e+00 : bf16
    %47 = vector.broadcast %cst_35 : bf16 to vector<256x128xbf16>
    %48 = arith.maximumf %46, %47 : vector<256x128xbf16>
    %c0_36 = arith.constant 0 : index
    %c0_37 = arith.constant 0 : index
    %49 = vector.load %arg14[%c0_36, %c0_37] : memref<128x8xbf16, #tpu.memory_space<vmem>>, vector<128x8xbf16>
    %cst_38 = arith.constant dense<0.000000e+00> : vector<256x8xf32>
    %50 = tpu.matmul %48, %49, %cst_38 {dimension_numbers = #tpu.dot_dimension_numbers<[1], [0], [0], [1], [0, 0, 1, 1], [], []>} : vector<256x128xbf16>, vector<128x8xbf16>, vector<256x8xf32> -> vector<256x8xf32>
    %51 = arith.truncf %50 : vector<256x8xf32> to vector<256x8xbf16>
    %c0_39 = arith.constant 0 : index
    %c0_40 = arith.constant 0 : index
    %52 = vector.load %arg15[%c0_39, %c0_40] : memref<1x8xbf16, #tpu.memory_space<vmem>>, vector<1x8xbf16>
    %53 = vector.broadcast %52 : vector<1x8xbf16> to vector<256x8xbf16>
    %54 = arith.addf %51, %53 : vector<256x8xbf16>
    %55 = arith.extf %54 : vector<256x8xbf16> to vector<256x8xf32>
    %c0_41 = arith.constant 0 : index
    %c0_42 = arith.constant 0 : index
    %56 = vector.load %arg16[%c0_41, %c0_42] : memref<256x8xf32, #tpu.memory_space<vmem>>, vector<256x8xf32>
    tpu.vector_store %arg16[%c0_41, %c0_42], %55 {strides = array<i32>} : memref<256x8xf32, #tpu.memory_space<vmem>>, vector<256x8xf32>,
    return
  }
  func.func @transform_0(%arg0: i32) -> (i32, i32) {
    %c0_i32 = arith.constant 0 : i32
    %c0_i32_0 = arith.constant 0 : i32
    return %arg0, %c0_i32 : i32, i32
  }
  func.func @transform_1(%arg0: i32) -> (i32, i32) {
    %c0_i32 = arith.constant 0 : i32
    %c0_i32_0 = arith.constant 0 : i32
    %c0_i32_1 = arith.constant 0 : i32
    return %c0_i32, %c0_i32_0 : i32, i32
  }
  func.func @transform_2(%arg0: i32) -> (i32, i32) {
    %c0_i32 = arith.constant 0 : i32
    %c0_i32_0 = arith.constant 0 : i32
    %c0_i32_1 = arith.constant 0 : i32
    return %c0_i32, %c0_i32_0 : i32, i32
  }
  func.func @transform_3(%arg0: i32) -> (i32, i32) {
    %c0_i32 = arith.constant 0 : i32
    %c0_i32_0 = arith.constant 0 : i32
    %c0_i32_1 = arith.constant 0 : i32
    return %c0_i32, %c0_i32_0 : i32, i32
  }
  func.func @transform_4(%arg0: i32) -> (i32, i32) {
    %c0_i32 = arith.constant 0 : i32
    %c0_i32_0 = arith.constant 0 : i32
    %c0_i32_1 = arith.constant 0 : i32
    return %c0_i32, %c0_i32_0 : i32, i32
  }
  func.func @transform_5(%arg0: i32) -> (i32, i32) {
    %c0_i32 = arith.constant 0 : i32
    %c0_i32_0 = arith.constant 0 : i32
    %c0_i32_1 = arith.constant 0 : i32
    return %c0_i32, %c0_i32_0 : i32, i32
  }
  func.func @transform_6(%arg0: i32) -> (i32, i32) {
    %c0_i32 = arith.constant 0 : i32
    %c0_i32_0 = arith.constant 0 : i32
    %c0_i32_1 = arith.constant 0 : i32
    return %c0_i32, %c0_i32_0 : i32, i32
  }
  func.func @transform_7(%arg0: i32) -> (i32, i32) {
    %c0_i32 = arith.constant 0 : i32
    %c0_i32_0 = arith.constant 0 : i32
    %c0_i32_1 = arith.constant 0 : i32
    return %c0_i32, %c0_i32_0 : i32, i32
  }
  func.func @transform_8(%arg0: i32) -> (i32, i32) {
    %c0_i32 = arith.constant 0 : i32
    %c0_i32_0 = arith.constant 0 : i32
    %c0_i32_1 = arith.constant 0 : i32
    return %c0_i32, %c0_i32_0 : i32, i32
  }
  func.func @transform_9(%arg0: i32) -> (i32, i32) {
    %c0_i32 = arith.constant 0 : i32
    %c0_i32_0 = arith.constant 0 : i32
    %c0_i32_1 = arith.constant 0 : i32
    return %c0_i32, %c0_i32_0 : i32, i32
  }
  func.func @transform_10(%arg0: i32) -> (i32, i32) {
    %c0_i32 = arith.constant 0 : i32
    %c0_i32_0 = arith.constant 0 : i32
    %c0_i32_1 = arith.constant 0 : i32
    return %c0_i32, %c0_i32_0 : i32, i32
  }
  func.func @transform_11(%arg0: i32) -> (i32, i32) {
    %c0_i32 = arith.constant 0 : i32
    %c0_i32_0 = arith.constant 0 : i32
    %c0_i32_1 = arith.constant 0 : i32
    return %c0_i32, %c0_i32_0 : i32, i32
  }
  func.func @transform_12(%arg0: i32) -> (i32, i32) {
    %c0_i32 = arith.constant 0 : i32
    %c0_i32_0 = arith.constant 0 : i32
    %c0_i32_1 = arith.constant 0 : i32
    return %c0_i32, %c0_i32_0 : i32, i32
  }
  func.func @transform_13(%arg0: i32) -> (i32, i32) {
    %c0_i32 = arith.constant 0 : i32
    %c0_i32_0 = arith.constant 0 : i32
    %c0_i32_1 = arith.constant 0 : i32
    return %c0_i32, %c0_i32_0 : i32, i32
  }
  func.func @transform_14(%arg0: i32) -> (i32, i32) {
    %c0_i32 = arith.constant 0 : i32
    %c0_i32_0 = arith.constant 0 : i32
    %c0_i32_1 = arith.constant 0 : i32
    return %c0_i32, %c0_i32_0 : i32, i32
  }
  func.func @transform_15(%arg0: i32) -> (i32, i32) {
    %c0_i32 = arith.constant 0 : i32
    %c0_i32_0 = arith.constant 0 : i32
    return %arg0, %c0_i32 : i32, i32
  }
}

</mosaic_0001>

<llo_original>
// kernel: feedforward_nn.1
$region0: #{feedforward_nn.1}
  #allocation0 [shape = 'u32[]', space=smem, size = 0x4, offset = 0x4, fixed_abs, tag = 'smem constant byte address 0x4 - core index']
  #allocation1 [shape = 'u32[144,128]{1,0:T(1,128)}', space=vmem, size = 0x12000, scoped, tag = 'internal scratch']
  %s0 = inlined_call_operand.vmem [shape: bf16[256,8], index: 0, kind: input, shape index: {}]
  %s1 = inlined_call_operand.vmem [shape: bf16[8,128], index: 1, kind: input, shape index: {}]
  %s2 = inlined_call_operand.vmem [shape: bf16[1,128], index: 2, kind: input, shape index: {}]
  %s3 = inlined_call_operand.vmem [shape: bf16[128,256], index: 3, kind: input, shape index: {}]
  %s4 = inlined_call_operand.vmem [shape: bf16[1,256], index: 4, kind: input, shape index: {}]
  %s5 = inlined_call_operand.hbm [shape: bf16[256,512], index: 5, kind: input, shape index: {}]
  %s6 = inlined_call_operand.vmem [shape: bf16[1,512], index: 6, kind: input, shape index: {}]
  %s7 = inlined_call_operand.hbm [shape: bf16[512,128], index: 7, kind: input, shape index: {}]
  %s8 = inlined_call_operand.vmem [shape: bf16[1,128], index: 8, kind: input, shape index: {}]
  %s9 = inlined_call_operand.vmem [shape: bf16[128,128], index: 9, kind: input, shape index: {}]
  %s10 = inlined_call_operand.vmem [shape: bf16[1,128], index: 10, kind: input, shape index: {}]
  %s11 = inlined_call_operand.hbm [shape: bf16[128,128], index: 11, kind: input, shape index: {}]
  %s12 = inlined_call_operand.vmem [shape: bf16[1,128], index: 12, kind: input, shape index: {}]
  %s13 = inlined_call_operand.vmem [shape: bf16[128,8], index: 13, kind: input, shape index: {}]
  %s14 = inlined_call_operand.vmem [shape: bf16[1,8], index: 14, kind: input, shape index: {}]
  %s15 = inlined_call_operand.vmem [shape: f32[256,8], index: 15, kind: output, shape index: {}]
  %s16 = sld [smem:[#allocation0]]
  $region82: #{feedforward_nn.1} parent=0
    _
  %s18 = ssub.s32 1, %s16
  %s19 = scalar_select 0, %s18, %s16
  $region1: #{feedforward_nn.1} parent=0
    #allocation2 [shape = 'u8[262144]{0}', space=vmem, size = 0x40000, scoped, tag = 'input window, operand 5, single buffered']
    #allocation3 [shape = 's32[1]{0}', space=sflag, size = 0x4, scoped, tag = 'scoped memory for feedforward_nn.1']
    #allocation4 [shape = 'u8[131072]{0}', space=vmem, size = 0x20000, scoped, tag = 'input window, operand 7, single buffered']
    #allocation5 [shape = 's32[1]{0}', space=sflag, size = 0x4, scoped, tag = 'scoped memory for feedforward_nn.1']
    #allocation6 [shape = 'u8[32768]{0}', space=vmem, size = 0x8000, scoped, tag = 'input window, operand 11, single buffered']
    %20 = vsyncpa [#allocation3], 0
    %21 = vsyncpa [#allocation5], 0
    // Predicated region
    $region2: #{feedforward_nn.1} parent=1 // pred_check
      _
    $region3: #{feedforward_nn.1} parent=1 // pred_check_branch
      %23 = sbr.rel (0) target = $region5
    $region4: #{feedforward_nn.1} parent=1 // pred_region
      _
    $region5: #{feedforward_nn.1} parent=1 // pred_fallthru
      _
    // Predicated region
    $region6: #{feedforward_nn.1} parent=1 // pred_check
      _
    $region7: #{feedforward_nn.1} parent=1 // pred_check_branch
      %25 = sbr.rel (0) target = $region9
    $region8: #{feedforward_nn.1} parent=1 // pred_region
      _
    $region9: #{feedforward_nn.1} parent=1 // pred_fallthru
      _
    // Predicated region
    $region10: #{feedforward_nn.1} parent=1 // pred_check
      _
    $region11: #{feedforward_nn.1} parent=1 // pred_check_branch
      %27 = sbr.rel (0) target = $region13
    $region12: #{feedforward_nn.1} parent=1 // pred_region
      _
    $region13: #{feedforward_nn.1} parent=1 // pred_fallthru
      _
    // Predicated region
    $region14: #{feedforward_nn.1} parent=1 // pred_check
      _
    $region15: #{feedforward_nn.1} parent=1 // pred_check_branch
      %29 = sbr.rel (0) target = $region17
    $region16: #{feedforward_nn.1} parent=1 // pred_region
      _
    $region17: #{feedforward_nn.1} parent=1 // pred_fallthru
      _
    // Predicated region
    $region18: #{feedforward_nn.1} parent=1 // pred_check
      _
    $region19: #{feedforward_nn.1} parent=1 // pred_check_branch
      %31 = sbr.rel (0) target = $region21
    $region20: #{feedforward_nn.1} parent=1 // pred_region
      _
    $region21: #{feedforward_nn.1} parent=1 // pred_fallthru
      _
    // Predicated region
    $region22: #{feedforward_nn.1} parent=1 // pred_check
      _
    $region23: #{feedforward_nn.1} parent=1 // pred_check_branch
      %33 = sbr.rel (0) target = $region25
    $region24: #{feedforward_nn.1} parent=1 // pred_region
      %s35 = ssub.s32 8192, 8192
      %36 = vsyncadd [#allocation3], %s35
      %s37 = sshll.u32 [#allocation2], 4
      %s38 = int_to_ptr.vmem [resolvable:$true] %s37
      %43 = dma.hbm_to_vmem [thread:$0]  %s5, 8192, %s38, [#allocation3], 256, 256, 16
    $region25: #{feedforward_nn.1} parent=1 // pred_fallthru
      _
    // Predicated region
    $region26: #{feedforward_nn.1} parent=1 // pred_check
      _
    $region27: #{feedforward_nn.1} parent=1 // pred_check_branch
      %45 = sbr.rel (0) target = $region29
    $region28: #{feedforward_nn.1} parent=1 // pred_region
      _
    $region29: #{feedforward_nn.1} parent=1 // pred_fallthru
      _
    // Predicated region
    $region30: #{feedforward_nn.1} parent=1 // pred_check
      _
    $region31: #{feedforward_nn.1} parent=1 // pred_check_branch
      %47 = sbr.rel (0) target = $region33
    $region32: #{feedforward_nn.1} parent=1 // pred_region
      %s49 = ssub.s32 4096, 4096
      %50 = vsyncadd [#allocation5], %s49
      %s51 = sshll.u32 [#allocation4], 4
      %s52 = int_to_ptr.vmem [resolvable:$true] %s51
      %57 = dma.hbm_to_vmem [thread:$0]  %s7, 4096, %s52, [#allocation5], 64, 64, 4
    $region33: #{feedforward_nn.1} parent=1 // pred_fallthru
      _
    // Predicated region
    $region34: #{feedforward_nn.1} parent=1 // pred_check
      _
    $region35: #{feedforward_nn.1} parent=1 // pred_check_branch
      %59 = sbr.rel (0) target = $region37
    $region36: #{feedforward_nn.1} parent=1 // pred_region
      _
    $region37: #{feedforward_nn.1} parent=1 // pred_fallthru
      _
    // Predicated region
    $region38: #{feedforward_nn.1} parent=1 // pred_check
      _
    $region39: #{feedforward_nn.1} parent=1 // pred_check_branch
      %61 = sbr.rel (0) target = $region41
    $region40: #{feedforward_nn.1} parent=1 // pred_region
      _
    $region41: #{feedforward_nn.1} parent=1 // pred_fallthru
      _
    // Predicated region
    $region42: #{feedforward_nn.1} parent=1 // pred_check
      _
    $region43: #{feedforward_nn.1} parent=1 // pred_check_branch
      %63 = sbr.rel (0) target = $region45
    $region44: #{feedforward_nn.1} parent=1 // pred_region
      _
    $region45: #{feedforward_nn.1} parent=1 // pred_fallthru
      _
    // Predicated region
    $region46: #{feedforward_nn.1} parent=1 // pred_check
      _
    $region47: #{feedforward_nn.1} parent=1 // pred_check_branch
      %65 = sbr.rel (0) target = $region49
    $region48: #{feedforward_nn.1} parent=1 // pred_region
      %s67 = ssub.s32 1024, 1024
      %68 = vsyncadd [#allocation5], %s67
      %s69 = sshll.u32 [#allocation6], 4
      %s70 = int_to_ptr.vmem [resolvable:$true] %s69
      %75 = dma.hbm_to_vmem [thread:$0]  %s11, 1024, %s70, [#allocation5], 64, 64, 4
    $region49: #{feedforward_nn.1} parent=1 // pred_fallthru
      _
    // Predicated region
    $region50: #{feedforward_nn.1} parent=1 // pred_check
      _
    $region51: #{feedforward_nn.1} parent=1 // pred_check_branch
      %77 = sbr.rel (0) target = $region53
    $region52: #{feedforward_nn.1} parent=1 // pred_region
      _
    $region53: #{feedforward_nn.1} parent=1 // pred_fallthru
      _
    // Predicated region
    $region54: #{feedforward_nn.1} parent=1 // pred_check
      _
    $region55: #{feedforward_nn.1} parent=1 // pred_check_branch
      %79 = sbr.rel (0) target = $region57
    $region56: #{feedforward_nn.1} parent=1 // pred_region
      _
    $region57: #{feedforward_nn.1} parent=1 // pred_fallthru
      _
    // Predicated region
    $region58: #{feedforward_nn.1} parent=1 // pred_check
      _
    $region59: #{feedforward_nn.1} parent=1 // pred_check_branch
      %81 = sbr.rel (0) target = $region61
    $region60: #{feedforward_nn.1} parent=1 // pred_region
      _
    $region61: #{feedforward_nn.1} parent=1 // pred_fallthru
      _
    // Predicated region
    $region62: #{feedforward_nn.1} parent=1 // pred_check
      _
    $region63: #{feedforward_nn.1} parent=1 // pred_check_branch
      %83 = sbr.rel (0) target = $region65
    $region64: #{feedforward_nn.1} parent=1 // pred_region
      %84 = dma.done [#allocation3], 8192
    $region65: #{feedforward_nn.1} parent=1 // pred_fallthru
      _
    // Predicated region
    $region66: #{feedforward_nn.1} parent=1 // pred_check
      _
    $region67: #{feedforward_nn.1} parent=1 // pred_check_branch
      %86 = sbr.rel (0) target = $region69
    $region68: #{feedforward_nn.1} parent=1 // pred_region
      %87 = dma.done [#allocation5], 4096
    $region69: #{feedforward_nn.1} parent=1 // pred_fallthru
      _
    // Predicated region
    $region70: #{feedforward_nn.1} parent=1 // pred_check
      _
    $region71: #{feedforward_nn.1} parent=1 // pred_check_branch
      %89 = sbr.rel (0) target = $region73
    $region72: #{feedforward_nn.1} parent=1 // pred_region
      %90 = dma.done [#allocation5], 1024
    $region73: #{feedforward_nn.1} parent=1 // pred_fallthru
      _
    %v92 = vld [vmem:[%s0] sm:$0xf]
    %v93 = vld [vmem:[%s0 + $0x4] sm:$0xf]
    %v94 = vld [vmem:[%s0 + $0x8] sm:$0xf]
    %v95 = vld [vmem:[%s0 + $0xc] sm:$0xf]
    %v96 = vld [vmem:[%s0 + $0x10] sm:$0xf]
    %v97 = vld [vmem:[%s0 + $0x14] sm:$0xf]
    %v98 = vld [vmem:[%s0 + $0x18] sm:$0xf]
    %v99 = vld [vmem:[%s0 + $0x1c] sm:$0xf]
    %v100 = vld [vmem:[%s0 + $0x20] sm:$0xf]
    %v101 = vld [vmem:[%s0 + $0x24] sm:$0xf]
    %v102 = vld [vmem:[%s0 + $0x28] sm:$0xf]
    %v103 = vld [vmem:[%s0 + $0x2c] sm:$0xf]
    %v104 = vld [vmem:[%s0 + $0x30] sm:$0xf]
    %v105 = vld [vmem:[%s0 + $0x34] sm:$0xf]
    %v106 = vld [vmem:[%s0 + $0x38] sm:$0xf]
    %v107 = vld [vmem:[%s0 + $0x3c] sm:$0xf]
    %v108 = vld [vmem:[%s0 + $0x40] sm:$0xf]
    %v109 = vld [vmem:[%s0 + $0x44] sm:$0xf]
    %v110 = vld [vmem:[%s0 + $0x48] sm:$0xf]
    %v111 = vld [vmem:[%s0 + $0x4c] sm:$0xf]
    %v112 = vld [vmem:[%s0 + $0x50] sm:$0xf]
    %v113 = vld [vmem:[%s0 + $0x54] sm:$0xf]
    %v114 = vld [vmem:[%s0 + $0x58] sm:$0xf]
    %v115 = vld [vmem:[%s0 + $0x5c] sm:$0xf]
    %v116 = vld [vmem:[%s0 + $0x60] sm:$0xf]
    %v117 = vld [vmem:[%s0 + $0x64] sm:$0xf]
    %v118 = vld [vmem:[%s0 + $0x68] sm:$0xf]
    %v119 = vld [vmem:[%s0 + $0x6c] sm:$0xf]
    %v120 = vld [vmem:[%s0 + $0x70] sm:$0xf]
    %v121 = vld [vmem:[%s0 + $0x74] sm:$0xf]
    %v122 = vld [vmem:[%s0 + $0x78] sm:$0xf]
    %v123 = vld [vmem:[%s0 + $0x7c] sm:$0xf]
    %v124 = vld [vmem:[%s1] sm:$0xf]
    %v157 = vunpack.c.l.b16 %v92
    %v158 = vunpack.c.l.b16 %v93
    %v159 = vunpack.c.l.b16 %v94
    %v160 = vunpack.c.l.b16 %v95
    %v161 = vunpack.c.l.b16 %v96
    %v162 = vunpack.c.l.b16 %v97
    %v163 = vunpack.c.l.b16 %v98
    %v164 = vunpack.c.l.b16 %v99
    %v165 = vunpack.c.l.b16 %v100
    %v166 = vunpack.c.l.b16 %v101
    %v167 = vunpack.c.l.b16 %v102
    %v168 = vunpack.c.l.b16 %v103
    %v169 = vunpack.c.l.b16 %v104
    %v170 = vunpack.c.l.b16 %v105
    %v171 = vunpack.c.l.b16 %v106
    %v172 = vunpack.c.l.b16 %v107
    %v173 = vunpack.c.l.b16 %v108
    %v174 = vunpack.c.l.b16 %v109
    %v175 = vunpack.c.l.b16 %v110
    %v176 = vunpack.c.l.b16 %v111
    %v177 = vunpack.c.l.b16 %v112
    %v178 = vunpack.c.l.b16 %v113
    %v179 = vunpack.c.l.b16 %v114
    %v180 = vunpack.c.l.b16 %v115
    %v181 = vunpack.c.l.b16 %v116
    %v182 = vunpack.c.l.b16 %v117
    %v183 = vunpack.c.l.b16 %v118
    %v184 = vunpack.c.l.b16 %v119
    %v185 = vunpack.c.l.b16 %v120
    %v186 = vunpack.c.l.b16 %v121
    %v187 = vunpack.c.l.b16 %v122
    %v188 = vunpack.c.l.b16 %v123
    %v189 = vpack.c.b16 %v158, %v157
    %v190 = vpack.c.b16 %v160, %v159
    %v191 = vpack.c.b16 %v162, %v161
    %v192 = vpack.c.b16 %v164, %v163
    %v193 = vpack.c.b16 %v166, %v165
    %v194 = vpack.c.b16 %v168, %v167
    %v195 = vpack.c.b16 %v170, %v169
    %v196 = vpack.c.b16 %v172, %v171
    %v197 = vpack.c.b16 %v174, %v173
    %v198 = vpack.c.b16 %v176, %v175
    %v199 = vpack.c.b16 %v178, %v177
    %v200 = vpack.c.b16 %v180, %v179
    %v201 = vpack.c.b16 %v182, %v181
    %v202 = vpack.c.b16 %v184, %v183
    %v203 = vpack.c.b16 %v186, %v185
    %v204 = vpack.c.b16 %v188, %v187
    %vm205 = vcmask 64512
    %v207 = vsel %vm205, %v189, 0
    %v210 = vsel %vm205, %v190, 0
    %v213 = vsel %vm205, %v191, 0
    %v216 = vsel %vm205, %v192, 0
    %v219 = vsel %vm205, %v193, 0
    %v222 = vsel %vm205, %v194, 0
    %v225 = vsel %vm205, %v195, 0
    %v228 = vsel %vm205, %v196, 0
    %v231 = vsel %vm205, %v197, 0
    %v234 = vsel %vm205, %v198, 0
    %v237 = vsel %vm205, %v199, 0
    %v240 = vsel %vm205, %v200, 0
    %v243 = vsel %vm205, %v201, 0
    %v246 = vsel %vm205, %v202, 0
    %v249 = vsel %vm205, %v203, 0
    %v252 = vsel %vm205, %v204, 0
    %vm254 = vcmask 1043456
    %v256 = vsel %vm254, %v124, 0
    %258 = vmatprep.subr.bf16.mxu0 0
    %259 = vmatpush1.bf16.msra.mxu0 %v256
    %260 = vmatprep.subr.bf16.mxu0 0
    %261 = vmatpush1.bf16.msra.mxu0 0
    %262 = vmatprep.subr.bf16.mxu0 0
    %263 = vmatpush1.bf16.msra.mxu0 0
    %264 = vmatprep.subr.bf16.mxu0 0
    %265 = vmatpush1.bf16.msra.mxu0 0
    %266 = vmatprep.subr.bf16.mxu0 0
    %267 = vmatpush1.bf16.msra.mxu0 0
    %268 = vmatprep.subr.bf16.mxu0 0
    %269 = vmatpush1.bf16.msra.mxu0 0
    %270 = vmatprep.subr.bf16.mxu0 0
    %271 = vmatpush1.bf16.msra.mxu0 0
    %272 = vmatprep.subr.bf16.mxu0 0
    %273 = vmatpush1.bf16.msra.mxu0 0
    %274 = vmatprep.subr.bf16.mxu0 0
    %275 = vmatpush1.bf16.msra.mxu0 0
    %276 = vmatprep.subr.bf16.mxu0 0
    %277 = vmatpush1.bf16.msra.mxu0 0
    %278 = vmatprep.subr.bf16.mxu0 0
    %279 = vmatpush1.bf16.msra.mxu0 0
    %280 = vmatprep.subr.bf16.mxu0 0
    %281 = vmatpush1.bf16.msra.mxu0 0
    %282 = vmatprep.subr.bf16.mxu0 0
    %283 = vmatpush1.bf16.msra.mxu0 0
    %284 = vmatprep.subr.bf16.mxu0 0
    %285 = vmatpush1.bf16.msra.mxu0 0
    %286 = vmatprep.subr.bf16.mxu0 0
    %287 = vmatpush1.bf16.msra.mxu0 0
    %288 = vmatprep.subr.bf16.mxu0 0
    %289 = vmatpush1.bf16.msra.mxu0 0
    %290 = vmatprep.mubr.bf16.mxu0 0
    %291 = vmatmul.mubr.bf16.gmra.mrb[0].mxu0 %v207
    %v292 = vpop.f32.mrb[0].mxu0
    %v293 = vadd.f32 0.0, %v292
    %v294 = vpop.f32.mrb[0].mxu0
    %v295 = vpop.f32.mrb[0].mxu0
    %v296 = vadd.f32 0.0, %v295
    %v297 = vpop.f32.mrb[0].mxu0
    %298 = vmatprep.mubr.bf16.mxu0 0
    %299 = vmatmul.mubr.bf16.gmra.mrb[0].mxu0 %v210
    %v300 = vpop.f32.mrb[0].mxu0
    %v301 = vadd.f32 0.0, %v300
    %v302 = vpop.f32.mrb[0].mxu0
    %v303 = vpop.f32.mrb[0].mxu0
    %v304 = vadd.f32 0.0, %v303
    %v305 = vpop.f32.mrb[0].mxu0
    %306 = vmatprep.mubr.bf16.mxu0 0
    %307 = vmatmul.mubr.bf16.gmra.mrb[0].mxu0 %v213
    %v308 = vpop.f32.mrb[0].mxu0
    %v309 = vadd.f32 0.0, %v308
    %v310 = vpop.f32.mrb[0].mxu0
    %v311 = vpop.f32.mrb[0].mxu0
    %v312 = vadd.f32 0.0, %v311
    %v313 = vpop.f32.mrb[0].mxu0
    %314 = vmatprep.mubr.bf16.mxu0 0
    %315 = vmatmul.mubr.bf16.gmra.mrb[0].mxu0 %v216
    %v316 = vpop.f32.mrb[0].mxu0
    %v317 = vadd.f32 0.0, %v316
    %v318 = vpop.f32.mrb[0].mxu0
    %v319 = vpop.f32.mrb[0].mxu0
    %v320 = vadd.f32 0.0, %v319
    %v321 = vpop.f32.mrb[0].mxu0
    %322 = vmatprep.mubr.bf16.mxu0 0
    %323 = vmatmul.mubr.bf16.gmra.mrb[0].mxu0 %v219
    %v324 = vpop.f32.mrb[0].mxu0
    %v325 = vadd.f32 0.0, %v324
    %v326 = vpop.f32.mrb[0].mxu0
    %v327 = vpop.f32.mrb[0].mxu0
    %v328 = vadd.f32 0.0, %v327
    %v329 = vpop.f32.mrb[0].mxu0
    %330 = vmatprep.mubr.bf16.mxu0 0
    %331 = vmatmul.mubr.bf16.gmra.mrb[0].mxu0 %v222
    %v332 = vpop.f32.mrb[0].mxu0
    %v333 = vadd.f32 0.0, %v332
    %v334 = vpop.f32.mrb[0].mxu0
    %v335 = vpop.f32.mrb[0].mxu0
    %v336 = vadd.f32 0.0, %v335
    %v337 = vpop.f32.mrb[0].mxu0
    %338 = vmatprep.mubr.bf16.mxu0 0
    %339 = vmatmul.mubr.bf16.gmra.mrb[0].mxu0 %v225
    %v340 = vpop.f32.mrb[0].mxu0
    %v341 = vadd.f32 0.0, %v340
    %v342 = vpop.f32.mrb[0].mxu0
    %v343 = vpop.f32.mrb[0].mxu0
    %v344 = vadd.f32 0.0, %v343
    %v345 = vpop.f32.mrb[0].mxu0
    %346 = vmatprep.mubr.bf16.mxu0 0
    %347 = vmatmul.mubr.bf16.gmra.mrb[0].mxu0 %v228
    %v348 = vpop.f32.mrb[0].mxu0
    %v349 = vadd.f32 0.0, %v348
    %v350 = vpop.f32.mrb[0].mxu0
    %v351 = vpop.f32.mrb[0].mxu0
    %v352 = vadd.f32 0.0, %v351
    %v353 = vpop.f32.mrb[0].mxu0
    %354 = vmatprep.mubr.bf16.mxu0 0
    %355 = vmatmul.mubr.bf16.gmra.mrb[0].mxu0 %v231
    %v356 = vpop.f32.mrb[0].mxu0
    %v357 = vadd.f32 0.0, %v356
    %v358 = vpop.f32.mrb[0].mxu0
    %v359 = vpop.f32.mrb[0].mxu0
    %v360 = vadd.f32 0.0, %v359
    %v361 = vpop.f32.mrb[0].mxu0
    %362 = vmatprep.mubr.bf16.mxu0 0
    %363 = vmatmul.mubr.bf16.gmra.mrb[0].mxu0 %v234
    %v364 = vpop.f32.mrb[0].mxu0
    %v365 = vadd.f32 0.0, %v364
    %v366 = vpop.f32.mrb[0].mxu0
    %v367 = vpop.f32.mrb[0].mxu0
    %v368 = vadd.f32 0.0, %v367
    %v369 = vpop.f32.mrb[0].mxu0
    %370 = vmatprep.mubr.bf16.mxu0 0
    %371 = vmatmul.mubr.bf16.gmra.mrb[0].mxu0 %v237
    %v372 = vpop.f32.mrb[0].mxu0
    %v373 = vadd.f32 0.0, %v372
    %v374 = vpop.f32.mrb[0].mxu0
    %v375 = vpop.f32.mrb[0].mxu0
    %v376 = vadd.f32 0.0, %v375
    %v377 = vpop.f32.mrb[0].mxu0
    %378 = vmatprep.mubr.bf16.mxu0 0
    %379 = vmatmul.mubr.bf16.gmra.mrb[0].mxu0 %v240
    %v380 = vpop.f32.mrb[0].mxu0
    %v381 = vadd.f32 0.0, %v380
    %v382 = vpop.f32.mrb[0].mxu0
    %v383 = vpop.f32.mrb[0].mxu0
    %v384 = vadd.f32 0.0, %v383
    %v385 = vpop.f32.mrb[0].mxu0
    %386 = vmatprep.mubr.bf16.mxu0 0
    %387 = vmatmul.mubr.bf16.gmra.mrb[0].mxu0 %v243
    %v388 = vpop.f32.mrb[0].mxu0
    %v389 = vadd.f32 0.0, %v388
    %v390 = vpop.f32.mrb[0].mxu0
    %v391 = vpop.f32.mrb[0].mxu0
    %v392 = vadd.f32 0.0, %v391
    %v393 = vpop.f32.mrb[0].mxu0
    %394 = vmatprep.mubr.bf16.mxu0 0
    %395 = vmatmul.mubr.bf16.gmra.mrb[0].mxu0 %v246
    %v396 = vpop.f32.mrb[0].mxu0
    %v397 = vadd.f32 0.0, %v396
    %v398 = vpop.f32.mrb[0].mxu0
    %v399 = vpop.f32.mrb[0].mxu0
    %v400 = vadd.f32 0.0, %v399
    %v401 = vpop.f32.mrb[0].mxu0
    %402 = vmatprep.mubr.bf16.mxu0 0
    %403 = vmatmul.mubr.bf16.gmra.mrb[0].mxu0 %v249
    %v404 = vpop.f32.mrb[0].mxu0
    %v405 = vadd.f32 0.0, %v404
    %v406 = vpop.f32.mrb[0].mxu0
    %v407 = vpop.f32.mrb[0].mxu0
    %v408 = vadd.f32 0.0, %v407
    %v409 = vpop.f32.mrb[0].mxu0
    %410 = vmatprep.mubr.bf16.mxu0 0
    %411 = vmatmul.mubr.bf16.gmra.mrb[0].mxu0 %v252
    %v412 = vpop.f32.mrb[0].mxu0
    %v413 = vadd.f32 0.0, %v412
    %v414 = vpop.f32.mrb[0].mxu0
    %v415 = vpop.f32.mrb[0].mxu0
    %v416 = vadd.f32 0.0, %v415
    %v417 = vpop.f32.mrb[0].mxu0
    %418 = vdwg.mxu0
    %v419 = vpack.c.bf16 %v296, %v293
    %v420 = vpack.c.bf16 %v304, %v301
    %v421 = vpack.c.bf16 %v312, %v309
    %v422 = vpack.c.bf16 %v320, %v317
    %v423 = vpack.c.bf16 %v328, %v325
    %v424 = vpack.c.bf16 %v336, %v333
    %v425 = vpack.c.bf16 %v344, %v341
    %v426 = vpack.c.bf16 %v352, %v349
    %v427 = vpack.c.bf16 %v360, %v357
    %v428 = vpack.c.bf16 %v368, %v365
    %v429 = vpack.c.bf16 %v376, %v373
    %v430 = vpack.c.bf16 %v384, %v381
    %v431 = vpack.c.bf16 %v392, %v389
    %v432 = vpack.c.bf16 %v400, %v397
    %v433 = vpack.c.bf16 %v408, %v405
    %v434 = vpack.c.bf16 %v416, %v413
    %v435 = vld [vmem:[%s2] sm:$0x1]
    %v437 = vpack.i.b16 %v435, %v435
    %v439 = vlaneseq
    %v440 = vshrl.u32 %v439, 7
    %v441 = vsub.s32 0, %v440
    %v442 = vrot.slane %v437, %v441
    %v443 = vadd.bf16 %v419, %v442
    %v444 = vadd.bf16 %v420, %v442
    %v445 = vadd.bf16 %v421, %v442
    %v446 = vadd.bf16 %v422, %v442
    %v447 = vadd.bf16 %v423, %v442
    %v448 = vadd.bf16 %v424, %v442
    %v449 = vadd.bf16 %v425, %v442
    %v450 = vadd.bf16 %v426, %v442
    %v451 = vadd.bf16 %v427, %v442
    %v452 = vadd.bf16 %v428, %v442
    %v453 = vadd.bf16 %v429, %v442
    %v454 = vadd.bf16 %v430, %v442
    %v455 = vadd.bf16 %v431, %v442
    %v456 = vadd.bf16 %v432, %v442
    %v457 = vadd.bf16 %v433, %v442
    %v458 = vadd.bf16 %v434, %v442
    %v459 = vmax.bf16 %v443, 0
    %v460 = vmax.bf16 %v444, 0
    %v461 = vmax.bf16 %v445, 0
    %v462 = vmax.bf16 %v446, 0
    %v463 = vmax.bf16 %v447, 0
    %v464 = vmax.bf16 %v448, 0
    %v465 = vmax.bf16 %v449, 0
    %v466 = vmax.bf16 %v450, 0
    %v467 = vmax.bf16 %v451, 0
    %v468 = vmax.bf16 %v452, 0
    %v469 = vmax.bf16 %v453, 0
    %v470 = vmax.bf16 %v454, 0
    %v471 = vmax.bf16 %v455, 0
    %v472 = vmax.bf16 %v456, 0
    %v473 = vmax.bf16 %v457, 0
    %v474 = vmax.bf16 %v458, 0
    %v475 = vld [vmem:[%s3] sm:$0xff]
    %v476 = vld [vmem:[%s3 + $0x8] sm:$0xff]
    %v477 = vld [vmem:[%s3 + $0x10] sm:$0xff]
    %v478 = vld [vmem:[%s3 + $0x18] sm:$0xff]
    %v479 = vld [vmem:[%s3 + $0x20] sm:$0xff]
    %v480 = vld [vmem:[%s3 + $0x28] sm:$0xff]
    %v481 = vld [vmem:[%s3 + $0x30] sm:$0xff]
    %v482 = vld [vmem:[%s3 + $0x38] sm:$0xff]
    %v483 = vld [vmem:[%s3 + $0x40] sm:$0xff]
    %v484 = vld [vmem:[%s3 + $0x48] sm:$0xff]
    %v485 = vld [vmem:[%s3 + $0x50] sm:$0xff]
    %v486 = vld [vmem:[%s3 + $0x58] sm:$0xff]
    %v487 = vld [vmem:[%s3 + $0x60] sm:$0xff]
    %v488 = vld [vmem:[%s3 + $0x68] sm:$0xff]
    %v489 = vld [vmem:[%s3 + $0x70] sm:$0xff]
    %v490 = vld [vmem:[%s3 + $0x78] sm:$0xff]
    %v507 = vunpack.c.l.b16 %v475
    %v508 = vunpack.c.h.b16 %v475
    %v509 = vunpack.c.l.b16 %v476
    %v510 = vunpack.c.h.b16 %v476
    %v511 = vunpack.c.l.b16 %v477
    %v512 = vunpack.c.h.b16 %v477
    %v513 = vunpack.c.l.b16 %v478
    %v514 = vunpack.c.h.b16 %v478
    %v515 = vunpack.c.l.b16 %v479
    %v516 = vunpack.c.h.b16 %v479
    %v517 = vunpack.c.l.b16 %v480
    %v518 = vunpack.c.h.b16 %v480
    %v519 = vunpack.c.l.b16 %v481
    %v520 = vunpack.c.h.b16 %v481
    %v521 = vunpack.c.l.b16 %v482
    %v522 = vunpack.c.h.b16 %v482
    %v523 = vunpack.c.l.b16 %v483
    %v524 = vunpack.c.h.b16 %v483
    %v525 = vunpack.c.l.b16 %v484
    %v526 = vunpack.c.h.b16 %v484
    %v527 = vunpack.c.l.b16 %v485
    %v528 = vunpack.c.h.b16 %v485
    %v529 = vunpack.c.l.b16 %v486
    %v530 = vunpack.c.h.b16 %v486
    %v531 = vunpack.c.l.b16 %v487
    %v532 = vunpack.c.h.b16 %v487
    %v533 = vunpack.c.l.b16 %v488
    %v534 = vunpack.c.h.b16 %v488
    %v535 = vunpack.c.l.b16 %v489
    %v536 = vunpack.c.h.b16 %v489
    %v537 = vunpack.c.l.b16 %v490
    %v538 = vunpack.c.h.b16 %v490
    %v539 = vpack.c.b16 %v509, %v507
    %v540 = vpack.c.b16 %v510, %v508
    %v541 = vpack.c.b16 %v513, %v511
    %v542 = vpack.c.b16 %v514, %v512
    %v543 = vpack.c.b16 %v517, %v515
    %v544 = vpack.c.b16 %v518, %v516
    %v545 = vpack.c.b16 %v521, %v519
    %v546 = vpack.c.b16 %v522, %v520
    %v547 = vpack.c.b16 %v525, %v523
    %v548 = vpack.c.b16 %v526, %v524
    %v549 = vpack.c.b16 %v529, %v527
    %v550 = vpack.c.b16 %v530, %v528
    %v551 = vpack.c.b16 %v533, %v531
    %v552 = vpack.c.b16 %v534, %v532
    %v553 = vpack.c.b16 %v537, %v535
    %v554 = vpack.c.b16 %v538, %v536
    %571 = vmatprep.subr.bf16.mxu0 %v540
    %572 = vmatpush1.bf16.msra.mxu0 %v539
    %573 = vmatprep.subr.bf16.mxu0 %v542
    %574 = vmatpush1.bf16.msra.mxu0 %v541
    %575 = vmatprep.subr.bf16.mxu0 %v544
    %576 = vmatpush1.bf16.msra.mxu0 %v543
    %577 = vmatprep.subr.bf16.mxu0 %v546
    %578 = vmatpush1.bf16.msra.mxu0 %v545
    %579 = vmatprep.subr.bf16.mxu0 %v548
    %580 = vmatpush1.bf16.msra.mxu0 %v547
    %581 = vmatprep.subr.bf16.mxu0 %v550
    %582 = vmatpush1.bf16.msra.mxu0 %v549
    %583 = vmatprep.subr.bf16.mxu0 %v552
    %584 = vmatpush1.bf16.msra.mxu0 %v551
    %585 = vmatprep.subr.bf16.mxu0 %v554
    %586 = vmatpush1.bf16.msra.mxu0 %v553
    %587 = vmatprep.subr.bf16.mxu0 0
    %588 = vmatpush1.bf16.msra.mxu0 0
    %589 = vmatprep.subr.bf16.mxu0 0
    %590 = vmatpush1.bf16.msra.mxu0 0
    %591 = vmatprep.subr.bf16.mxu0 0
    %592 = vmatpush1.bf16.msra.mxu0 0
    %593 = vmatprep.subr.bf16.mxu0 0
    %594 = vmatpush1.bf16.msra.mxu0 0
    %595 = vmatprep.subr.bf16.mxu0 0
    %596 = vmatpush1.bf16.msra.mxu0 0
    %597 = vmatprep.subr.bf16.mxu0 0
    %598 = vmatpush1.bf16.msra.mxu0 0
    %599 = vmatprep.subr.bf16.mxu0 0
    %600 = vmatpush1.bf16.msra.mxu0 0
    %601 = vmatprep.subr.bf16.mxu0 0
    %602 = vmatpush1.bf16.msra.mxu0 0
    %603 = vmatprep.mubr.bf16.mxu0 0
    %604 = vmatmul.mubr.bf16.gmra.mrb[0].mxu0 %v459
    %v605 = vpop.f32.mrb[0].mxu0
    %v606 = vadd.f32 0.0, %v605
    %v607 = vpop.f32.mrb[0].mxu0
    %v608 = vadd.f32 0.0, %v607
    %v609 = vpop.f32.mrb[0].mxu0
    %v610 = vadd.f32 0.0, %v609
    %v611 = vpop.f32.mrb[0].mxu0
    %v612 = vadd.f32 0.0, %v611
    %613 = vmatprep.mubr.bf16.mxu0 0
    %614 = vmatmul.mubr.bf16.gmra.mrb[0].mxu0 %v460
    %v615 = vpop.f32.mrb[0].mxu0
    %v616 = vadd.f32 0.0, %v615
    %v617 = vpop.f32.mrb[0].mxu0
    %v618 = vadd.f32 0.0, %v617
    %v619 = vpop.f32.mrb[0].mxu0
    %v620 = vadd.f32 0.0, %v619
    %v621 = vpop.f32.mrb[0].mxu0
    %v622 = vadd.f32 0.0, %v621
    %623 = vmatprep.mubr.bf16.mxu0 0
    %624 = vmatmul.mubr.bf16.gmra.mrb[0].mxu0 %v461
    %v625 = vpop.f32.mrb[0].mxu0
    %v626 = vadd.f32 0.0, %v625
    %v627 = vpop.f32.mrb[0].mxu0
    %v628 = vadd.f32 0.0, %v627
    %v629 = vpop.f32.mrb[0].mxu0
    %v630 = vadd.f32 0.0, %v629
    %v631 = vpop.f32.mrb[0].mxu0
    %v632 = vadd.f32 0.0, %v631
    %633 = vmatprep.mubr.bf16.mxu0 0
    %634 = vmatmul.mubr.bf16.gmra.mrb[0].mxu0 %v462
    %v635 = vpop.f32.mrb[0].mxu0
    %v636 = vadd.f32 0.0, %v635
    %v637 = vpop.f32.mrb[0].mxu0
    %v638 = vadd.f32 0.0, %v637
    %v639 = vpop.f32.mrb[0].mxu0
    %v640 = vadd.f32 0.0, %v639
    %v641 = vpop.f32.mrb[0].mxu0
    %v642 = vadd.f32 0.0, %v641
    %643 = vmatprep.mubr.bf16.mxu0 0
    %644 = vmatmul.mubr.bf16.gmra.mrb[0].mxu0 %v463
    %v645 = vpop.f32.mrb[0].mxu0
    %v646 = vadd.f32 0.0, %v645
    %v647 = vpop.f32.mrb[0].mxu0
    %v648 = vadd.f32 0.0, %v647
    %v649 = vpop.f32.mrb[0].mxu0
    %v650 = vadd.f32 0.0, %v649
    %v651 = vpop.f32.mrb[0].mxu0
    %v652 = vadd.f32 0.0, %v651
    %653 = vmatprep.mubr.bf16.mxu0 0
    %654 = vmatmul.mubr.bf16.gmra.mrb[0].mxu0 %v464
    %v655 = vpop.f32.mrb[0].mxu0
    %v656 = vadd.f32 0.0, %v655
    %v657 = vpop.f32.mrb[0].mxu0
    %v658 = vadd.f32 0.0, %v657
    %v659 = vpop.f32.mrb[0].mxu0
    %v660 = vadd.f32 0.0, %v659
    %v661 = vpop.f32.mrb[0].mxu0
    %v662 = vadd.f32 0.0, %v661
    %663 = vmatprep.mubr.bf16.mxu0 0
    %664 = vmatmul.mubr.bf16.gmra.mrb[0].mxu0 %v465
    %v665 = vpop.f32.mrb[0].mxu0
    %v666 = vadd.f32 0.0, %v665
    %v667 = vpop.f32.mrb[0].mxu0
    %v668 = vadd.f32 0.0, %v667
    %v669 = vpop.f32.mrb[0].mxu0
    %v670 = vadd.f32 0.0, %v669
    %v671 = vpop.f32.mrb[0].mxu0
    %v672 = vadd.f32 0.0, %v671
    %673 = vmatprep.mubr.bf16.mxu0 0
    %674 = vmatmul.mubr.bf16.gmra.mrb[0].mxu0 %v466
    %v675 = vpop.f32.mrb[0].mxu0
    %v676 = vadd.f32 0.0, %v675
    %v677 = vpop.f32.mrb[0].mxu0
    %v678 = vadd.f32 0.0, %v677
    %v679 = vpop.f32.mrb[0].mxu0
    %v680 = vadd.f32 0.0, %v679
    %v681 = vpop.f32.mrb[0].mxu0
    %v682 = vadd.f32 0.0, %v681
    %683 = vmatprep.mubr.bf16.mxu0 0
    %684 = vmatmul.mubr.bf16.gmra.mrb[0].mxu0 %v467
    %v685 = vpop.f32.mrb[0].mxu0
    %v686 = vadd.f32 0.0, %v685
    %v687 = vpop.f32.mrb[0].mxu0
    %v688 = vadd.f32 0.0, %v687
    %v689 = vpop.f32.mrb[0].mxu0
    %v690 = vadd.f32 0.0, %v689
    %v691 = vpop.f32.mrb[0].mxu0
    %v692 = vadd.f32 0.0, %v691
    %693 = vmatprep.mubr.bf16.mxu0 0
    %694 = vmatmul.mubr.bf16.gmra.mrb[0].mxu0 %v468
    %v695 = vpop.f32.mrb[0].mxu0
    %v696 = vadd.f32 0.0, %v695
    %v697 = vpop.f32.mrb[0].mxu0
    %v698 = vadd.f32 0.0, %v697
    %v699 = vpop.f32.mrb[0].mxu0
    %v700 = vadd.f32 0.0, %v699
    %v701 = vpop.f32.mrb[0].mxu0
    %v702 = vadd.f32 0.0, %v701
    %703 = vmatprep.mubr.bf16.mxu0 0
    %704 = vmatmul.mubr.bf16.gmra.mrb[0].mxu0 %v469
    %v705 = vpop.f32.mrb[0].mxu0
    %v706 = vadd.f32 0.0, %v705
    %v707 = vpop.f32.mrb[0].mxu0
    %v708 = vadd.f32 0.0, %v707
    %v709 = vpop.f32.mrb[0].mxu0
    %v710 = vadd.f32 0.0, %v709
    %v711 = vpop.f32.mrb[0].mxu0
    %v712 = vadd.f32 0.0, %v711
    %713 = vmatprep.mubr.bf16.mxu0 0
    %714 = vmatmul.mubr.bf16.gmra.mrb[0].mxu0 %v470
    %v715 = vpop.f32.mrb[0].mxu0
    %v716 = vadd.f32 0.0, %v715
    %v717 = vpop.f32.mrb[0].mxu0
    %v718 = vadd.f32 0.0, %v717
    %v719 = vpop.f32.mrb[0].mxu0
    %v720 = vadd.f32 0.0, %v719
    %v721 = vpop.f32.mrb[0].mxu0
    %v722 = vadd.f32 0.0, %v721
    %723 = vmatprep.mubr.bf16.mxu0 0
    %724 = vmatmul.mubr.bf16.gmra.mrb[0].mxu0 %v471
    %v725 = vpop.f32.mrb[0].mxu0
    %v726 = vadd.f32 0.0, %v725
    %v727 = vpop.f32.mrb[0].mxu0
    %v728 = vadd.f32 0.0, %v727
    %v729 = vpop.f32.mrb[0].mxu0
    %v730 = vadd.f32 0.0, %v729
    %v731 = vpop.f32.mrb[0].mxu0
    %v732 = vadd.f32 0.0, %v731
    %733 = vmatprep.mubr.bf16.mxu0 0
    %734 = vmatmul.mubr.bf16.gmra.mrb[0].mxu0 %v472
    %v735 = vpop.f32.mrb[0].mxu0
    %v736 = vadd.f32 0.0, %v735
    %v737 = vpop.f32.mrb[0].mxu0
    %v738 = vadd.f32 0.0, %v737
    %v739 = vpop.f32.mrb[0].mxu0
    %v740 = vadd.f32 0.0, %v739
    %v741 = vpop.f32.mrb[0].mxu0
    %v742 = vadd.f32 0.0, %v741
    %743 = vmatprep.mubr.bf16.mxu0 0
    %744 = vmatmul.mubr.bf16.gmra.mrb[0].mxu0 %v473
    %v745 = vpop.f32.mrb[0].mxu0
    %v746 = vadd.f32 0.0, %v745
    %v747 = vpop.f32.mrb[0].mxu0
    %v748 = vadd.f32 0.0, %v747
    %v749 = vpop.f32.mrb[0].mxu0
    %v750 = vadd.f32 0.0, %v749
    %v751 = vpop.f32.mrb[0].mxu0
    %v752 = vadd.f32 0.0, %v751
    %753 = vmatprep.mubr.bf16.mxu0 0
    %754 = vmatmul.mubr.bf16.gmra.mrb[0].mxu0 %v474
    %v755 = vpop.f32.mrb[0].mxu0
    %v756 = vadd.f32 0.0, %v755
    %v757 = vpop.f32.mrb[0].mxu0
    %v758 = vadd.f32 0.0, %v757
    %v759 = vpop.f32.mrb[0].mxu0
    %v760 = vadd.f32 0.0, %v759
    %v761 = vpop.f32.mrb[0].mxu0
    %v762 = vadd.f32 0.0, %v761
    %763 = vdwg.mxu0
    %v764 = vpack.c.bf16 %v610, %v606
    %v765 = vpack.c.bf16 %v612, %v608
    %v766 = vpack.c.bf16 %v620, %v616
    %v767 = vpack.c.bf16 %v622, %v618
    %v768 = vpack.c.bf16 %v630, %v626
    %v769 = vpack.c.bf16 %v632, %v628
    %v770 = vpack.c.bf16 %v640, %v636
    %v771 = vpack.c.bf16 %v642, %v638
    %v772 = vpack.c.bf16 %v650, %v646
    %v773 = vpack.c.bf16 %v652, %v648
    %v774 = vpack.c.bf16 %v660, %v656
    %v775 = vpack.c.bf16 %v662, %v658
    %v776 = vpack.c.bf16 %v670, %v666
    %v777 = vpack.c.bf16 %v672, %v668
    %v778 = vpack.c.bf16 %v680, %v676
    %v779 = vpack.c.bf16 %v682, %v678
    %v780 = vpack.c.bf16 %v690, %v686
    %v781 = vpack.c.bf16 %v692, %v688
    %v782 = vpack.c.bf16 %v700, %v696
    %v783 = vpack.c.bf16 %v702, %v698
    %v784 = vpack.c.bf16 %v710, %v706
    %v785 = vpack.c.bf16 %v712, %v708
    %v786 = vpack.c.bf16 %v720, %v716
    %v787 = vpack.c.bf16 %v722, %v718
    %v788 = vpack.c.bf16 %v730, %v726
    %v789 = vpack.c.bf16 %v732, %v728
    %v790 = vpack.c.bf16 %v740, %v736
    %v791 = vpack.c.bf16 %v742, %v738
    %v792 = vpack.c.bf16 %v750, %v746
    %v793 = vpack.c.bf16 %v752, %v748
    %v794 = vpack.c.bf16 %v760, %v756
    %v795 = vpack.c.bf16 %v762, %v758
    %v796 = vld [vmem:[%s4] sm:$0x3]
    %v799 = vunpack.c.l.s4 1966171168
    %v800 = vunpack.c.0.s8 %v799
    %v801 = vlaneseq
    %v802 = vshrl.u32 %v801, 7
    %v803 = vsub.s32 %v800, %v802
    %v804 = vrot.slane %v796, %v803
    %v805 = vcombine.high %v804, %v804
    %v807 = vunpack.c.l.s4 1966171168
    %v808 = vunpack.c.0.s8 %v807
    %v809 = vlaneseq
    %v810 = vshrl.u32 %v809, 7
    %v811 = vsub.s32 %v808, %v810
    %v812 = vrot.slane %v804, %v811
    %v814 = vunpack.c.l.s4 1966171168
    %v815 = vunpack.c.0.s8 %v814
    %v816 = vlaneseq
    %v817 = vshrl.u32 %v816, 7
    %v818 = vsub.s32 %v815, %v817
    %v819 = vrot.slane %v805, %v818
    %v821 = vpack.i.b16 %v812, %v812
    %v823 = vlaneseq
    %v824 = vshrl.u32 %v823, 7
    %v825 = vsub.s32 0, %v824
    %v826 = vrot.slane %v821, %v825
    %v828 = vpack.i.b16 %v819, %v819
    %v830 = vlaneseq
    %v831 = vshrl.u32 %v830, 7
    %v832 = vsub.s32 0, %v831
    %v833 = vrot.slane %v828, %v832
    %v834 = vadd.bf16 %v764, %v826
    %v835 = vadd.bf16 %v765, %v833
    %v836 = vadd.bf16 %v766, %v826
    %v837 = vadd.bf16 %v767, %v833
    %v838 = vadd.bf16 %v768, %v826
    %v839 = vadd.bf16 %v769, %v833
    %v840 = vadd.bf16 %v770, %v826
    %v841 = vadd.bf16 %v771, %v833
    %v842 = vadd.bf16 %v772, %v826
    %v843 = vadd.bf16 %v773, %v833
    %v844 = vadd.bf16 %v774, %v826
    %v845 = vadd.bf16 %v775, %v833
    %v846 = vadd.bf16 %v776, %v826
    %v847 = vadd.bf16 %v777, %v833
    %v848 = vadd.bf16 %v778, %v826
    %v849 = vadd.bf16 %v779, %v833
    %v850 = vadd.bf16 %v780, %v826
    %v851 = vadd.bf16 %v781, %v833
    %v852 = vadd.bf16 %v782, %v826
    %v853 = vadd.bf16 %v783, %v833
    %v854 = vadd.bf16 %v784, %v826
    %v855 = vadd.bf16 %v785, %v833
    %v856 = vadd.bf16 %v786, %v826
    %v857 = vadd.bf16 %v787, %v833
    %v858 = vadd.bf16 %v788, %v826
    %v859 = vadd.bf16 %v789, %v833
    %v860 = vadd.bf16 %v790, %v826
    %v861 = vadd.bf16 %v791, %v833
    %v862 = vadd.bf16 %v792, %v826
    %v863 = vadd.bf16 %v793, %v833
    %v864 = vadd.bf16 %v794, %v826
    %v865 = vadd.bf16 %v795, %v833
    %v866 = vmax.bf16 %v834, 0
    %v867 = vmax.bf16 %v835, 0
    %v868 = vmax.bf16 %v836, 0
    %v869 = vmax.bf16 %v837, 0
    %v870 = vmax.bf16 %v838, 0
    %v871 = vmax.bf16 %v839, 0
    %v872 = vmax.bf16 %v840, 0
    %v873 = vmax.bf16 %v841, 0
    %v874 = vmax.bf16 %v842, 0
    %v875 = vmax.bf16 %v843, 0
    %v876 = vmax.bf16 %v844, 0
    %v877 = vmax.bf16 %v845, 0
    %v878 = vmax.bf16 %v846, 0
    %v879 = vmax.bf16 %v847, 0
    %v880 = vmax.bf16 %v848, 0
    %v881 = vmax.bf16 %v849, 0
    %v882 = vmax.bf16 %v850, 0
    %v883 = vmax.bf16 %v851, 0
    %v884 = vmax.bf16 %v852, 0
    %v885 = vmax.bf16 %v853, 0
    %v886 = vmax.bf16 %v854, 0
    %v887 = vmax.bf16 %v855, 0
    %v888 = vmax.bf16 %v856, 0
    %v889 = vmax.bf16 %v857, 0
    %v890 = vmax.bf16 %v858, 0
    %v891 = vmax.bf16 %v859, 0
    %v892 = vmax.bf16 %v860, 0
    %v893 = vmax.bf16 %v861, 0
    %v894 = vmax.bf16 %v862, 0
    %v895 = vmax.bf16 %v863, 0
    %v896 = vmax.bf16 %v864, 0
    %v897 = vmax.bf16 %v865, 0
    %v898 = vld [vmem:[#allocation2] sm:$0xff]
    %v899 = vld [vmem:[#allocation2 + $0x8] sm:$0xff]
    %v900 = vld [vmem:[#allocation2 + $0x10] sm:$0xff]
    %v901 = vld [vmem:[#allocation2 + $0x18] sm:$0xff]
    %v902 = vld [vmem:[#allocation2 + $0x20] sm:$0xff]
    %v903 = vld [vmem:[#allocation2 + $0x28] sm:$0xff]
    %v904 = vld [vmem:[#allocation2 + $0x30] sm:$0xff]
    %v905 = vld [vmem:[#allocation2 + $0x38] sm:$0xff]
    %v906 = vld [vmem:[#allocation2 + $0x40] sm:$0xff]
    %v907 = vld [vmem:[#allocation2 + $0x48] sm:$0xff]
    %v908 = vld [vmem:[#allocation2 + $0x50] sm:$0xff]
    %v909 = vld [vmem:[#allocation2 + $0x58] sm:$0xff]
    %v910 = vld [vmem:[#allocation2 + $0x60] sm:$0xff]
    %v911 = vld [vmem:[#allocation2 + $0x68] sm:$0xff]
    %v912 = vld [vmem:[#allocation2 + $0x70] sm:$0xff]
    %v913 = vld [vmem:[#allocation2 + $0x78] sm:$0xff]
    %v914 = vld [vmem:[#allocation2 + $0x80] sm:$0xff]
    %v915 = vld [vmem:[#allocation2 + $0x88] sm:$0xff]
    %v916 = vld [vmem:[#allocation2 + $0x90] sm:$0xff]
    %v917 = vld [vmem:[#allocation2 + $0x98] sm:$0xff]
    %v918 = vld [vmem:[#allocation2 + $0xa0] sm:$0xff]
    %v919 = vld [vmem:[#allocation2 + $0xa8] sm:$0xff]
    %v920 = vld [vmem:[#allocation2 + $0xb0] sm:$0xff]
    %v921 = vld [vmem:[#allocation2 + $0xb8] sm:$0xff]
    %v922 = vld [vmem:[#allocation2 + $0xc0] sm:$0xff]
    %v923 = vld [vmem:[#allocation2 + $0xc8] sm:$0xff]
    %v924 = vld [vmem:[#allocation2 + $0xd0] sm:$0xff]
    %v925 = vld [vmem:[#allocation2 + $0xd8] sm:$0xff]
    %v926 = vld [vmem:[#allocation2 + $0xe0] sm:$0xff]
    %v927 = vld [vmem:[#allocation2 + $0xe8] sm:$0xff]
    %v928 = vld [vmem:[#allocation2 + $0xf0] sm:$0xff]
    %v929 = vld [vmem:[#allocation2 + $0xf8] sm:$0xff]
    %v930 = vld [vmem:[#allocation2 + $0x100] sm:$0xff]
    %v931 = vld [vmem:[#allocation2 + $0x108] sm:$0xff]
    %v932 = vld [vmem:[#allocation2 + $0x110] sm:$0xff]
    %v933 = vld [vmem:[#allocation2 + $0x118] sm:$0xff]
    %v934 = vld [vmem:[#allocation2 + $0x120] sm:$0xff]
    %v935 = vld [vmem:[#allocation2 + $0x128] sm:$0xff]
    %v936 = vld [vmem:[#allocation2 + $0x130] sm:$0xff]
    %v937 = vld [vmem:[#allocation2 + $0x138] sm:$0xff]
    %v938 = vld [vmem:[#allocation2 + $0x140] sm:$0xff]
    %v939 = vld [vmem:[#allocation2 + $0x148] sm:$0xff]
    %v940 = vld [vmem:[#allocation2 + $0x150] sm:$0xff]
    %v941 = vld [vmem:[#allocation2 + $0x158] sm:$0xff]
    %v942 = vld [vmem:[#allocation2 + $0x160] sm:$0xff]
    %v943 = vld [vmem:[#allocation2 + $0x168] sm:$0xff]
    %v944 = vld [vmem:[#allocation2 + $0x170] sm:$0xff]
    %v945 = vld [vmem:[#allocation2 + $0x178] sm:$0xff]
    %v946 = vld [vmem:[#allocation2 + $0x180] sm:$0xff]
    %v947 = vld [vmem:[#allocation2 + $0x188] sm:$0xff]
    %v948 = vld [vmem:[#allocation2 + $0x190] sm:$0xff]
    %v949 = vld [vmem:[#allocation2 + $0x198] sm:$0xff]
    %v950 = vld [vmem:[#allocation2 + $0x1a0] sm:$0xff]
    %v951 = vld [vmem:[#allocation2 + $0x1a8] sm:$0xff]
    %v952 = vld [vmem:[#allocation2 + $0x1b0] sm:$0xff]
    %v953 = vld [vmem:[#allocation2 + $0x1b8] sm:$0xff]
    %v954 = vld [vmem:[#allocation2 + $0x1c0] sm:$0xff]
    %v955 = vld [vmem:[#allocation2 + $0x1c8] sm:$0xff]
    %v956 = vld [vmem:[#allocation2 + $0x1d0] sm:$0xff]
    %v957 = vld [vmem:[#allocation2 + $0x1d8] sm:$0xff]
    %v958 = vld [vmem:[#allocation2 + $0x1e0] sm:$0xff]
    %v959 = vld [vmem:[#allocation2 + $0x1e8] sm:$0xff]
    %v960 = vld [vmem:[#allocation2 + $0x1f0] sm:$0xff]
    %v961 = vld [vmem:[#allocation2 + $0x1f8] sm:$0xff]
    %v1026 = vunpack.c.l.b16 %v898
    %v1027 = vunpack.c.h.b16 %v898
    %v1028 = vunpack.c.l.b16 %v899
    %v1029 = vunpack.c.h.b16 %v899
    %v1030 = vunpack.c.l.b16 %v900
    %v1031 = vunpack.c.h.b16 %v900
    %v1032 = vunpack.c.l.b16 %v901
    %v1033 = vunpack.c.h.b16 %v901
    %v1034 = vunpack.c.l.b16 %v902
    %v1035 = vunpack.c.h.b16 %v902
    %v1036 = vunpack.c.l.b16 %v903
    %v1037 = vunpack.c.h.b16 %v903
    %v1038 = vunpack.c.l.b16 %v904
    %v1039 = vunpack.c.h.b16 %v904
    %v1040 = vunpack.c.l.b16 %v905
    %v1041 = vunpack.c.h.b16 %v905
    %v1042 = vunpack.c.l.b16 %v906
    %v1043 = vunpack.c.h.b16 %v906
    %v1044 = vunpack.c.l.b16 %v907
    %v1045 = vunpack.c.h.b16 %v907
    %v1046 = vunpack.c.l.b16 %v908
    %v1047 = vunpack.c.h.b16 %v908
    %v1048 = vunpack.c.l.b16 %v909
    %v1049 = vunpack.c.h.b16 %v909
    %v1050 = vunpack.c.l.b16 %v910
    %v1051 = vunpack.c.h.b16 %v910
    %v1052 = vunpack.c.l.b16 %v911
    %v1053 = vunpack.c.h.b16 %v911
    %v1054 = vunpack.c.l.b16 %v912
    %v1055 = vunpack.c.h.b16 %v912
    %v1056 = vunpack.c.l.b16 %v913
    %v1057 = vunpack.c.h.b16 %v913
    %v1058 = vunpack.c.l.b16 %v914
    %v1059 = vunpack.c.h.b16 %v914
    %v1060 = vunpack.c.l.b16 %v915
    %v1061 = vunpack.c.h.b16 %v915
    %v1062 = vunpack.c.l.b16 %v916
    %v1063 = vunpack.c.h.b16 %v916
    %v1064 = vunpack.c.l.b16 %v917
    %v1065 = vunpack.c.h.b16 %v917
    %v1066 = vunpack.c.l.b16 %v918
    %v1067 = vunpack.c.h.b16 %v918
    %v1068 = vunpack.c.l.b16 %v919
    %v1069 = vunpack.c.h.b16 %v919
    %v1070 = vunpack.c.l.b16 %v920
    %v1071 = vunpack.c.h.b16 %v920
    %v1072 = vunpack.c.l.b16 %v921
    %v1073 = vunpack.c.h.b16 %v921
    %v1074 = vunpack.c.l.b16 %v922
    %v1075 = vunpack.c.h.b16 %v922
    %v1076 = vunpack.c.l.b16 %v923
    %v1077 = vunpack.c.h.b16 %v923
    %v1078 = vunpack.c.l.b16 %v924
    %v1079 = vunpack.c.h.b16 %v924
    %v1080 = vunpack.c.l.b16 %v925
    %v1081 = vunpack.c.h.b16 %v925
    %v1082 = vunpack.c.l.b16 %v926
    %v1083 = vunpack.c.h.b16 %v926
    %v1084 = vunpack.c.l.b16 %v927
    %v1085 = vunpack.c.h.b16 %v927
    %v1086 = vunpack.c.l.b16 %v928
    %v1087 = vunpack.c.h.b16 %v928
    %v1088 = vunpack.c.l.b16 %v929
    %v1089 = vunpack.c.h.b16 %v929
    %v1090 = vunpack.c.l.b16 %v930
    %v1091 = vunpack.c.h.b16 %v930
    %v1092 = vunpack.c.l.b16 %v931
    %v1093 = vunpack.c.h.b16 %v931
    %v1094 = vunpack.c.l.b16 %v932
    %v1095 = vunpack.c.h.b16 %v932
    %v1096 = vunpack.c.l.b16 %v933
    %v1097 = vunpack.c.h.b16 %v933
    %v1098 = vunpack.c.l.b16 %v934
    %v1099 = vunpack.c.h.b16 %v934
    %v1100 = vunpack.c.l.b16 %v935
    %v1101 = vunpack.c.h.b16 %v935
    %v1102 = vunpack.c.l.b16 %v936
    %v1103 = vunpack.c.h.b16 %v936
    %v1104 = vunpack.c.l.b16 %v937
    %v1105 = vunpack.c.h.b16 %v937
    %v1106 = vunpack.c.l.b16 %v938
    %v1107 = vunpack.c.h.b16 %v938
    %v1108 = vunpack.c.l.b16 %v939
    %v1109 = vunpack.c.h.b16 %v939
    %v1110 = vunpack.c.l.b16 %v940
    %v1111 = vunpack.c.h.b16 %v940
    %v1112 = vunpack.c.l.b16 %v941
    %v1113 = vunpack.c.h.b16 %v941
    %v1114 = vunpack.c.l.b16 %v942
    %v1115 = vunpack.c.h.b16 %v942
    %v1116 = vunpack.c.l.b16 %v943
    %v1117 = vunpack.c.h.b16 %v943
    %v1118 = vunpack.c.l.b16 %v944
    %v1119 = vunpack.c.h.b16 %v944
    %v1120 = vunpack.c.l.b16 %v945
    %v1121 = vunpack.c.h.b16 %v945
    %v1122 = vunpack.c.l.b16 %v946
    %v1123 = vunpack.c.h.b16 %v946
    %v1124 = vunpack.c.l.b16 %v947
    %v1125 = vunpack.c.h.b16 %v947
    %v1126 = vunpack.c.l.b16 %v948
    %v1127 = vunpack.c.h.b16 %v948
    %v1128 = vunpack.c.l.b16 %v949
    %v1129 = vunpack.c.h.b16 %v949
    %v1130 = vunpack.c.l.b16 %v950
    %v1131 = vunpack.c.h.b16 %v950
    %v1132 = vunpack.c.l.b16 %v951
    %v1133 = vunpack.c.h.b16 %v951
    %v1134 = vunpack.c.l.b16 %v952
    %v1135 = vunpack.c.h.b16 %v952
    %v1136 = vunpack.c.l.b16 %v953
    %v1137 = vunpack.c.h.b16 %v953
    %v1138 = vunpack.c.l.b16 %v954
    %v1139 = vunpack.c.h.b16 %v954
    %v1140 = vunpack.c.l.b16 %v955
    %v1141 = vunpack.c.h.b16 %v955
    %v1142 = vunpack.c.l.b16 %v956
    %v1143 = vunpack.c.h.b16 %v956
    %v1144 = vunpack.c.l.b16 %v957
    %v1145 = vunpack.c.h.b16 %v957
    %v1146 = vunpack.c.l.b16 %v958
    %v1147 = vunpack.c.h.b16 %v958
    %v1148 = vunpack.c.l.b16 %v959
    %v1149 = vunpack.c.h.b16 %v959
    %v1150 = vunpack.c.l.b16 %v960
    %v1151 = vunpack.c.h.b16 %v960
    %v1152 = vunpack.c.l.b16 %v961
    %v1153 = vunpack.c.h.b16 %v961
    %v1154 = vpack.c.b16 %v1030, %v1026
    %v1155 = vpack.c.b16 %v1031, %v1027
    %v1156 = vpack.c.b16 %v1032, %v1028
    %v1157 = vpack.c.b16 %v1033, %v1029
    %v1158 = vpack.c.b16 %v1038, %v1034
    %v1159 = vpack.c.b16 %v1039, %v1035
    %v1160 = vpack.c.b16 %v1040, %v1036
    %v1161 = vpack.c.b16 %v1041, %v1037
    %v1162 = vpack.c.b16 %v1046, %v1042
    %v1163 = vpack.c.b16 %v1047, %v1043
    %v1164 = vpack.c.b16 %v1048, %v1044
    %v1165 = vpack.c.b16 %v1049, %v1045
    %v1166 = vpack.c.b16 %v1054, %v1050
    %v1167 = vpack.c.b16 %v1055, %v1051
    %v1168 = vpack.c.b16 %v1056, %v1052
    %v1169 = vpack.c.b16 %v1057, %v1053
    %v1170 = vpack.c.b16 %v1062, %v1058
    %v1171 = vpack.c.b16 %v1063, %v1059
    %v1172 = vpack.c.b16 %v1064, %v1060
    %v1173 = vpack.c.b16 %v1065, %v1061
    %v1174 = vpack.c.b16 %v1070, %v1066
    %v1175 = vpack.c.b16 %v1071, %v1067
    %v1176 = vpack.c.b16 %v1072, %v1068
    %v1177 = vpack.c.b16 %v1073, %v1069
    %v1178 = vpack.c.b16 %v1078, %v1074
    %v1179 = vpack.c.b16 %v1079, %v1075
    %v1180 = vpack.c.b16 %v1080, %v1076
    %v1181 = vpack.c.b16 %v1081, %v1077
    %v1182 = vpack.c.b16 %v1086, %v1082
    %v1183 = vpack.c.b16 %v1087, %v1083
    %v1184 = vpack.c.b16 %v1088, %v1084
    %v1185 = vpack.c.b16 %v1089, %v1085
    %v1186 = vpack.c.b16 %v1094, %v1090
    %v1187 = vpack.c.b16 %v1095, %v1091
    %v1188 = vpack.c.b16 %v1096, %v1092
    %v1189 = vpack.c.b16 %v1097, %v1093
    %v1190 = vpack.c.b16 %v1102, %v1098
    %v1191 = vpack.c.b16 %v1103, %v1099
    %v1192 = vpack.c.b16 %v1104, %v1100
    %v1193 = vpack.c.b16 %v1105, %v1101
    %v1194 = vpack.c.b16 %v1110, %v1106
    %v1195 = vpack.c.b16 %v1111, %v1107
    %v1196 = vpack.c.b16 %v1112, %v1108
    %v1197 = vpack.c.b16 %v1113, %v1109
    %v1198 = vpack.c.b16 %v1118, %v1114
    %v1199 = vpack.c.b16 %v1119, %v1115
    %v1200 = vpack.c.b16 %v1120, %v1116
    %v1201 = vpack.c.b16 %v1121, %v1117
    %v1202 = vpack.c.b16 %v1126, %v1122
    %v1203 = vpack.c.b16 %v1127, %v1123
    %v1204 = vpack.c.b16 %v1128, %v1124
    %v1205 = vpack.c.b16 %v1129, %v1125
    %v1206 = vpack.c.b16 %v1134, %v1130
    %v1207 = vpack.c.b16 %v1135, %v1131
    %v1208 = vpack.c.b16 %v1136, %v1132
    %v1209 = vpack.c.b16 %v1137, %v1133
    %v1210 = vpack.c.b16 %v1142, %v1138
    %v1211 = vpack.c.b16 %v1143, %v1139
    %v1212 = vpack.c.b16 %v1144, %v1140
    %v1213 = vpack.c.b16 %v1145, %v1141
    %v1214 = vpack.c.b16 %v1150, %v1146
    %v1215 = vpack.c.b16 %v1151, %v1147
    %v1216 = vpack.c.b16 %v1152, %v1148
    %v1217 = vpack.c.b16 %v1153, %v1149
    %1282 = vmatprep.subr.bf16.mxu0 %v1155
    %1283 = vmatpush1.bf16.msra.mxu0 %v1154
    %1284 = vmatprep.subr.bf16.mxu0 %v1159
    %1285 = vmatpush1.bf16.msra.mxu0 %v1158
    %1286 = vmatprep.subr.bf16.mxu0 %v1163
    %1287 = vmatpush1.bf16.msra.mxu0 %v1162
    %1288 = vmatprep.subr.bf16.mxu0 %v1167
    %1289 = vmatpush1.bf16.msra.mxu0 %v1166
    %1290 = vmatprep.subr.bf16.mxu0 %v1171
    %1291 = vmatpush1.bf16.msra.mxu0 %v1170
    %1292 = vmatprep.subr.bf16.mxu0 %v1175
    %1293 = vmatpush1.bf16.msra.mxu0 %v1174
    %1294 = vmatprep.subr.bf16.mxu0 %v1179
    %1295 = vmatpush1.bf16.msra.mxu0 %v1178
    %1296 = vmatprep.subr.bf16.mxu0 %v1183
    %1297 = vmatpush1.bf16.msra.mxu0 %v1182
    %1298 = vmatprep.subr.bf16.mxu0 %v1187
    %1299 = vmatpush1.bf16.msra.mxu0 %v1186
    %1300 = vmatprep.subr.bf16.mxu0 %v1191
    %1301 = vmatpush1.bf16.msra.mxu0 %v1190
    %1302 = vmatprep.subr.bf16.mxu0 %v1195
    %1303 = vmatpush1.bf16.msra.mxu0 %v1194
    %1304 = vmatprep.subr.bf16.mxu0 %v1199
    %1305 = vmatpush1.bf16.msra.mxu0 %v1198
    %1306 = vmatprep.subr.bf16.mxu0 %v1203
    %1307 = vmatpush1.bf16.msra.mxu0 %v1202
    %1308 = vmatprep.subr.bf16.mxu0 %v1207
    %1309 = vmatpush1.bf16.msra.mxu0 %v1206
    %1310 = vmatprep.subr.bf16.mxu0 %v1211
    %1311 = vmatpush1.bf16.msra.mxu0 %v1210
    %1312 = vmatprep.subr.bf16.mxu0 %v1215
    %1313 = vmatpush1.bf16.msra.mxu0 %v1214
    %1314 = vmatprep.mubr.bf16.mxu0 %v867
    %1315 = vmatmul.mubr.bf16.gmra.mrb[0].mxu0 %v866
    %v1316 = vpop.f32.mrb[0].mxu0
    %v1317 = vadd.f32 0.0, %v1316
    %v1318 = vpop.f32.mrb[0].mxu0
    %v1319 = vadd.f32 0.0, %v1318
    %v1320 = vpop.f32.mrb[0].mxu0
    %v1321 = vadd.f32 0.0, %v1320
    %v1322 = vpop.f32.mrb[0].mxu0
    %v1323 = vadd.f32 0.0, %v1322
    %1324 = vmatprep.mubr.bf16.mxu0 %v869
    %1325 = vmatmul.mubr.bf16.gmra.mrb[0].mxu0 %v868
    %v1326 = vpop.f32.mrb[0].mxu0
    %v1327 = vadd.f32 0.0, %v1326
    %v1328 = vpop.f32.mrb[0].mxu0
    %v1329 = vadd.f32 0.0, %v1328
    %v1330 = vpop.f32.mrb[0].mxu0
    %v1331 = vadd.f32 0.0, %v1330
    %v1332 = vpop.f32.mrb[0].mxu0
    %v1333 = vadd.f32 0.0, %v1332
    %1334 = vmatprep.mubr.bf16.mxu0 %v871
    %1335 = vmatmul.mubr.bf16.gmra.mrb[0].mxu0 %v870
    %v1336 = vpop.f32.mrb[0].mxu0
    %v1337 = vadd.f32 0.0, %v1336
    %v1338 = vpop.f32.mrb[0].mxu0
    %v1339 = vadd.f32 0.0, %v1338
    %v1340 = vpop.f32.mrb[0].mxu0
    %v1341 = vadd.f32 0.0, %v1340
    %v1342 = vpop.f32.mrb[0].mxu0
    %v1343 = vadd.f32 0.0, %v1342
    %1344 = vmatprep.mubr.bf16.mxu0 %v873
    %1345 = vmatmul.mubr.bf16.gmra.mrb[0].mxu0 %v872
    %v1346 = vpop.f32.mrb[0].mxu0
    %v1347 = vadd.f32 0.0, %v1346
    %v1348 = vpop.f32.mrb[0].mxu0
    %v1349 = vadd.f32 0.0, %v1348
    %v1350 = vpop.f32.mrb[0].mxu0
    %v1351 = vadd.f32 0.0, %v1350
    %v1352 = vpop.f32.mrb[0].mxu0
    %v1353 = vadd.f32 0.0, %v1352
    %1354 = vmatprep.mubr.bf16.mxu0 %v875
    %1355 = vmatmul.mubr.bf16.gmra.mrb[0].mxu0 %v874
    %v1356 = vpop.f32.mrb[0].mxu0
    %v1357 = vadd.f32 0.0, %v1356
    %v1358 = vpop.f32.mrb[0].mxu0
    %v1359 = vadd.f32 0.0, %v1358
    %v1360 = vpop.f32.mrb[0].mxu0
    %v1361 = vadd.f32 0.0, %v1360
    %v1362 = vpop.f32.mrb[0].mxu0
    %v1363 = vadd.f32 0.0, %v1362
    %1364 = vmatprep.mubr.bf16.mxu0 %v877
    %1365 = vmatmul.mubr.bf16.gmra.mrb[0].mxu0 %v876
    %v1366 = vpop.f32.mrb[0].mxu0
    %v1367 = vadd.f32 0.0, %v1366
    %v1368 = vpop.f32.mrb[0].mxu0
    %v1369 = vadd.f32 0.0, %v1368
    %v1370 = vpop.f32.mrb[0].mxu0
    %v1371 = vadd.f32 0.0, %v1370
    %v1372 = vpop.f32.mrb[0].mxu0
    %v1373 = vadd.f32 0.0, %v1372
    %1374 = vmatprep.mubr.bf16.mxu0 %v879
    %1375 = vmatmul.mubr.bf16.gmra.mrb[0].mxu0 %v878
    %v1376 = vpop.f32.mrb[0].mxu0
    %v1377 = vadd.f32 0.0, %v1376
    %v1378 = vpop.f32.mrb[0].mxu0
    %v1379 = vadd.f32 0.0, %v1378
    %v1380 = vpop.f32.mrb[0].mxu0
    %v1381 = vadd.f32 0.0, %v1380
    %v1382 = vpop.f32.mrb[0].mxu0
    %v1383 = vadd.f32 0.0, %v1382
    %1384 = vmatprep.mubr.bf16.mxu0 %v881
    %1385 = vmatmul.mubr.bf16.gmra.mrb[0].mxu0 %v880
    %v1386 = vpop.f32.mrb[0].mxu0
    %v1387 = vadd.f32 0.0, %v1386
    %v1388 = vpop.f32.mrb[0].mxu0
    %v1389 = vadd.f32 0.0, %v1388
    %v1390 = vpop.f32.mrb[0].mxu0
    %v1391 = vadd.f32 0.0, %v1390
    %v1392 = vpop.f32.mrb[0].mxu0
    %v1393 = vadd.f32 0.0, %v1392
    %1394 = vmatprep.mubr.bf16.mxu0 %v883
    %1395 = vmatmul.mubr.bf16.gmra.mrb[0].mxu0 %v882
    %v1396 = vpop.f32.mrb[0].mxu0
    %v1397 = vadd.f32 0.0, %v1396
    %v1398 = vpop.f32.mrb[0].mxu0
    %v1399 = vadd.f32 0.0, %v1398
    %v1400 = vpop.f32.mrb[0].mxu0
    %v1401 = vadd.f32 0.0, %v1400
    %v1402 = vpop.f32.mrb[0].mxu0
    %v1403 = vadd.f32 0.0, %v1402
    %1404 = vmatprep.mubr.bf16.mxu0 %v885
    %1405 = vmatmul.mubr.bf16.gmra.mrb[0].mxu0 %v884
    %v1406 = vpop.f32.mrb[0].mxu0
    %v1407 = vadd.f32 0.0, %v1406
    %v1408 = vpop.f32.mrb[0].mxu0
    %v1409 = vadd.f32 0.0, %v1408
    %v1410 = vpop.f32.mrb[0].mxu0
    %v1411 = vadd.f32 0.0, %v1410
    %v1412 = vpop.f32.mrb[0].mxu0
    %v1413 = vadd.f32 0.0, %v1412
    %1414 = vmatprep.mubr.bf16.mxu0 %v887
    %1415 = vmatmul.mubr.bf16.gmra.mrb[0].mxu0 %v886
    %v1416 = vpop.f32.mrb[0].mxu0
    %v1417 = vadd.f32 0.0, %v1416
    %v1418 = vpop.f32.mrb[0].mxu0
    %v1419 = vadd.f32 0.0, %v1418
    %v1420 = vpop.f32.mrb[0].mxu0
    %v1421 = vadd.f32 0.0, %v1420
    %v1422 = vpop.f32.mrb[0].mxu0
    %v1423 = vadd.f32 0.0, %v1422
    %1424 = vmatprep.mubr.bf16.mxu0 %v889
    %1425 = vmatmul.mubr.bf16.gmra.mrb[0].mxu0 %v888
    %v1426 = vpop.f32.mrb[0].mxu0
    %v1427 = vadd.f32 0.0, %v1426
    %v1428 = vpop.f32.mrb[0].mxu0
    %v1429 = vadd.f32 0.0, %v1428
    %v1430 = vpop.f32.mrb[0].mxu0
    %v1431 = vadd.f32 0.0, %v1430
    %v1432 = vpop.f32.mrb[0].mxu0
    %v1433 = vadd.f32 0.0, %v1432
    %1434 = vmatprep.mubr.bf16.mxu0 %v891
    %1435 = vmatmul.mubr.bf16.gmra.mrb[0].mxu0 %v890
    %v1436 = vpop.f32.mrb[0].mxu0
    %v1437 = vadd.f32 0.0, %v1436
    %v1438 = vpop.f32.mrb[0].mxu0
    %v1439 = vadd.f32 0.0, %v1438
    %v1440 = vpop.f32.mrb[0].mxu0
    %v1441 = vadd.f32 0.0, %v1440
    %v1442 = vpop.f32.mrb[0].mxu0
    %v1443 = vadd.f32 0.0, %v1442
    %1444 = vmatprep.mubr.bf16.mxu0 %v893
    %1445 = vmatmul.mubr.bf16.gmra.mrb[0].mxu0 %v892
    %v1446 = vpop.f32.mrb[0].mxu0
    %v1447 = vadd.f32 0.0, %v1446
    %v1448 = vpop.f32.mrb[0].mxu0
    %v1449 = vadd.f32 0.0, %v1448
    %v1450 = vpop.f32.mrb[0].mxu0
    %v1451 = vadd.f32 0.0, %v1450
    %v1452 = vpop.f32.mrb[0].mxu0
    %v1453 = vadd.f32 0.0, %v1452
    %1454 = vmatprep.mubr.bf16.mxu0 %v895
    %1455 = vmatmul.mubr.bf16.gmra.mrb[0].mxu0 %v894
    %v1456 = vpop.f32.mrb[0].mxu0
    %v1457 = vadd.f32 0.0, %v1456
    %v1458 = vpop.f32.mrb[0].mxu0
    %v1459 = vadd.f32 0.0, %v1458
    %v1460 = vpop.f32.mrb[0].mxu0
    %v1461 = vadd.f32 0.0, %v1460
    %v1462 = vpop.f32.mrb[0].mxu0
    %v1463 = vadd.f32 0.0, %v1462
    %1464 = vmatprep.mubr.bf16.mxu0 %v897
    %1465 = vmatmul.mubr.bf16.gmra.mrb[0].mxu0 %v896
    %v1466 = vpop.f32.mrb[0].mxu0
    %v1467 = vadd.f32 0.0, %v1466
    %v1468 = vpop.f32.mrb[0].mxu0
    %v1469 = vadd.f32 0.0, %v1468
    %v1470 = vpop.f32.mrb[0].mxu0
    %v1471 = vadd.f32 0.0, %v1470
    %v1472 = vpop.f32.mrb[0].mxu0
    %v1473 = vadd.f32 0.0, %v1472
    %1474 = vdwg.mxu0
    %1475 = vmatprep.subr.bf16.mxu0 %v1157
    %1476 = vmatpush1.bf16.msra.mxu0 %v1156
    %1477 = vmatprep.subr.bf16.mxu0 %v1161
    %1478 = vmatpush1.bf16.msra.mxu0 %v1160
    %1479 = vmatprep.subr.bf16.mxu0 %v1165
    %1480 = vmatpush1.bf16.msra.mxu0 %v1164
    %1481 = vmatprep.subr.bf16.mxu0 %v1169
    %1482 = vmatpush1.bf16.msra.mxu0 %v1168
    %1483 = vmatprep.subr.bf16.mxu0 %v1173
    %1484 = vmatpush1.bf16.msra.mxu0 %v1172
    %1485 = vmatprep.subr.bf16.mxu0 %v1177
    %1486 = vmatpush1.bf16.msra.mxu0 %v1176
    %1487 = vmatprep.subr.bf16.mxu0 %v1181
    %1488 = vmatpush1.bf16.msra.mxu0 %v1180
    %1489 = vmatprep.subr.bf16.mxu0 %v1185
    %1490 = vmatpush1.bf16.msra.mxu0 %v1184
    %1491 = vmatprep.subr.bf16.mxu0 %v1189
    %1492 = vmatpush1.bf16.msra.mxu0 %v1188
    %1493 = vmatprep.subr.bf16.mxu0 %v1193
    %1494 = vmatpush1.bf16.msra.mxu0 %v1192
    %1495 = vmatprep.subr.bf16.mxu0 %v1197
    %1496 = vmatpush1.bf16.msra.mxu0 %v1196
    %1497 = vmatprep.subr.bf16.mxu0 %v1201
    %1498 = vmatpush1.bf16.msra.mxu0 %v1200
    %1499 = vmatprep.subr.bf16.mxu0 %v1205
    %1500 = vmatpush1.bf16.msra.mxu0 %v1204
    %1501 = vmatprep.subr.bf16.mxu0 %v1209
    %1502 = vmatpush1.bf16.msra.mxu0 %v1208
    %1503 = vmatprep.subr.bf16.mxu0 %v1213
    %1504 = vmatpush1.bf16.msra.mxu0 %v1212
    %1505 = vmatprep.subr.bf16.mxu0 %v1217
    %1506 = vmatpush1.bf16.msra.mxu0 %v1216
    %1507 = vmatprep.mubr.bf16.mxu0 %v867
    %1508 = vmatmul.mubr.bf16.gmra.mrb[0].mxu0 %v866
    %v1509 = vpop.f32.mrb[0].mxu0
    %v1510 = vadd.f32 0.0, %v1509
    %v1511 = vpop.f32.mrb[0].mxu0
    %v1512 = vadd.f32 0.0, %v1511
    %v1513 = vpop.f32.mrb[0].mxu0
    %v1514 = vadd.f32 0.0, %v1513
    %v1515 = vpop.f32.mrb[0].mxu0
    %v1516 = vadd.f32 0.0, %v1515
    %1517 = vmatprep.mubr.bf16.mxu0 %v869
    %1518 = vmatmul.mubr.bf16.gmra.mrb[0].mxu0 %v868
    %v1519 = vpop.f32.mrb[0].mxu0
    %v1520 = vadd.f32 0.0, %v1519
    %v1521 = vpop.f32.mrb[0].mxu0
    %v1522 = vadd.f32 0.0, %v1521
    %v1523 = vpop.f32.mrb[0].mxu0
    %v1524 = vadd.f32 0.0, %v1523
    %v1525 = vpop.f32.mrb[0].mxu0
    %v1526 = vadd.f32 0.0, %v1525
    %1527 = vmatprep.mubr.bf16.mxu0 %v871
    %1528 = vmatmul.mubr.bf16.gmra.mrb[0].mxu0 %v870
    %v1529 = vpop.f32.mrb[0].mxu0
    %v1530 = vadd.f32 0.0, %v1529
    %v1531 = vpop.f32.mrb[0].mxu0
    %v1532 = vadd.f32 0.0, %v1531
    %v1533 = vpop.f32.mrb[0].mxu0
    %v1534 = vadd.f32 0.0, %v1533
    %v1535 = vpop.f32.mrb[0].mxu0
    %v1536 = vadd.f32 0.0, %v1535
    %1537 = vmatprep.mubr.bf16.mxu0 %v873
    %1538 = vmatmul.mubr.bf16.gmra.mrb[0].mxu0 %v872
    %v1539 = vpop.f32.mrb[0].mxu0
    %v1540 = vadd.f32 0.0, %v1539
    %v1541 = vpop.f32.mrb[0].mxu0
    %v1542 = vadd.f32 0.0, %v1541
    %v1543 = vpop.f32.mrb[0].mxu0
    %v1544 = vadd.f32 0.0, %v1543
    %v1545 = vpop.f32.mrb[0].mxu0
    %v1546 = vadd.f32 0.0, %v1545
    %1547 = vmatprep.mubr.bf16.mxu0 %v875
    %1548 = vmatmul.mubr.bf16.gmra.mrb[0].mxu0 %v874
    %v1549 = vpop.f32.mrb[0].mxu0
    %v1550 = vadd.f32 0.0, %v1549
    %v1551 = vpop.f32.mrb[0].mxu0
    %v1552 = vadd.f32 0.0, %v1551
    %v1553 = vpop.f32.mrb[0].mxu0
    %v1554 = vadd.f32 0.0, %v1553
    %v1555 = vpop.f32.mrb[0].mxu0
    %v1556 = vadd.f32 0.0, %v1555
    %1557 = vmatprep.mubr.bf16.mxu0 %v877
    %1558 = vmatmul.mubr.bf16.gmra.mrb[0].mxu0 %v876
    %v1559 = vpop.f32.mrb[0].mxu0
    %v1560 = vadd.f32 0.0, %v1559
    %v1561 = vpop.f32.mrb[0].mxu0
    %v1562 = vadd.f32 0.0, %v1561
    %v1563 = vpop.f32.mrb[0].mxu0
    %v1564 = vadd.f32 0.0, %v1563
    %v1565 = vpop.f32.mrb[0].mxu0
    %v1566 = vadd.f32 0.0, %v1565
    %1567 = vmatprep.mubr.bf16.mxu0 %v879
    %1568 = vmatmul.mubr.bf16.gmra.mrb[0].mxu0 %v878
    %v1569 = vpop.f32.mrb[0].mxu0
    %v1570 = vadd.f32 0.0, %v1569
    %v1571 = vpop.f32.mrb[0].mxu0
    %v1572 = vadd.f32 0.0, %v1571
    %v1573 = vpop.f32.mrb[0].mxu0
    %v1574 = vadd.f32 0.0, %v1573
    %v1575 = vpop.f32.mrb[0].mxu0
    %v1576 = vadd.f32 0.0, %v1575
    %1577 = vmatprep.mubr.bf16.mxu0 %v881
    %1578 = vmatmul.mubr.bf16.gmra.mrb[0].mxu0 %v880
    %v1579 = vpop.f32.mrb[0].mxu0
    %v1580 = vadd.f32 0.0, %v1579
    %v1581 = vpop.f32.mrb[0].mxu0
    %v1582 = vadd.f32 0.0, %v1581
    %v1583 = vpop.f32.mrb[0].mxu0
    %v1584 = vadd.f32 0.0, %v1583
    %v1585 = vpop.f32.mrb[0].mxu0
    %v1586 = vadd.f32 0.0, %v1585
    %1587 = vmatprep.mubr.bf16.mxu0 %v883
    %1588 = vmatmul.mubr.bf16.gmra.mrb[0].mxu0 %v882
    %v1589 = vpop.f32.mrb[0].mxu0
    %v1590 = vadd.f32 0.0, %v1589
    %v1591 = vpop.f32.mrb[0].mxu0
    %v1592 = vadd.f32 0.0, %v1591
    %v1593 = vpop.f32.mrb[0].mxu0
    %v1594 = vadd.f32 0.0, %v1593
    %v1595 = vpop.f32.mrb[0].mxu0
    %v1596 = vadd.f32 0.0, %v1595
    %1597 = vmatprep.mubr.bf16.mxu0 %v885
    %1598 = vmatmul.mubr.bf16.gmra.mrb[0].mxu0 %v884
    %v1599 = vpop.f32.mrb[0].mxu0
    %v1600 = vadd.f32 0.0, %v1599
    %v1601 = vpop.f32.mrb[0].mxu0
    %v1602 = vadd.f32 0.0, %v1601
    %v1603 = vpop.f32.mrb[0].mxu0
    %v1604 = vadd.f32 0.0, %v1603
    %v1605 = vpop.f32.mrb[0].mxu0
    %v1606 = vadd.f32 0.0, %v1605
    %1607 = vmatprep.mubr.bf16.mxu0 %v887
    %1608 = vmatmul.mubr.bf16.gmra.mrb[0].mxu0 %v886
    %v1609 = vpop.f32.mrb[0].mxu0
    %v1610 = vadd.f32 0.0, %v1609
    %v1611 = vpop.f32.mrb[0].mxu0
    %v1612 = vadd.f32 0.0, %v1611
    %v1613 = vpop.f32.mrb[0].mxu0
    %v1614 = vadd.f32 0.0, %v1613
    %v1615 = vpop.f32.mrb[0].mxu0
    %v1616 = vadd.f32 0.0, %v1615
    %1617 = vmatprep.mubr.bf16.mxu0 %v889
    %1618 = vmatmul.mubr.bf16.gmra.mrb[0].mxu0 %v888
    %v1619 = vpop.f32.mrb[0].mxu0
    %v1620 = vadd.f32 0.0, %v1619
    %v1621 = vpop.f32.mrb[0].mxu0
    %v1622 = vadd.f32 0.0, %v1621
    %v1623 = vpop.f32.mrb[0].mxu0
    %v1624 = vadd.f32 0.0, %v1623
    %v1625 = vpop.f32.mrb[0].mxu0
    %v1626 = vadd.f32 0.0, %v1625
    %1627 = vmatprep.mubr.bf16.mxu0 %v891
    %1628 = vmatmul.mubr.bf16.gmra.mrb[0].mxu0 %v890
    %v1629 = vpop.f32.mrb[0].mxu0
    %v1630 = vadd.f32 0.0, %v1629
    %v1631 = vpop.f32.mrb[0].mxu0
    %v1632 = vadd.f32 0.0, %v1631
    %v1633 = vpop.f32.mrb[0].mxu0
    %v1634 = vadd.f32 0.0, %v1633
    %v1635 = vpop.f32.mrb[0].mxu0
    %v1636 = vadd.f32 0.0, %v1635
    %1637 = vmatprep.mubr.bf16.mxu0 %v893
    %1638 = vmatmul.mubr.bf16.gmra.mrb[0].mxu0 %v892
    %v1639 = vpop.f32.mrb[0].mxu0
    %v1640 = vadd.f32 0.0, %v1639
    %v1641 = vpop.f32.mrb[0].mxu0
    %v1642 = vadd.f32 0.0, %v1641
    %v1643 = vpop.f32.mrb[0].mxu0
    %v1644 = vadd.f32 0.0, %v1643
    %v1645 = vpop.f32.mrb[0].mxu0
    %v1646 = vadd.f32 0.0, %v1645
    %1647 = vmatprep.mubr.bf16.mxu0 %v895
    %1648 = vmatmul.mubr.bf16.gmra.mrb[0].mxu0 %v894
    %v1649 = vpop.f32.mrb[0].mxu0
    %v1650 = vadd.f32 0.0, %v1649
    %v1651 = vpop.f32.mrb[0].mxu0
    %v1652 = vadd.f32 0.0, %v1651
    %v1653 = vpop.f32.mrb[0].mxu0
    %v1654 = vadd.f32 0.0, %v1653
    %v1655 = vpop.f32.mrb[0].mxu0
    %v1656 = vadd.f32 0.0, %v1655
    %1657 = vmatprep.mubr.bf16.mxu0 %v897
    %1658 = vmatmul.mubr.bf16.gmra.mrb[0].mxu0 %v896
    %v1659 = vpop.f32.mrb[0].mxu0
    %v1660 = vadd.f32 0.0, %v1659
    %v1661 = vpop.f32.mrb[0].mxu0
    %v1662 = vadd.f32 0.0, %v1661
    %v1663 = vpop.f32.mrb[0].mxu0
    %v1664 = vadd.f32 0.0, %v1663
    %v1665 = vpop.f32.mrb[0].mxu0
    %v1666 = vadd.f32 0.0, %v1665
    %1667 = vdwg.mxu0
    %v1668 = vpack.c.bf16 %v1321, %v1317
    %v1669 = vpack.c.bf16 %v1323, %v1319
    %v1670 = vpack.c.bf16 %v1514, %v1510
    %v1671 = vpack.c.bf16 %v1516, %v1512
    %v1672 = vpack.c.bf16 %v1331, %v1327
    %v1673 = vpack.c.bf16 %v1333, %v1329
    %v1674 = vpack.c.bf16 %v1524, %v1520
    %v1675 = vpack.c.bf16 %v1526, %v1522
    %v1676 = vpack.c.bf16 %v1341, %v1337
    %v1677 = vpack.c.bf16 %v1343, %v1339
    %v1678 = vpack.c.bf16 %v1534, %v1530
    %v1679 = vpack.c.bf16 %v1536, %v1532
    %v1680 = vpack.c.bf16 %v1351, %v1347
    %v1681 = vpack.c.bf16 %v1353, %v1349
    %v1682 = vpack.c.bf16 %v1544, %v1540
    %v1683 = vpack.c.bf16 %v1546, %v1542
    %v1684 = vpack.c.bf16 %v1361, %v1357
    %v1685 = vpack.c.bf16 %v1363, %v1359
    %v1686 = vpack.c.bf16 %v1554, %v1550
    %v1687 = vpack.c.bf16 %v1556, %v1552
    %v1688 = vpack.c.bf16 %v1371, %v1367
    %v1689 = vpack.c.bf16 %v1373, %v1369
    %v1690 = vpack.c.bf16 %v1564, %v1560
    %v1691 = vpack.c.bf16 %v1566, %v1562
    %v1692 = vpack.c.bf16 %v1381, %v1377
    %v1693 = vpack.c.bf16 %v1383, %v1379
    %v1694 = vpack.c.bf16 %v1574, %v1570
    %v1695 = vpack.c.bf16 %v1576, %v1572
    %v1696 = vpack.c.bf16 %v1391, %v1387
    %v1697 = vpack.c.bf16 %v1393, %v1389
    %v1698 = vpack.c.bf16 %v1584, %v1580
    %v1699 = vpack.c.bf16 %v1586, %v1582
    %v1700 = vpack.c.bf16 %v1401, %v1397
    %v1701 = vpack.c.bf16 %v1403, %v1399
    %v1702 = vpack.c.bf16 %v1594, %v1590
    %v1703 = vpack.c.bf16 %v1596, %v1592
    %v1704 = vpack.c.bf16 %v1411, %v1407
    %v1705 = vpack.c.bf16 %v1413, %v1409
    %v1706 = vpack.c.bf16 %v1604, %v1600
    %v1707 = vpack.c.bf16 %v1606, %v1602
    %v1708 = vpack.c.bf16 %v1421, %v1417
    %v1709 = vpack.c.bf16 %v1423, %v1419
    %v1710 = vpack.c.bf16 %v1614, %v1610
    %v1711 = vpack.c.bf16 %v1616, %v1612
    %v1712 = vpack.c.bf16 %v1431, %v1427
    %v1713 = vpack.c.bf16 %v1433, %v1429
    %v1714 = vpack.c.bf16 %v1624, %v1620
    %v1715 = vpack.c.bf16 %v1626, %v1622
    %v1716 = vpack.c.bf16 %v1441, %v1437
    %v1717 = vpack.c.bf16 %v1443, %v1439
    %v1718 = vpack.c.bf16 %v1634, %v1630
    %v1719 = vpack.c.bf16 %v1636, %v1632
    %v1720 = vpack.c.bf16 %v1451, %v1447
    %v1721 = vpack.c.bf16 %v1453, %v1449
    %v1722 = vpack.c.bf16 %v1644, %v1640
    %v1723 = vpack.c.bf16 %v1646, %v1642
    %v1724 = vpack.c.bf16 %v1461, %v1457
    %v1725 = vpack.c.bf16 %v1463, %v1459
    %v1726 = vpack.c.bf16 %v1654, %v1650
    %v1727 = vpack.c.bf16 %v1656, %v1652
    %v1728 = vpack.c.bf16 %v1471, %v1467
    %v1729 = vpack.c.bf16 %v1473, %v1469
    %v1730 = vpack.c.bf16 %v1664, %v1660
    %v1731 = vpack.c.bf16 %v1666, %v1662
    %v1732 = vld [vmem:[%s6] sm:$0xf]
    %v1735 = vunpack.c.l.s4 1966171168
    %v1736 = vunpack.c.0.s8 %v1735
    %v1737 = vlaneseq
    %v1738 = vshrl.u32 %v1737, 7
    %v1739 = vsub.s32 %v1736, %v1738
    %v1740 = vrot.slane %v1732, %v1739
    %v1741 = vcombine.high %v1740, %v1740
    %v1743 = vunpack.c.l.s4 1966171168
    %v1744 = vunpack.c.0.s8 %v1743
    %v1745 = vlaneseq
    %v1746 = vshrl.u32 %v1745, 7
    %v1747 = vsub.s32 %v1744, %v1746
    %v1748 = vrot.slane %v1740, %v1747
    %v1750 = vunpack.c.l.s4 1966171168
    %v1751 = vunpack.c.0.s8 %v1750
    %v1752 = vlaneseq
    %v1753 = vshrl.u32 %v1752, 7
    %v1754 = vsub.s32 %v1751, %v1753
    %v1755 = vrot.slane %v1741, %v1754
    %v1756 = vcombine.high %v1748, %v1748
    %v1757 = vcombine.high %v1755, %v1755
    %v1759 = vpack.i.b16 %v1748, %v1748
    %v1761 = vlaneseq
    %v1762 = vshrl.u32 %v1761, 7
    %v1763 = vsub.s32 0, %v1762
    %v1764 = vrot.slane %v1759, %v1763
    %v1766 = vpack.i.b16 %v1755, %v1755
    %v1768 = vlaneseq
    %v1769 = vshrl.u32 %v1768, 7
    %v1770 = vsub.s32 0, %v1769
    %v1771 = vrot.slane %v1766, %v1770
    %v1773 = vpack.i.b16 %v1756, %v1756
    %v1775 = vlaneseq
    %v1776 = vshrl.u32 %v1775, 7
    %v1777 = vsub.s32 0, %v1776
    %v1778 = vrot.slane %v1773, %v1777
    %v1780 = vpack.i.b16 %v1757, %v1757
    %v1782 = vlaneseq
    %v1783 = vshrl.u32 %v1782, 7
    %v1784 = vsub.s32 0, %v1783
    %v1785 = vrot.slane %v1780, %v1784
    %v1786 = vadd.bf16 %v1668, %v1764
    %v1787 = vadd.bf16 %v1669, %v1771
    %v1788 = vadd.bf16 %v1670, %v1778
    %v1789 = vadd.bf16 %v1671, %v1785
    %v1790 = vadd.bf16 %v1672, %v1764
    %v1791 = vadd.bf16 %v1673, %v1771
    %v1792 = vadd.bf16 %v1674, %v1778
    %v1793 = vadd.bf16 %v1675, %v1785
    %v1794 = vadd.bf16 %v1676, %v1764
    %v1795 = vadd.bf16 %v1677, %v1771
    %v1796 = vadd.bf16 %v1678, %v1778
    %v1797 = vadd.bf16 %v1679, %v1785
    %v1798 = vadd.bf16 %v1680, %v1764
    %v1799 = vadd.bf16 %v1681, %v1771
    %v1800 = vadd.bf16 %v1682, %v1778
    %v1801 = vadd.bf16 %v1683, %v1785
    %v1802 = vadd.bf16 %v1684, %v1764
    %v1803 = vadd.bf16 %v1685, %v1771
    %v1804 = vadd.bf16 %v1686, %v1778
    %v1805 = vadd.bf16 %v1687, %v1785
    %v1806 = vadd.bf16 %v1688, %v1764
    %v1807 = vadd.bf16 %v1689, %v1771
    %v1808 = vadd.bf16 %v1690, %v1778
    %v1809 = vadd.bf16 %v1691, %v1785
    %v1810 = vadd.bf16 %v1692, %v1764
    %v1811 = vadd.bf16 %v1693, %v1771
    %v1812 = vadd.bf16 %v1694, %v1778
    %v1813 = vadd.bf16 %v1695, %v1785
    %v1814 = vadd.bf16 %v1696, %v1764
    %v1815 = vadd.bf16 %v1697, %v1771
    %v1816 = vadd.bf16 %v1698, %v1778
    %v1817 = vadd.bf16 %v1699, %v1785
    %v1818 = vadd.bf16 %v1700, %v1764
    %v1819 = vadd.bf16 %v1701, %v1771
    %v1820 = vadd.bf16 %v1702, %v1778
    %v1821 = vadd.bf16 %v1703, %v1785
    %v1822 = vadd.bf16 %v1704, %v1764
    %v1823 = vadd.bf16 %v1705, %v1771
    %v1824 = vadd.bf16 %v1706, %v1778
    %v1825 = vadd.bf16 %v1707, %v1785
    %v1826 = vadd.bf16 %v1708, %v1764
    %v1827 = vadd.bf16 %v1709, %v1771
    %v1828 = vadd.bf16 %v1710, %v1778
    %v1829 = vadd.bf16 %v1711, %v1785
    %v1830 = vadd.bf16 %v1712, %v1764
    %v1831 = vadd.bf16 %v1713, %v1771
    %v1832 = vadd.bf16 %v1714, %v1778
    %v1833 = vadd.bf16 %v1715, %v1785
    %v1834 = vadd.bf16 %v1716, %v1764
    %v1835 = vadd.bf16 %v1717, %v1771
    %v1836 = vadd.bf16 %v1718, %v1778
    %v1837 = vadd.bf16 %v1719, %v1785
    %v1838 = vadd.bf16 %v1720, %v1764
    %v1839 = vadd.bf16 %v1721, %v1771
    %v1840 = vadd.bf16 %v1722, %v1778
    %v1841 = vadd.bf16 %v1723, %v1785
    %v1842 = vadd.bf16 %v1724, %v1764
    %v1843 = vadd.bf16 %v1725, %v1771
    %v1844 = vadd.bf16 %v1726, %v1778
    %v1845 = vadd.bf16 %v1727, %v1785
    %v1846 = vadd.bf16 %v1728, %v1764
    %v1847 = vadd.bf16 %v1729, %v1771
    %v1848 = vadd.bf16 %v1730, %v1778
    %v1849 = vadd.bf16 %v1731, %v1785
    %v1850 = vmax.bf16 %v1786, 0
    %v1851 = vmax.bf16 %v1787, 0
    %v1852 = vmax.bf16 %v1788, 0
    %v1853 = vmax.bf16 %v1789, 0
    %v1854 = vmax.bf16 %v1790, 0
    %v1855 = vmax.bf16 %v1791, 0
    %v1856 = vmax.bf16 %v1792, 0
    %v1857 = vmax.bf16 %v1793, 0
    %v1858 = vmax.bf16 %v1794, 0
    %v1859 = vmax.bf16 %v1795, 0
    %v1860 = vmax.bf16 %v1796, 0
    %v1861 = vmax.bf16 %v1797, 0
    %v1862 = vmax.bf16 %v1798, 0
    %v1863 = vmax.bf16 %v1799, 0
    %v1864 = vmax.bf16 %v1800, 0
    %v1865 = vmax.bf16 %v1801, 0
    %v1866 = vmax.bf16 %v1802, 0
    %v1867 = vmax.bf16 %v1803, 0
    %v1868 = vmax.bf16 %v1804, 0
    %v1869 = vmax.bf16 %v1805, 0
    %v1870 = vmax.bf16 %v1806, 0
    %v1871 = vmax.bf16 %v1807, 0
    %v1872 = vmax.bf16 %v1808, 0
    %v1873 = vmax.bf16 %v1809, 0
    %v1874 = vmax.bf16 %v1810, 0
    %v1875 = vmax.bf16 %v1811, 0
    %v1876 = vmax.bf16 %v1812, 0
    %v1877 = vmax.bf16 %v1813, 0
    %v1878 = vmax.bf16 %v1814, 0
    %v1879 = vmax.bf16 %v1815, 0
    %v1880 = vmax.bf16 %v1816, 0
    %v1881 = vmax.bf16 %v1817, 0
    %v1882 = vmax.bf16 %v1818, 0
    %v1883 = vmax.bf16 %v1819, 0
    %v1884 = vmax.bf16 %v1820, 0
    %v1885 = vmax.bf16 %v1821, 0
    %v1886 = vmax.bf16 %v1822, 0
    %v1887 = vmax.bf16 %v1823, 0
    %v1888 = vmax.bf16 %v1824, 0
    %v1889 = vmax.bf16 %v1825, 0
    %v1890 = vmax.bf16 %v1826, 0
    %v1891 = vmax.bf16 %v1827, 0
    %v1892 = vmax.bf16 %v1828, 0
    %v1893 = vmax.bf16 %v1829, 0
    %v1894 = vmax.bf16 %v1830, 0
    %v1895 = vmax.bf16 %v1831, 0
    %v1896 = vmax.bf16 %v1832, 0
    %v1897 = vmax.bf16 %v1833, 0
    %v1898 = vmax.bf16 %v1834, 0
    %v1899 = vmax.bf16 %v1835, 0
    %v1900 = vmax.bf16 %v1836, 0
    %v1901 = vmax.bf16 %v1837, 0
    %v1902 = vmax.bf16 %v1838, 0
    %v1903 = vmax.bf16 %v1839, 0
    %v1904 = vmax.bf16 %v1840, 0
    %v1905 = vmax.bf16 %v1841, 0
    %v1906 = vmax.bf16 %v1842, 0
    %v1907 = vmax.bf16 %v1843, 0
    %v1908 = vmax.bf16 %v1844, 0
    %v1909 = vmax.bf16 %v1845, 0
    %v1910 = vmax.bf16 %v1846, 0
    %v1911 = vmax.bf16 %v1847, 0
    %v1912 = vmax.bf16 %v1848, 0
    %v1913 = vmax.bf16 %v1849, 0
    %v1914 = vld [vmem:[#allocation4] sm:$0xf]
    %v1915 = vld [vmem:[#allocation4 + $0x4] sm:$0xf]
    %v1916 = vld [vmem:[#allocation4 + $0x8] sm:$0xf]
    %v1917 = vld [vmem:[#allocation4 + $0xc] sm:$0xf]
    %v1918 = vld [vmem:[#allocation4 + $0x10] sm:$0xf]
    %v1919 = vld [vmem:[#allocation4 + $0x14] sm:$0xf]
    %v1920 = vld [vmem:[#allocation4 + $0x18] sm:$0xf]
    %v1921 = vld [vmem:[#allocation4 + $0x1c] sm:$0xf]
    %v1922 = vld [vmem:[#allocation4 + $0x20] sm:$0xf]
    %v1923 = vld [vmem:[#allocation4 + $0x24] sm:$0xf]
    %v1924 = vld [vmem:[#allocation4 + $0x28] sm:$0xf]
    %v1925 = vld [vmem:[#allocation4 + $0x2c] sm:$0xf]
    %v1926 = vld [vmem:[#allocation4 + $0x30] sm:$0xf]
    %v1927 = vld [vmem:[#allocation4 + $0x34] sm:$0xf]
    %v1928 = vld [vmem:[#allocation4 + $0x38] sm:$0xf]
    %v1929 = vld [vmem:[#allocation4 + $0x3c] sm:$0xf]
    %v1930 = vld [vmem:[#allocation4 + $0x40] sm:$0xf]
    %v1931 = vld [vmem:[#allocation4 + $0x44] sm:$0xf]
    %v1932 = vld [vmem:[#allocation4 + $0x48] sm:$0xf]
    %v1933 = vld [vmem:[#allocation4 + $0x4c] sm:$0xf]
    %v1934 = vld [vmem:[#allocation4 + $0x50] sm:$0xf]
    %v1935 = vld [vmem:[#allocation4 + $0x54] sm:$0xf]
    %v1936 = vld [vmem:[#allocation4 + $0x58] sm:$0xf]
    %v1937 = vld [vmem:[#allocation4 + $0x5c] sm:$0xf]
    %v1938 = vld [vmem:[#allocation4 + $0x60] sm:$0xf]
    %v1939 = vld [vmem:[#allocation4 + $0x64] sm:$0xf]
    %v1940 = vld [vmem:[#allocation4 + $0x68] sm:$0xf]
    %v1941 = vld [vmem:[#allocation4 + $0x6c] sm:$0xf]
    %v1942 = vld [vmem:[#allocation4 + $0x70] sm:$0xf]
    %v1943 = vld [vmem:[#allocation4 + $0x74] sm:$0xf]
    %v1944 = vld [vmem:[#allocation4 + $0x78] sm:$0xf]
    %v1945 = vld [vmem:[#allocation4 + $0x7c] sm:$0xf]
    %v1946 = vld [vmem:[#allocation4 + $0x80] sm:$0xf]
    %v1947 = vld [vmem:[#allocation4 + $0x84] sm:$0xf]
    %v1948 = vld [vmem:[#allocation4 + $0x88] sm:$0xf]
    %v1949 = vld [vmem:[#allocation4 + $0x8c] sm:$0xf]
    %v1950 = vld [vmem:[#allocation4 + $0x90] sm:$0xf]
    %v1951 = vld [vmem:[#allocation4 + $0x94] sm:$0xf]
    %v1952 = vld [vmem:[#allocation4 + $0x98] sm:$0xf]
    %v1953 = vld [vmem:[#allocation4 + $0x9c] sm:$0xf]
    %v1954 = vld [vmem:[#allocation4 + $0xa0] sm:$0xf]
    %v1955 = vld [vmem:[#allocation4 + $0xa4] sm:$0xf]
    %v1956 = vld [vmem:[#allocation4 + $0xa8] sm:$0xf]
    %v1957 = vld [vmem:[#allocation4 + $0xac] sm:$0xf]
    %v1958 = vld [vmem:[#allocation4 + $0xb0] sm:$0xf]
    %v1959 = vld [vmem:[#allocation4 + $0xb4] sm:$0xf]
    %v1960 = vld [vmem:[#allocation4 + $0xb8] sm:$0xf]
    %v1961 = vld [vmem:[#allocation4 + $0xbc] sm:$0xf]
    %v1962 = vld [vmem:[#allocation4 + $0xc0] sm:$0xf]
    %v1963 = vld [vmem:[#allocation4 + $0xc4] sm:$0xf]
    %v1964 = vld [vmem:[#allocation4 + $0xc8] sm:$0xf]
    %v1965 = vld [vmem:[#allocation4 + $0xcc] sm:$0xf]
    %v1966 = vld [vmem:[#allocation4 + $0xd0] sm:$0xf]
    %v1967 = vld [vmem:[#allocation4 + $0xd4] sm:$0xf]
    %v1968 = vld [vmem:[#allocation4 + $0xd8] sm:$0xf]
    %v1969 = vld [vmem:[#allocation4 + $0xdc] sm:$0xf]
    %v1970 = vld [vmem:[#allocation4 + $0xe0] sm:$0xf]
    %v1971 = vld [vmem:[#allocation4 + $0xe4] sm:$0xf]
    %v1972 = vld [vmem:[#allocation4 + $0xe8] sm:$0xf]
    %v1973 = vld [vmem:[#allocation4 + $0xec] sm:$0xf]
    %v1974 = vld [vmem:[#allocation4 + $0xf0] sm:$0xf]
    %v1975 = vld [vmem:[#allocation4 + $0xf4] sm:$0xf]
    %v1976 = vld [vmem:[#allocation4 + $0xf8] sm:$0xf]
    %v1977 = vld [vmem:[#allocation4 + $0xfc] sm:$0xf]
    %v2042 = vunpack.c.l.b16 %v1914
    %v2043 = vunpack.c.l.b16 %v1915
    %v2044 = vunpack.c.l.b16 %v1916
    %v2045 = vunpack.c.l.b16 %v1917
    %v2046 = vunpack.c.l.b16 %v1918
    %v2047 = vunpack.c.l.b16 %v1919
    %v2048 = vunpack.c.l.b16 %v1920
    %v2049 = vunpack.c.l.b16 %v1921
    %v2050 = vunpack.c.l.b16 %v1922
    %v2051 = vunpack.c.l.b16 %v1923
    %v2052 = vunpack.c.l.b16 %v1924
    %v2053 = vunpack.c.l.b16 %v1925
    %v2054 = vunpack.c.l.b16 %v1926
    %v2055 = vunpack.c.l.b16 %v1927
    %v2056 = vunpack.c.l.b16 %v1928
    %v2057 = vunpack.c.l.b16 %v1929
    %v2058 = vunpack.c.l.b16 %v1930
    %v2059 = vunpack.c.l.b16 %v1931
    %v2060 = vunpack.c.l.b16 %v1932
    %v2061 = vunpack.c.l.b16 %v1933
    %v2062 = vunpack.c.l.b16 %v1934
    %v2063 = vunpack.c.l.b16 %v1935
    %v2064 = vunpack.c.l.b16 %v1936
    %v2065 = vunpack.c.l.b16 %v1937
    %v2066 = vunpack.c.l.b16 %v1938
    %v2067 = vunpack.c.l.b16 %v1939
    %v2068 = vunpack.c.l.b16 %v1940
    %v2069 = vunpack.c.l.b16 %v1941
    %v2070 = vunpack.c.l.b16 %v1942
    %v2071 = vunpack.c.l.b16 %v1943
    %v2072 = vunpack.c.l.b16 %v1944
    %v2073 = vunpack.c.l.b16 %v1945
    %v2074 = vunpack.c.l.b16 %v1946
    %v2075 = vunpack.c.l.b16 %v1947
    %v2076 = vunpack.c.l.b16 %v1948
    %v2077 = vunpack.c.l.b16 %v1949
    %v2078 = vunpack.c.l.b16 %v1950
    %v2079 = vunpack.c.l.b16 %v1951
    %v2080 = vunpack.c.l.b16 %v1952
    %v2081 = vunpack.c.l.b16 %v1953
    %v2082 = vunpack.c.l.b16 %v1954
    %v2083 = vunpack.c.l.b16 %v1955
    %v2084 = vunpack.c.l.b16 %v1956
    %v2085 = vunpack.c.l.b16 %v1957
    %v2086 = vunpack.c.l.b16 %v1958
    %v2087 = vunpack.c.l.b16 %v1959
    %v2088 = vunpack.c.l.b16 %v1960
    %v2089 = vunpack.c.l.b16 %v1961
    %v2090 = vunpack.c.l.b16 %v1962
    %v2091 = vunpack.c.l.b16 %v1963
    %v2092 = vunpack.c.l.b16 %v1964
    %v2093 = vunpack.c.l.b16 %v1965
    %v2094 = vunpack.c.l.b16 %v1966
    %v2095 = vunpack.c.l.b16 %v1967
    %v2096 = vunpack.c.l.b16 %v1968
    %v2097 = vunpack.c.l.b16 %v1969
    %v2098 = vunpack.c.l.b16 %v1970
    %v2099 = vunpack.c.l.b16 %v1971
    %v2100 = vunpack.c.l.b16 %v1972
    %v2101 = vunpack.c.l.b16 %v1973
    %v2102 = vunpack.c.l.b16 %v1974
    %v2103 = vunpack.c.l.b16 %v1975
    %v2104 = vunpack.c.l.b16 %v1976
    %v2105 = vunpack.c.l.b16 %v1977
    %v2106 = vpack.c.b16 %v2043, %v2042
    %v2107 = vpack.c.b16 %v2045, %v2044
    %v2108 = vpack.c.b16 %v2047, %v2046
    %v2109 = vpack.c.b16 %v2049, %v2048
    %v2110 = vpack.c.b16 %v2051, %v2050
    %v2111 = vpack.c.b16 %v2053, %v2052
    %v2112 = vpack.c.b16 %v2055, %v2054
    %v2113 = vpack.c.b16 %v2057, %v2056
    %v2114 = vpack.c.b16 %v2059, %v2058
    %v2115 = vpack.c.b16 %v2061, %v2060
    %v2116 = vpack.c.b16 %v2063, %v2062
    %v2117 = vpack.c.b16 %v2065, %v2064
    %v2118 = vpack.c.b16 %v2067, %v2066
    %v2119 = vpack.c.b16 %v2069, %v2068
    %v2120 = vpack.c.b16 %v2071, %v2070
    %v2121 = vpack.c.b16 %v2073, %v2072
    %v2122 = vpack.c.b16 %v2075, %v2074
    %v2123 = vpack.c.b16 %v2077, %v2076
    %v2124 = vpack.c.b16 %v2079, %v2078
    %v2125 = vpack.c.b16 %v2081, %v2080
    %v2126 = vpack.c.b16 %v2083, %v2082
    %v2127 = vpack.c.b16 %v2085, %v2084
    %v2128 = vpack.c.b16 %v2087, %v2086
    %v2129 = vpack.c.b16 %v2089, %v2088
    %v2130 = vpack.c.b16 %v2091, %v2090
    %v2131 = vpack.c.b16 %v2093, %v2092
    %v2132 = vpack.c.b16 %v2095, %v2094
    %v2133 = vpack.c.b16 %v2097, %v2096
    %v2134 = vpack.c.b16 %v2099, %v2098
    %v2135 = vpack.c.b16 %v2101, %v2100
    %v2136 = vpack.c.b16 %v2103, %v2102
    %v2137 = vpack.c.b16 %v2105, %v2104
    %2170 = vmatprep.subr.bf16.mxu0 0
    %2171 = vmatpush1.bf16.msra.mxu0 %v2106
    %2172 = vmatprep.subr.bf16.mxu0 0
    %2173 = vmatpush1.bf16.msra.mxu0 %v2107
    %2174 = vmatprep.subr.bf16.mxu0 0
    %2175 = vmatpush1.bf16.msra.mxu0 %v2108
    %2176 = vmatprep.subr.bf16.mxu0 0
    %2177 = vmatpush1.bf16.msra.mxu0 %v2109
    %2178 = vmatprep.subr.bf16.mxu0 0
    %2179 = vmatpush1.bf16.msra.mxu0 %v2110
    %2180 = vmatprep.subr.bf16.mxu0 0
    %2181 = vmatpush1.bf16.msra.mxu0 %v2111
    %2182 = vmatprep.subr.bf16.mxu0 0
    %2183 = vmatpush1.bf16.msra.mxu0 %v2112
    %2184 = vmatprep.subr.bf16.mxu0 0
    %2185 = vmatpush1.bf16.msra.mxu0 %v2113
    %2186 = vmatprep.subr.bf16.mxu0 0
    %2187 = vmatpush1.bf16.msra.mxu0 %v2114
    %2188 = vmatprep.subr.bf16.mxu0 0
    %2189 = vmatpush1.bf16.msra.mxu0 %v2115
    %2190 = vmatprep.subr.bf16.mxu0 0
    %2191 = vmatpush1.bf16.msra.mxu0 %v2116
    %2192 = vmatprep.subr.bf16.mxu0 0
    %2193 = vmatpush1.bf16.msra.mxu0 %v2117
    %2194 = vmatprep.subr.bf16.mxu0 0
    %2195 = vmatpush1.bf16.msra.mxu0 %v2118
    %2196 = vmatprep.subr.bf16.mxu0 0
    %2197 = vmatpush1.bf16.msra.mxu0 %v2119
    %2198 = vmatprep.subr.bf16.mxu0 0
    %2199 = vmatpush1.bf16.msra.mxu0 %v2120
    %2200 = vmatprep.subr.bf16.mxu0 0
    %2201 = vmatpush1.bf16.msra.mxu0 %v2121
    %2202 = vmatprep.mubr.bf16.mxu0 %v1851
    %2203 = vmatmul.mubr.bf16.gmra.mrb[0].mxu0 %v1850
    %v2204 = vpop.f32.mrb[0].mxu0
    %v2205 = vadd.f32 0.0, %v2204
    %v2206 = vpop.f32.mrb[0].mxu0
    %v2207 = vpop.f32.mrb[0].mxu0
    %v2208 = vadd.f32 0.0, %v2207
    %v2209 = vpop.f32.mrb[0].mxu0
    %2210 = vmatprep.mubr.bf16.mxu0 %v1855
    %2211 = vmatmul.mubr.bf16.gmra.mrb[0].mxu0 %v1854
    %v2212 = vpop.f32.mrb[0].mxu0
    %v2213 = vadd.f32 0.0, %v2212
    %v2214 = vpop.f32.mrb[0].mxu0
    %v2215 = vpop.f32.mrb[0].mxu0
    %v2216 = vadd.f32 0.0, %v2215
    %v2217 = vpop.f32.mrb[0].mxu0
    %2218 = vmatprep.mubr.bf16.mxu0 %v1859
    %2219 = vmatmul.mubr.bf16.gmra.mrb[0].mxu0 %v1858
    %v2220 = vpop.f32.mrb[0].mxu0
    %v2221 = vadd.f32 0.0, %v2220
    %v2222 = vpop.f32.mrb[0].mxu0
    %v2223 = vpop.f32.mrb[0].mxu0
    %v2224 = vadd.f32 0.0, %v2223
    %v2225 = vpop.f32.mrb[0].mxu0
    %2226 = vmatprep.mubr.bf16.mxu0 %v1863
    %2227 = vmatmul.mubr.bf16.gmra.mrb[0].mxu0 %v1862
    %v2228 = vpop.f32.mrb[0].mxu0
    %v2229 = vadd.f32 0.0, %v2228
    %v2230 = vpop.f32.mrb[0].mxu0
    %v2231 = vpop.f32.mrb[0].mxu0
    %v2232 = vadd.f32 0.0, %v2231
    %v2233 = vpop.f32.mrb[0].mxu0
    %2234 = vmatprep.mubr.bf16.mxu0 %v1867
    %2235 = vmatmul.mubr.bf16.gmra.mrb[0].mxu0 %v1866
    %v2236 = vpop.f32.mrb[0].mxu0
    %v2237 = vadd.f32 0.0, %v2236
    %v2238 = vpop.f32.mrb[0].mxu0
    %v2239 = vpop.f32.mrb[0].mxu0
    %v2240 = vadd.f32 0.0, %v2239
    %v2241 = vpop.f32.mrb[0].mxu0
    %2242 = vmatprep.mubr.bf16.mxu0 %v1871
    %2243 = vmatmul.mubr.bf16.gmra.mrb[0].mxu0 %v1870
    %v2244 = vpop.f32.mrb[0].mxu0
    %v2245 = vadd.f32 0.0, %v2244
    %v2246 = vpop.f32.mrb[0].mxu0
    %v2247 = vpop.f32.mrb[0].mxu0
    %v2248 = vadd.f32 0.0, %v2247
    %v2249 = vpop.f32.mrb[0].mxu0
    %2250 = vmatprep.mubr.bf16.mxu0 %v1875
    %2251 = vmatmul.mubr.bf16.gmra.mrb[0].mxu0 %v1874
    %v2252 = vpop.f32.mrb[0].mxu0
    %v2253 = vadd.f32 0.0, %v2252
    %v2254 = vpop.f32.mrb[0].mxu0
    %v2255 = vpop.f32.mrb[0].mxu0
    %v2256 = vadd.f32 0.0, %v2255
    %v2257 = vpop.f32.mrb[0].mxu0
    %2258 = vmatprep.mubr.bf16.mxu0 %v1879
    %2259 = vmatmul.mubr.bf16.gmra.mrb[0].mxu0 %v1878
    %v2260 = vpop.f32.mrb[0].mxu0
    %v2261 = vadd.f32 0.0, %v2260
    %v2262 = vpop.f32.mrb[0].mxu0
    %v2263 = vpop.f32.mrb[0].mxu0
    %v2264 = vadd.f32 0.0, %v2263
    %v2265 = vpop.f32.mrb[0].mxu0
    %2266 = vmatprep.mubr.bf16.mxu0 %v1883
    %2267 = vmatmul.mubr.bf16.gmra.mrb[0].mxu0 %v1882
    %v2268 = vpop.f32.mrb[0].mxu0
    %v2269 = vadd.f32 0.0, %v2268
    %v2270 = vpop.f32.mrb[0].mxu0
    %v2271 = vpop.f32.mrb[0].mxu0
    %v2272 = vadd.f32 0.0, %v2271
    %v2273 = vpop.f32.mrb[0].mxu0
    %2274 = vmatprep.mubr.bf16.mxu0 %v1887
    %2275 = vmatmul.mubr.bf16.gmra.mrb[0].mxu0 %v1886
    %v2276 = vpop.f32.mrb[0].mxu0
    %v2277 = vadd.f32 0.0, %v2276
    %v2278 = vpop.f32.mrb[0].mxu0
    %v2279 = vpop.f32.mrb[0].mxu0
    %v2280 = vadd.f32 0.0, %v2279
    %v2281 = vpop.f32.mrb[0].mxu0
    %2282 = vmatprep.mubr.bf16.mxu0 %v1891
    %2283 = vmatmul.mubr.bf16.gmra.mrb[0].mxu0 %v1890
    %v2284 = vpop.f32.mrb[0].mxu0
    %v2285 = vadd.f32 0.0, %v2284
    %v2286 = vpop.f32.mrb[0].mxu0
    %v2287 = vpop.f32.mrb[0].mxu0
    %v2288 = vadd.f32 0.0, %v2287
    %v2289 = vpop.f32.mrb[0].mxu0
    %2290 = vmatprep.mubr.bf16.mxu0 %v1895
    %2291 = vmatmul.mubr.bf16.gmra.mrb[0].mxu0 %v1894
    %v2292 = vpop.f32.mrb[0].mxu0
    %v2293 = vadd.f32 0.0, %v2292
    %v2294 = vpop.f32.mrb[0].mxu0
    %v2295 = vpop.f32.mrb[0].mxu0
    %v2296 = vadd.f32 0.0, %v2295
    %v2297 = vpop.f32.mrb[0].mxu0
    %2298 = vmatprep.mubr.bf16.mxu0 %v1899
    %2299 = vmatmul.mubr.bf16.gmra.mrb[0].mxu0 %v1898
    %v2300 = vpop.f32.mrb[0].mxu0
    %v2301 = vadd.f32 0.0, %v2300
    %v2302 = vpop.f32.mrb[0].mxu0
    %v2303 = vpop.f32.mrb[0].mxu0
    %v2304 = vadd.f32 0.0, %v2303
    %v2305 = vpop.f32.mrb[0].mxu0
    %2306 = vmatprep.mubr.bf16.mxu0 %v1903
    %2307 = vmatmul.mubr.bf16.gmra.mrb[0].mxu0 %v1902
    %v2308 = vpop.f32.mrb[0].mxu0
    %v2309 = vadd.f32 0.0, %v2308
    %v2310 = vpop.f32.mrb[0].mxu0
    %v2311 = vpop.f32.mrb[0].mxu0
    %v2312 = vadd.f32 0.0, %v2311
    %v2313 = vpop.f32.mrb[0].mxu0
    %2314 = vmatprep.mubr.bf16.mxu0 %v1907
    %2315 = vmatmul.mubr.bf16.gmra.mrb[0].mxu0 %v1906
    %v2316 = vpop.f32.mrb[0].mxu0
    %v2317 = vadd.f32 0.0, %v2316
    %v2318 = vpop.f32.mrb[0].mxu0
    %v2319 = vpop.f32.mrb[0].mxu0
    %v2320 = vadd.f32 0.0, %v2319
    %v2321 = vpop.f32.mrb[0].mxu0
    %2322 = vmatprep.mubr.bf16.mxu0 %v1911
    %2323 = vmatmul.mubr.bf16.gmra.mrb[0].mxu0 %v1910
    %v2324 = vpop.f32.mrb[0].mxu0
    %v2325 = vadd.f32 0.0, %v2324
    %v2326 = vpop.f32.mrb[0].mxu0
    %v2327 = vpop.f32.mrb[0].mxu0
    %v2328 = vadd.f32 0.0, %v2327
    %v2329 = vpop.f32.mrb[0].mxu0
    %2330 = vdwg.mxu0
    %2331 = vmatprep.subr.bf16.mxu0 0
    %2332 = vmatpush1.bf16.msra.mxu0 %v2122
    %2333 = vmatprep.subr.bf16.mxu0 0
    %2334 = vmatpush1.bf16.msra.mxu0 %v2123
    %2335 = vmatprep.subr.bf16.mxu0 0
    %2336 = vmatpush1.bf16.msra.mxu0 %v2124
    %2337 = vmatprep.subr.bf16.mxu0 0
    %2338 = vmatpush1.bf16.msra.mxu0 %v2125
    %2339 = vmatprep.subr.bf16.mxu0 0
    %2340 = vmatpush1.bf16.msra.mxu0 %v2126
    %2341 = vmatprep.subr.bf16.mxu0 0
    %2342 = vmatpush1.bf16.msra.mxu0 %v2127
    %2343 = vmatprep.subr.bf16.mxu0 0
    %2344 = vmatpush1.bf16.msra.mxu0 %v2128
    %2345 = vmatprep.subr.bf16.mxu0 0
    %2346 = vmatpush1.bf16.msra.mxu0 %v2129
    %2347 = vmatprep.subr.bf16.mxu0 0
    %2348 = vmatpush1.bf16.msra.mxu0 %v2130
    %2349 = vmatprep.subr.bf16.mxu0 0
    %2350 = vmatpush1.bf16.msra.mxu0 %v2131
    %2351 = vmatprep.subr.bf16.mxu0 0
    %2352 = vmatpush1.bf16.msra.mxu0 %v2132
    %2353 = vmatprep.subr.bf16.mxu0 0
    %2354 = vmatpush1.bf16.msra.mxu0 %v2133
    %2355 = vmatprep.subr.bf16.mxu0 0
    %2356 = vmatpush1.bf16.msra.mxu0 %v2134
    %2357 = vmatprep.subr.bf16.mxu0 0
    %2358 = vmatpush1.bf16.msra.mxu0 %v2135
    %2359 = vmatprep.subr.bf16.mxu0 0
    %2360 = vmatpush1.bf16.msra.mxu0 %v2136
    %2361 = vmatprep.subr.bf16.mxu0 0
    %2362 = vmatpush1.bf16.msra.mxu0 %v2137
    %2363 = vmatprep.mubr.bf16.mxu0 %v1853
    %2364 = vmatmul.mubr.bf16.gmra.mrb[0].mxu0 %v1852
    %v2365 = vpop.f32.mrb[0].mxu0
    %v2366 = vadd.f32 %v2205, %v2365
    %v2367 = vpop.f32.mrb[0].mxu0
    %v2368 = vpop.f32.mrb[0].mxu0
    %v2369 = vadd.f32 %v2208, %v2368
    %v2370 = vpop.f32.mrb[0].mxu0
    %2371 = vmatprep.mubr.bf16.mxu0 %v1857
    %2372 = vmatmul.mubr.bf16.gmra.mrb[0].mxu0 %v1856
    %v2373 = vpop.f32.mrb[0].mxu0
    %v2374 = vadd.f32 %v2213, %v2373
    %v2375 = vpop.f32.mrb[0].mxu0
    %v2376 = vpop.f32.mrb[0].mxu0
    %v2377 = vadd.f32 %v2216, %v2376
    %v2378 = vpop.f32.mrb[0].mxu0
    %2379 = vmatprep.mubr.bf16.mxu0 %v1861
    %2380 = vmatmul.mubr.bf16.gmra.mrb[0].mxu0 %v1860
    %v2381 = vpop.f32.mrb[0].mxu0
    %v2382 = vadd.f32 %v2221, %v2381
    %v2383 = vpop.f32.mrb[0].mxu0
    %v2384 = vpop.f32.mrb[0].mxu0
    %v2385 = vadd.f32 %v2224, %v2384
    %v2386 = vpop.f32.mrb[0].mxu0
    %2387 = vmatprep.mubr.bf16.mxu0 %v1865
    %2388 = vmatmul.mubr.bf16.gmra.mrb[0].mxu0 %v1864
    %v2389 = vpop.f32.mrb[0].mxu0
    %v2390 = vadd.f32 %v2229, %v2389
    %v2391 = vpop.f32.mrb[0].mxu0
    %v2392 = vpop.f32.mrb[0].mxu0
    %v2393 = vadd.f32 %v2232, %v2392
    %v2394 = vpop.f32.mrb[0].mxu0
    %2395 = vmatprep.mubr.bf16.mxu0 %v1869
    %2396 = vmatmul.mubr.bf16.gmra.mrb[0].mxu0 %v1868
    %v2397 = vpop.f32.mrb[0].mxu0
    %v2398 = vadd.f32 %v2237, %v2397
    %v2399 = vpop.f32.mrb[0].mxu0
    %v2400 = vpop.f32.mrb[0].mxu0
    %v2401 = vadd.f32 %v2240, %v2400
    %v2402 = vpop.f32.mrb[0].mxu0
    %2403 = vmatprep.mubr.bf16.mxu0 %v1873
    %2404 = vmatmul.mubr.bf16.gmra.mrb[0].mxu0 %v1872
    %v2405 = vpop.f32.mrb[0].mxu0
    %v2406 = vadd.f32 %v2245, %v2405
    %v2407 = vpop.f32.mrb[0].mxu0
    %v2408 = vpop.f32.mrb[0].mxu0
    %v2409 = vadd.f32 %v2248, %v2408
    %v2410 = vpop.f32.mrb[0].mxu0
    %2411 = vmatprep.mubr.bf16.mxu0 %v1877
    %2412 = vmatmul.mubr.bf16.gmra.mrb[0].mxu0 %v1876
    %v2413 = vpop.f32.mrb[0].mxu0
    %v2414 = vadd.f32 %v2253, %v2413
    %v2415 = vpop.f32.mrb[0].mxu0
    %v2416 = vpop.f32.mrb[0].mxu0
    %v2417 = vadd.f32 %v2256, %v2416
    %v2418 = vpop.f32.mrb[0].mxu0
    %2419 = vmatprep.mubr.bf16.mxu0 %v1881
    %2420 = vmatmul.mubr.bf16.gmra.mrb[0].mxu0 %v1880
    %v2421 = vpop.f32.mrb[0].mxu0
    %v2422 = vadd.f32 %v2261, %v2421
    %v2423 = vpop.f32.mrb[0].mxu0
    %v2424 = vpop.f32.mrb[0].mxu0
    %v2425 = vadd.f32 %v2264, %v2424
    %v2426 = vpop.f32.mrb[0].mxu0
    %2427 = vmatprep.mubr.bf16.mxu0 %v1885
    %2428 = vmatmul.mubr.bf16.gmra.mrb[0].mxu0 %v1884
    %v2429 = vpop.f32.mrb[0].mxu0
    %v2430 = vadd.f32 %v2269, %v2429
    %v2431 = vpop.f32.mrb[0].mxu0
    %v2432 = vpop.f32.mrb[0].mxu0
    %v2433 = vadd.f32 %v2272, %v2432
    %v2434 = vpop.f32.mrb[0].mxu0
    %2435 = vmatprep.mubr.bf16.mxu0 %v1889
    %2436 = vmatmul.mubr.bf16.gmra.mrb[0].mxu0 %v1888
    %v2437 = vpop.f32.mrb[0].mxu0
    %v2438 = vadd.f32 %v2277, %v2437
    %v2439 = vpop.f32.mrb[0].mxu0
    %v2440 = vpop.f32.mrb[0].mxu0
    %v2441 = vadd.f32 %v2280, %v2440
    %v2442 = vpop.f32.mrb[0].mxu0
    %2443 = vmatprep.mubr.bf16.mxu0 %v1893
    %2444 = vmatmul.mubr.bf16.gmra.mrb[0].mxu0 %v1892
    %v2445 = vpop.f32.mrb[0].mxu0
    %v2446 = vadd.f32 %v2285, %v2445
    %v2447 = vpop.f32.mrb[0].mxu0
    %v2448 = vpop.f32.mrb[0].mxu0
    %v2449 = vadd.f32 %v2288, %v2448
    %v2450 = vpop.f32.mrb[0].mxu0
    %2451 = vmatprep.mubr.bf16.mxu0 %v1897
    %2452 = vmatmul.mubr.bf16.gmra.mrb[0].mxu0 %v1896
    %v2453 = vpop.f32.mrb[0].mxu0
    %v2454 = vadd.f32 %v2293, %v2453
    %v2455 = vpop.f32.mrb[0].mxu0
    %v2456 = vpop.f32.mrb[0].mxu0
    %v2457 = vadd.f32 %v2296, %v2456
    %v2458 = vpop.f32.mrb[0].mxu0
    %2459 = vmatprep.mubr.bf16.mxu0 %v1901
    %2460 = vmatmul.mubr.bf16.gmra.mrb[0].mxu0 %v1900
    %v2461 = vpop.f32.mrb[0].mxu0
    %v2462 = vadd.f32 %v2301, %v2461
    %v2463 = vpop.f32.mrb[0].mxu0
    %v2464 = vpop.f32.mrb[0].mxu0
    %v2465 = vadd.f32 %v2304, %v2464
    %v2466 = vpop.f32.mrb[0].mxu0
    %2467 = vmatprep.mubr.bf16.mxu0 %v1905
    %2468 = vmatmul.mubr.bf16.gmra.mrb[0].mxu0 %v1904
    %v2469 = vpop.f32.mrb[0].mxu0
    %v2470 = vadd.f32 %v2309, %v2469
    %v2471 = vpop.f32.mrb[0].mxu0
    %v2472 = vpop.f32.mrb[0].mxu0
    %v2473 = vadd.f32 %v2312, %v2472
    %v2474 = vpop.f32.mrb[0].mxu0
    %2475 = vmatprep.mubr.bf16.mxu0 %v1909
    %2476 = vmatmul.mubr.bf16.gmra.mrb[0].mxu0 %v1908
    %v2477 = vpop.f32.mrb[0].mxu0
    %v2478 = vadd.f32 %v2317, %v2477
    %v2479 = vpop.f32.mrb[0].mxu0
    %v2480 = vpop.f32.mrb[0].mxu0
    %v2481 = vadd.f32 %v2320, %v2480
    %v2482 = vpop.f32.mrb[0].mxu0
    %2483 = vmatprep.mubr.bf16.mxu0 %v1913
    %2484 = vmatmul.mubr.bf16.gmra.mrb[0].mxu0 %v1912
    %v2485 = vpop.f32.mrb[0].mxu0
    %v2486 = vadd.f32 %v2325, %v2485
    %v2487 = vpop.f32.mrb[0].mxu0
    %v2488 = vpop.f32.mrb[0].mxu0
    %v2489 = vadd.f32 %v2328, %v2488
    %v2490 = vpop.f32.mrb[0].mxu0
    %2491 = vdwg.mxu0
    %v2492 = vpack.c.bf16 %v2369, %v2366
    %v2493 = vpack.c.bf16 %v2377, %v2374
    %v2494 = vpack.c.bf16 %v2385, %v2382
    %v2495 = vpack.c.bf16 %v2393, %v2390
    %v2496 = vpack.c.bf16 %v2401, %v2398
    %v2497 = vpack.c.bf16 %v2409, %v2406
    %v2498 = vpack.c.bf16 %v2417, %v2414
    %v2499 = vpack.c.bf16 %v2425, %v2422
    %v2500 = vpack.c.bf16 %v2433, %v2430
    %v2501 = vpack.c.bf16 %v2441, %v2438
    %v2502 = vpack.c.bf16 %v2449, %v2446
    %v2503 = vpack.c.bf16 %v2457, %v2454
    %v2504 = vpack.c.bf16 %v2465, %v2462
    %v2505 = vpack.c.bf16 %v2473, %v2470
    %v2506 = vpack.c.bf16 %v2481, %v2478
    %v2507 = vpack.c.bf16 %v2489, %v2486
    %v2508 = vld [vmem:[%s8] sm:$0x1]
    %v2510 = vpack.i.b16 %v2508, %v2508
    %v2512 = vlaneseq
    %v2513 = vshrl.u32 %v2512, 7
    %v2514 = vsub.s32 0, %v2513
    %v2515 = vrot.slane %v2510, %v2514
    %v2516 = vadd.bf16 %v2492, %v2515
    %v2517 = vadd.bf16 %v2493, %v2515
    %v2518 = vadd.bf16 %v2494, %v2515
    %v2519 = vadd.bf16 %v2495, %v2515
    %v2520 = vadd.bf16 %v2496, %v2515
    %v2521 = vadd.bf16 %v2497, %v2515
    %v2522 = vadd.bf16 %v2498, %v2515
    %v2523 = vadd.bf16 %v2499, %v2515
    %v2524 = vadd.bf16 %v2500, %v2515
    %v2525 = vadd.bf16 %v2501, %v2515
    %v2526 = vadd.bf16 %v2502, %v2515
    %v2527 = vadd.bf16 %v2503, %v2515
    %v2528 = vadd.bf16 %v2504, %v2515
    %v2529 = vadd.bf16 %v2505, %v2515
    %v2530 = vadd.bf16 %v2506, %v2515
    %v2531 = vadd.bf16 %v2507, %v2515
    %v2532 = vmax.bf16 %v2516, 0
    %v2533 = vmax.bf16 %v2517, 0
    %v2534 = vmax.bf16 %v2518, 0
    %v2535 = vmax.bf16 %v2519, 0
    %v2536 = vmax.bf16 %v2520, 0
    %v2537 = vmax.bf16 %v2521, 0
    %v2538 = vmax.bf16 %v2522, 0
    %v2539 = vmax.bf16 %v2523, 0
    %v2540 = vmax.bf16 %v2524, 0
    %v2541 = vmax.bf16 %v2525, 0
    %v2542 = vmax.bf16 %v2526, 0
    %v2543 = vmax.bf16 %v2527, 0
    %v2544 = vmax.bf16 %v2528, 0
    %v2545 = vmax.bf16 %v2529, 0
    %v2546 = vmax.bf16 %v2530, 0
    %v2547 = vmax.bf16 %v2531, 0
    %v2548 = vld [vmem:[%s9] sm:$0xf]
    %v2549 = vld [vmem:[%s9 + $0x4] sm:$0xf]
    %v2550 = vld [vmem:[%s9 + $0x8] sm:$0xf]
    %v2551 = vld [vmem:[%s9 + $0xc] sm:$0xf]
    %v2552 = vld [vmem:[%s9 + $0x10] sm:$0xf]
    %v2553 = vld [vmem:[%s9 + $0x14] sm:$0xf]
    %v2554 = vld [vmem:[%s9 + $0x18] sm:$0xf]
    %v2555 = vld [vmem:[%s9 + $0x1c] sm:$0xf]
    %v2556 = vld [vmem:[%s9 + $0x20] sm:$0xf]
    %v2557 = vld [vmem:[%s9 + $0x24] sm:$0xf]
    %v2558 = vld [vmem:[%s9 + $0x28] sm:$0xf]
    %v2559 = vld [vmem:[%s9 + $0x2c] sm:$0xf]
    %v2560 = vld [vmem:[%s9 + $0x30] sm:$0xf]
    %v2561 = vld [vmem:[%s9 + $0x34] sm:$0xf]
    %v2562 = vld [vmem:[%s9 + $0x38] sm:$0xf]
    %v2563 = vld [vmem:[%s9 + $0x3c] sm:$0xf]
    %v2580 = vunpack.c.l.b16 %v2548
    %v2581 = vunpack.c.l.b16 %v2549
    %v2582 = vunpack.c.l.b16 %v2550
    %v2583 = vunpack.c.l.b16 %v2551
    %v2584 = vunpack.c.l.b16 %v2552
    %v2585 = vunpack.c.l.b16 %v2553
    %v2586 = vunpack.c.l.b16 %v2554
    %v2587 = vunpack.c.l.b16 %v2555
    %v2588 = vunpack.c.l.b16 %v2556
    %v2589 = vunpack.c.l.b16 %v2557
    %v2590 = vunpack.c.l.b16 %v2558
    %v2591 = vunpack.c.l.b16 %v2559
    %v2592 = vunpack.c.l.b16 %v2560
    %v2593 = vunpack.c.l.b16 %v2561
    %v2594 = vunpack.c.l.b16 %v2562
    %v2595 = vunpack.c.l.b16 %v2563
    %v2596 = vpack.c.b16 %v2581, %v2580
    %v2597 = vpack.c.b16 %v2583, %v2582
    %v2598 = vpack.c.b16 %v2585, %v2584
    %v2599 = vpack.c.b16 %v2587, %v2586
    %v2600 = vpack.c.b16 %v2589, %v2588
    %v2601 = vpack.c.b16 %v2591, %v2590
    %v2602 = vpack.c.b16 %v2593, %v2592
    %v2603 = vpack.c.b16 %v2595, %v2594
    %2612 = vmatprep.subr.bf16.mxu0 0
    %2613 = vmatpush1.bf16.msra.mxu0 %v2596
    %2614 = vmatprep.subr.bf16.mxu0 0
    %2615 = vmatpush1.bf16.msra.mxu0 %v2597
    %2616 = vmatprep.subr.bf16.mxu0 0
    %2617 = vmatpush1.bf16.msra.mxu0 %v2598
    %2618 = vmatprep.subr.bf16.mxu0 0
    %2619 = vmatpush1.bf16.msra.mxu0 %v2599
    %2620 = vmatprep.subr.bf16.mxu0 0
    %2621 = vmatpush1.bf16.msra.mxu0 %v2600
    %2622 = vmatprep.subr.bf16.mxu0 0
    %2623 = vmatpush1.bf16.msra.mxu0 %v2601
    %2624 = vmatprep.subr.bf16.mxu0 0
    %2625 = vmatpush1.bf16.msra.mxu0 %v2602
    %2626 = vmatprep.subr.bf16.mxu0 0
    %2627 = vmatpush1.bf16.msra.mxu0 %v2603
    %2628 = vmatprep.subr.bf16.mxu0 0
    %2629 = vmatpush1.bf16.msra.mxu0 0
    %2630 = vmatprep.subr.bf16.mxu0 0
    %2631 = vmatpush1.bf16.msra.mxu0 0
    %2632 = vmatprep.subr.bf16.mxu0 0
    %2633 = vmatpush1.bf16.msra.mxu0 0
    %2634 = vmatprep.subr.bf16.mxu0 0
    %2635 = vmatpush1.bf16.msra.mxu0 0
    %2636 = vmatprep.subr.bf16.mxu0 0
    %2637 = vmatpush1.bf16.msra.mxu0 0
    %2638 = vmatprep.subr.bf16.mxu0 0
    %2639 = vmatpush1.bf16.msra.mxu0 0
    %2640 = vmatprep.subr.bf16.mxu0 0
    %2641 = vmatpush1.bf16.msra.mxu0 0
    %2642 = vmatprep.subr.bf16.mxu0 0
    %2643 = vmatpush1.bf16.msra.mxu0 0
    %2644 = vmatprep.mubr.bf16.mxu0 0
    %2645 = vmatmul.mubr.bf16.gmra.mrb[0].mxu0 %v2532
    %v2646 = vpop.f32.mrb[0].mxu0
    %v2647 = vadd.f32 0.0, %v2646
    %v2648 = vpop.f32.mrb[0].mxu0
    %v2649 = vpop.f32.mrb[0].mxu0
    %v2650 = vadd.f32 0.0, %v2649
    %v2651 = vpop.f32.mrb[0].mxu0
    %2652 = vmatprep.mubr.bf16.mxu0 0
    %2653 = vmatmul.mubr.bf16.gmra.mrb[0].mxu0 %v2533
    %v2654 = vpop.f32.mrb[0].mxu0
    %v2655 = vadd.f32 0.0, %v2654
    %v2656 = vpop.f32.mrb[0].mxu0
    %v2657 = vpop.f32.mrb[0].mxu0
    %v2658 = vadd.f32 0.0, %v2657
    %v2659 = vpop.f32.mrb[0].mxu0
    %2660 = vmatprep.mubr.bf16.mxu0 0
    %2661 = vmatmul.mubr.bf16.gmra.mrb[0].mxu0 %v2534
    %v2662 = vpop.f32.mrb[0].mxu0
    %v2663 = vadd.f32 0.0, %v2662
    %v2664 = vpop.f32.mrb[0].mxu0
    %v2665 = vpop.f32.mrb[0].mxu0
    %v2666 = vadd.f32 0.0, %v2665
    %v2667 = vpop.f32.mrb[0].mxu0
    %2668 = vmatprep.mubr.bf16.mxu0 0
    %2669 = vmatmul.mubr.bf16.gmra.mrb[0].mxu0 %v2535
    %v2670 = vpop.f32.mrb[0].mxu0
    %v2671 = vadd.f32 0.0, %v2670
    %v2672 = vpop.f32.mrb[0].mxu0
    %v2673 = vpop.f32.mrb[0].mxu0
    %v2674 = vadd.f32 0.0, %v2673
    %v2675 = vpop.f32.mrb[0].mxu0
    %2676 = vmatprep.mubr.bf16.mxu0 0
    %2677 = vmatmul.mubr.bf16.gmra.mrb[0].mxu0 %v2536
    %v2678 = vpop.f32.mrb[0].mxu0
    %v2679 = vadd.f32 0.0, %v2678
    %v2680 = vpop.f32.mrb[0].mxu0
    %v2681 = vpop.f32.mrb[0].mxu0
    %v2682 = vadd.f32 0.0, %v2681
    %v2683 = vpop.f32.mrb[0].mxu0
    %2684 = vmatprep.mubr.bf16.mxu0 0
    %2685 = vmatmul.mubr.bf16.gmra.mrb[0].mxu0 %v2537
    %v2686 = vpop.f32.mrb[0].mxu0
    %v2687 = vadd.f32 0.0, %v2686
    %v2688 = vpop.f32.mrb[0].mxu0
    %v2689 = vpop.f32.mrb[0].mxu0
    %v2690 = vadd.f32 0.0, %v2689
    %v2691 = vpop.f32.mrb[0].mxu0
    %2692 = vmatprep.mubr.bf16.mxu0 0
    %2693 = vmatmul.mubr.bf16.gmra.mrb[0].mxu0 %v2538
    %v2694 = vpop.f32.mrb[0].mxu0
    %v2695 = vadd.f32 0.0, %v2694
    %v2696 = vpop.f32.mrb[0].mxu0
    %v2697 = vpop.f32.mrb[0].mxu0
    %v2698 = vadd.f32 0.0, %v2697
    %v2699 = vpop.f32.mrb[0].mxu0
    %2700 = vmatprep.mubr.bf16.mxu0 0
    %2701 = vmatmul.mubr.bf16.gmra.mrb[0].mxu0 %v2539
    %v2702 = vpop.f32.mrb[0].mxu0
    %v2703 = vadd.f32 0.0, %v2702
    %v2704 = vpop.f32.mrb[0].mxu0
    %v2705 = vpop.f32.mrb[0].mxu0
    %v2706 = vadd.f32 0.0, %v2705
    %v2707 = vpop.f32.mrb[0].mxu0
    %2708 = vmatprep.mubr.bf16.mxu0 0
    %2709 = vmatmul.mubr.bf16.gmra.mrb[0].mxu0 %v2540
    %v2710 = vpop.f32.mrb[0].mxu0
    %v2711 = vadd.f32 0.0, %v2710
    %v2712 = vpop.f32.mrb[0].mxu0
    %v2713 = vpop.f32.mrb[0].mxu0
    %v2714 = vadd.f32 0.0, %v2713
    %v2715 = vpop.f32.mrb[0].mxu0
    %2716 = vmatprep.mubr.bf16.mxu0 0
    %2717 = vmatmul.mubr.bf16.gmra.mrb[0].mxu0 %v2541
    %v2718 = vpop.f32.mrb[0].mxu0
    %v2719 = vadd.f32 0.0, %v2718
    %v2720 = vpop.f32.mrb[0].mxu0
    %v2721 = vpop.f32.mrb[0].mxu0
    %v2722 = vadd.f32 0.0, %v2721
    %v2723 = vpop.f32.mrb[0].mxu0
    %2724 = vmatprep.mubr.bf16.mxu0 0
    %2725 = vmatmul.mubr.bf16.gmra.mrb[0].mxu0 %v2542
    %v2726 = vpop.f32.mrb[0].mxu0
    %v2727 = vadd.f32 0.0, %v2726
    %v2728 = vpop.f32.mrb[0].mxu0
    %v2729 = vpop.f32.mrb[0].mxu0
    %v2730 = vadd.f32 0.0, %v2729
    %v2731 = vpop.f32.mrb[0].mxu0
    %2732 = vmatprep.mubr.bf16.mxu0 0
    %2733 = vmatmul.mubr.bf16.gmra.mrb[0].mxu0 %v2543
    %v2734 = vpop.f32.mrb[0].mxu0
    %v2735 = vadd.f32 0.0, %v2734
    %v2736 = vpop.f32.mrb[0].mxu0
    %v2737 = vpop.f32.mrb[0].mxu0
    %v2738 = vadd.f32 0.0, %v2737
    %v2739 = vpop.f32.mrb[0].mxu0
    %2740 = vmatprep.mubr.bf16.mxu0 0
    %2741 = vmatmul.mubr.bf16.gmra.mrb[0].mxu0 %v2544
    %v2742 = vpop.f32.mrb[0].mxu0
    %v2743 = vadd.f32 0.0, %v2742
    %v2744 = vpop.f32.mrb[0].mxu0
    %v2745 = vpop.f32.mrb[0].mxu0
    %v2746 = vadd.f32 0.0, %v2745
    %v2747 = vpop.f32.mrb[0].mxu0
    %2748 = vmatprep.mubr.bf16.mxu0 0
    %2749 = vmatmul.mubr.bf16.gmra.mrb[0].mxu0 %v2545
    %v2750 = vpop.f32.mrb[0].mxu0
    %v2751 = vadd.f32 0.0, %v2750
    %v2752 = vpop.f32.mrb[0].mxu0
    %v2753 = vpop.f32.mrb[0].mxu0
    %v2754 = vadd.f32 0.0, %v2753
    %v2755 = vpop.f32.mrb[0].mxu0
    %2756 = vmatprep.mubr.bf16.mxu0 0
    %2757 = vmatmul.mubr.bf16.gmra.mrb[0].mxu0 %v2546
    %v2758 = vpop.f32.mrb[0].mxu0
    %v2759 = vadd.f32 0.0, %v2758
    %v2760 = vpop.f32.mrb[0].mxu0
    %v2761 = vpop.f32.mrb[0].mxu0
    %v2762 = vadd.f32 0.0, %v2761
    %v2763 = vpop.f32.mrb[0].mxu0
    %2764 = vmatprep.mubr.bf16.mxu0 0
    %2765 = vmatmul.mubr.bf16.gmra.mrb[0].mxu0 %v2547
    %v2766 = vpop.f32.mrb[0].mxu0
    %v2767 = vadd.f32 0.0, %v2766
    %v2768 = vpop.f32.mrb[0].mxu0
    %v2769 = vpop.f32.mrb[0].mxu0
    %v2770 = vadd.f32 0.0, %v2769
    %v2771 = vpop.f32.mrb[0].mxu0
    %2772 = vdwg.mxu0
    %v2773 = vpack.c.bf16 %v2650, %v2647
    %v2774 = vpack.c.bf16 %v2658, %v2655
    %v2775 = vpack.c.bf16 %v2666, %v2663
    %v2776 = vpack.c.bf16 %v2674, %v2671
    %v2777 = vpack.c.bf16 %v2682, %v2679
    %v2778 = vpack.c.bf16 %v2690, %v2687
    %v2779 = vpack.c.bf16 %v2698, %v2695
    %v2780 = vpack.c.bf16 %v2706, %v2703
    %v2781 = vpack.c.bf16 %v2714, %v2711
    %v2782 = vpack.c.bf16 %v2722, %v2719
    %v2783 = vpack.c.bf16 %v2730, %v2727
    %v2784 = vpack.c.bf16 %v2738, %v2735
    %v2785 = vpack.c.bf16 %v2746, %v2743
    %v2786 = vpack.c.bf16 %v2754, %v2751
    %v2787 = vpack.c.bf16 %v2762, %v2759
    %v2788 = vpack.c.bf16 %v2770, %v2767
    %v2789 = vld [vmem:[%s10] sm:$0x1]
    %v2791 = vpack.i.b16 %v2789, %v2789
    %v2793 = vlaneseq
    %v2794 = vshrl.u32 %v2793, 7
    %v2795 = vsub.s32 0, %v2794
    %v2796 = vrot.slane %v2791, %v2795
    %v2797 = vadd.bf16 %v2773, %v2796
    %v2798 = vadd.bf16 %v2774, %v2796
    %v2799 = vadd.bf16 %v2775, %v2796
    %v2800 = vadd.bf16 %v2776, %v2796
    %v2801 = vadd.bf16 %v2777, %v2796
    %v2802 = vadd.bf16 %v2778, %v2796
    %v2803 = vadd.bf16 %v2779, %v2796
    %v2804 = vadd.bf16 %v2780, %v2796
    %v2805 = vadd.bf16 %v2781, %v2796
    %v2806 = vadd.bf16 %v2782, %v2796
    %v2807 = vadd.bf16 %v2783, %v2796
    %v2808 = vadd.bf16 %v2784, %v2796
    %v2809 = vadd.bf16 %v2785, %v2796
    %v2810 = vadd.bf16 %v2786, %v2796
    %v2811 = vadd.bf16 %v2787, %v2796
    %v2812 = vadd.bf16 %v2788, %v2796
    %v2813 = vmax.bf16 %v2797, 0
    %v2814 = vmax.bf16 %v2798, 0
    %v2815 = vmax.bf16 %v2799, 0
    %v2816 = vmax.bf16 %v2800, 0
    %v2817 = vmax.bf16 %v2801, 0
    %v2818 = vmax.bf16 %v2802, 0
    %v2819 = vmax.bf16 %v2803, 0
    %v2820 = vmax.bf16 %v2804, 0
    %v2821 = vmax.bf16 %v2805, 0
    %v2822 = vmax.bf16 %v2806, 0
    %v2823 = vmax.bf16 %v2807, 0
    %v2824 = vmax.bf16 %v2808, 0
    %v2825 = vmax.bf16 %v2809, 0
    %v2826 = vmax.bf16 %v2810, 0
    %v2827 = vmax.bf16 %v2811, 0
    %v2828 = vmax.bf16 %v2812, 0
    %v2829 = vld [vmem:[#allocation6] sm:$0xf]
    %v2830 = vld [vmem:[#allocation6 + $0x4] sm:$0xf]
    %v2831 = vld [vmem:[#allocation6 + $0x8] sm:$0xf]
    %v2832 = vld [vmem:[#allocation6 + $0xc] sm:$0xf]
    %v2833 = vld [vmem:[#allocation6 + $0x10] sm:$0xf]
    %v2834 = vld [vmem:[#allocation6 + $0x14] sm:$0xf]
    %v2835 = vld [vmem:[#allocation6 + $0x18] sm:$0xf]
    %v2836 = vld [vmem:[#allocation6 + $0x1c] sm:$0xf]
    %v2837 = vld [vmem:[#allocation6 + $0x20] sm:$0xf]
    %v2838 = vld [vmem:[#allocation6 + $0x24] sm:$0xf]
    %v2839 = vld [vmem:[#allocation6 + $0x28] sm:$0xf]
    %v2840 = vld [vmem:[#allocation6 + $0x2c] sm:$0xf]
    %v2841 = vld [vmem:[#allocation6 + $0x30] sm:$0xf]
    %v2842 = vld [vmem:[#allocation6 + $0x34] sm:$0xf]
    %v2843 = vld [vmem:[#allocation6 + $0x38] sm:$0xf]
    %v2844 = vld [vmem:[#allocation6 + $0x3c] sm:$0xf]
    %v2861 = vunpack.c.l.b16 %v2829
    %v2862 = vunpack.c.l.b16 %v2830
    %v2863 = vunpack.c.l.b16 %v2831
    %v2864 = vunpack.c.l.b16 %v2832
    %v2865 = vunpack.c.l.b16 %v2833
    %v2866 = vunpack.c.l.b16 %v2834
    %v2867 = vunpack.c.l.b16 %v2835
    %v2868 = vunpack.c.l.b16 %v2836
    %v2869 = vunpack.c.l.b16 %v2837
    %v2870 = vunpack.c.l.b16 %v2838
    %v2871 = vunpack.c.l.b16 %v2839
    %v2872 = vunpack.c.l.b16 %v2840
    %v2873 = vunpack.c.l.b16 %v2841
    %v2874 = vunpack.c.l.b16 %v2842
    %v2875 = vunpack.c.l.b16 %v2843
    %v2876 = vunpack.c.l.b16 %v2844
    %v2877 = vpack.c.b16 %v2862, %v2861
    %v2878 = vpack.c.b16 %v2864, %v2863
    %v2879 = vpack.c.b16 %v2866, %v2865
    %v2880 = vpack.c.b16 %v2868, %v2867
    %v2881 = vpack.c.b16 %v2870, %v2869
    %v2882 = vpack.c.b16 %v2872, %v2871
    %v2883 = vpack.c.b16 %v2874, %v2873
    %v2884 = vpack.c.b16 %v2876, %v2875
    %2893 = vmatprep.subr.bf16.mxu0 0
    %2894 = vmatpush1.bf16.msra.mxu0 %v2877
    %2895 = vmatprep.subr.bf16.mxu0 0
    %2896 = vmatpush1.bf16.msra.mxu0 %v2878
    %2897 = vmatprep.subr.bf16.mxu0 0
    %2898 = vmatpush1.bf16.msra.mxu0 %v2879
    %2899 = vmatprep.subr.bf16.mxu0 0
    %2900 = vmatpush1.bf16.msra.mxu0 %v2880
    %2901 = vmatprep.subr.bf16.mxu0 0
    %2902 = vmatpush1.bf16.msra.mxu0 %v2881
    %2903 = vmatprep.subr.bf16.mxu0 0
    %2904 = vmatpush1.bf16.msra.mxu0 %v2882
    %2905 = vmatprep.subr.bf16.mxu0 0
    %2906 = vmatpush1.bf16.msra.mxu0 %v2883
    %2907 = vmatprep.subr.bf16.mxu0 0
    %2908 = vmatpush1.bf16.msra.mxu0 %v2884
    %2909 = vmatprep.subr.bf16.mxu0 0
    %2910 = vmatpush1.bf16.msra.mxu0 0
    %2911 = vmatprep.subr.bf16.mxu0 0
    %2912 = vmatpush1.bf16.msra.mxu0 0
    %2913 = vmatprep.subr.bf16.mxu0 0
    %2914 = vmatpush1.bf16.msra.mxu0 0
    %2915 = vmatprep.subr.bf16.mxu0 0
    %2916 = vmatpush1.bf16.msra.mxu0 0
    %2917 = vmatprep.subr.bf16.mxu0 0
    %2918 = vmatpush1.bf16.msra.mxu0 0
    %2919 = vmatprep.subr.bf16.mxu0 0
    %2920 = vmatpush1.bf16.msra.mxu0 0
    %2921 = vmatprep.subr.bf16.mxu0 0
    %2922 = vmatpush1.bf16.msra.mxu0 0
    %2923 = vmatprep.subr.bf16.mxu0 0
    %2924 = vmatpush1.bf16.msra.mxu0 0
    %2925 = vmatprep.mubr.bf16.mxu0 0
    %2926 = vmatmul.mubr.bf16.gmra.mrb[0].mxu0 %v2813
    %v2927 = vpop.f32.mrb[0].mxu0
    %v2928 = vadd.f32 0.0, %v2927
    %v2929 = vpop.f32.mrb[0].mxu0
    %v2930 = vpop.f32.mrb[0].mxu0
    %v2931 = vadd.f32 0.0, %v2930
    %v2932 = vpop.f32.mrb[0].mxu0
    %2933 = vmatprep.mubr.bf16.mxu0 0
    %2934 = vmatmul.mubr.bf16.gmra.mrb[0].mxu0 %v2814
    %v2935 = vpop.f32.mrb[0].mxu0
    %v2936 = vadd.f32 0.0, %v2935
    %v2937 = vpop.f32.mrb[0].mxu0
    %v2938 = vpop.f32.mrb[0].mxu0
    %v2939 = vadd.f32 0.0, %v2938
    %v2940 = vpop.f32.mrb[0].mxu0
    %2941 = vmatprep.mubr.bf16.mxu0 0
    %2942 = vmatmul.mubr.bf16.gmra.mrb[0].mxu0 %v2815
    %v2943 = vpop.f32.mrb[0].mxu0
    %v2944 = vadd.f32 0.0, %v2943
    %v2945 = vpop.f32.mrb[0].mxu0
    %v2946 = vpop.f32.mrb[0].mxu0
    %v2947 = vadd.f32 0.0, %v2946
    %v2948 = vpop.f32.mrb[0].mxu0
    %2949 = vmatprep.mubr.bf16.mxu0 0
    %2950 = vmatmul.mubr.bf16.gmra.mrb[0].mxu0 %v2816
    %v2951 = vpop.f32.mrb[0].mxu0
    %v2952 = vadd.f32 0.0, %v2951
    %v2953 = vpop.f32.mrb[0].mxu0
    %v2954 = vpop.f32.mrb[0].mxu0
    %v2955 = vadd.f32 0.0, %v2954
    %v2956 = vpop.f32.mrb[0].mxu0
    %2957 = vmatprep.mubr.bf16.mxu0 0
    %2958 = vmatmul.mubr.bf16.gmra.mrb[0].mxu0 %v2817
    %v2959 = vpop.f32.mrb[0].mxu0
    %v2960 = vadd.f32 0.0, %v2959
    %v2961 = vpop.f32.mrb[0].mxu0
    %v2962 = vpop.f32.mrb[0].mxu0
    %v2963 = vadd.f32 0.0, %v2962
    %v2964 = vpop.f32.mrb[0].mxu0
    %2965 = vmatprep.mubr.bf16.mxu0 0
    %2966 = vmatmul.mubr.bf16.gmra.mrb[0].mxu0 %v2818
    %v2967 = vpop.f32.mrb[0].mxu0
    %v2968 = vadd.f32 0.0, %v2967
    %v2969 = vpop.f32.mrb[0].mxu0
    %v2970 = vpop.f32.mrb[0].mxu0
    %v2971 = vadd.f32 0.0, %v2970
    %v2972 = vpop.f32.mrb[0].mxu0
    %2973 = vmatprep.mubr.bf16.mxu0 0
    %2974 = vmatmul.mubr.bf16.gmra.mrb[0].mxu0 %v2819
    %v2975 = vpop.f32.mrb[0].mxu0
    %v2976 = vadd.f32 0.0, %v2975
    %v2977 = vpop.f32.mrb[0].mxu0
    %v2978 = vpop.f32.mrb[0].mxu0
    %v2979 = vadd.f32 0.0, %v2978
    %v2980 = vpop.f32.mrb[0].mxu0
    %2981 = vmatprep.mubr.bf16.mxu0 0
    %2982 = vmatmul.mubr.bf16.gmra.mrb[0].mxu0 %v2820
    %v2983 = vpop.f32.mrb[0].mxu0
    %v2984 = vadd.f32 0.0, %v2983
    %v2985 = vpop.f32.mrb[0].mxu0
    %v2986 = vpop.f32.mrb[0].mxu0
    %v2987 = vadd.f32 0.0, %v2986
    %v2988 = vpop.f32.mrb[0].mxu0
    %2989 = vmatprep.mubr.bf16.mxu0 0
    %2990 = vmatmul.mubr.bf16.gmra.mrb[0].mxu0 %v2821
    %v2991 = vpop.f32.mrb[0].mxu0
    %v2992 = vadd.f32 0.0, %v2991
    %v2993 = vpop.f32.mrb[0].mxu0
    %v2994 = vpop.f32.mrb[0].mxu0
    %v2995 = vadd.f32 0.0, %v2994
    %v2996 = vpop.f32.mrb[0].mxu0
    %2997 = vmatprep.mubr.bf16.mxu0 0
    %2998 = vmatmul.mubr.bf16.gmra.mrb[0].mxu0 %v2822
    %v2999 = vpop.f32.mrb[0].mxu0
    %v3000 = vadd.f32 0.0, %v2999
    %v3001 = vpop.f32.mrb[0].mxu0
    %v3002 = vpop.f32.mrb[0].mxu0
    %v3003 = vadd.f32 0.0, %v3002
    %v3004 = vpop.f32.mrb[0].mxu0
    %3005 = vmatprep.mubr.bf16.mxu0 0
    %3006 = vmatmul.mubr.bf16.gmra.mrb[0].mxu0 %v2823
    %v3007 = vpop.f32.mrb[0].mxu0
    %v3008 = vadd.f32 0.0, %v3007
    %v3009 = vpop.f32.mrb[0].mxu0
    %v3010 = vpop.f32.mrb[0].mxu0
    %v3011 = vadd.f32 0.0, %v3010
    %v3012 = vpop.f32.mrb[0].mxu0
    %3013 = vmatprep.mubr.bf16.mxu0 0
    %3014 = vmatmul.mubr.bf16.gmra.mrb[0].mxu0 %v2824
    %v3015 = vpop.f32.mrb[0].mxu0
    %v3016 = vadd.f32 0.0, %v3015
    %v3017 = vpop.f32.mrb[0].mxu0
    %v3018 = vpop.f32.mrb[0].mxu0
    %v3019 = vadd.f32 0.0, %v3018
    %v3020 = vpop.f32.mrb[0].mxu0
    %3021 = vmatprep.mubr.bf16.mxu0 0
    %3022 = vmatmul.mubr.bf16.gmra.mrb[0].mxu0 %v2825
    %v3023 = vpop.f32.mrb[0].mxu0
    %v3024 = vadd.f32 0.0, %v3023
    %v3025 = vpop.f32.mrb[0].mxu0
    %v3026 = vpop.f32.mrb[0].mxu0
    %v3027 = vadd.f32 0.0, %v3026
    %v3028 = vpop.f32.mrb[0].mxu0
    %3029 = vmatprep.mubr.bf16.mxu0 0
    %3030 = vmatmul.mubr.bf16.gmra.mrb[0].mxu0 %v2826
    %v3031 = vpop.f32.mrb[0].mxu0
    %v3032 = vadd.f32 0.0, %v3031
    %v3033 = vpop.f32.mrb[0].mxu0
    %v3034 = vpop.f32.mrb[0].mxu0
    %v3035 = vadd.f32 0.0, %v3034
    %v3036 = vpop.f32.mrb[0].mxu0
    %3037 = vmatprep.mubr.bf16.mxu0 0
    %3038 = vmatmul.mubr.bf16.gmra.mrb[0].mxu0 %v2827
    %v3039 = vpop.f32.mrb[0].mxu0
    %v3040 = vadd.f32 0.0, %v3039
    %v3041 = vpop.f32.mrb[0].mxu0
    %v3042 = vpop.f32.mrb[0].mxu0
    %v3043 = vadd.f32 0.0, %v3042
    %v3044 = vpop.f32.mrb[0].mxu0
    %3045 = vmatprep.mubr.bf16.mxu0 0
    %3046 = vmatmul.mubr.bf16.gmra.mrb[0].mxu0 %v2828
    %v3047 = vpop.f32.mrb[0].mxu0
    %v3048 = vadd.f32 0.0, %v3047
    %v3049 = vpop.f32.mrb[0].mxu0
    %v3050 = vpop.f32.mrb[0].mxu0
    %v3051 = vadd.f32 0.0, %v3050
    %v3052 = vpop.f32.mrb[0].mxu0
    %3053 = vdwg.mxu0
    %v3054 = vpack.c.bf16 %v2931, %v2928
    %v3055 = vpack.c.bf16 %v2939, %v2936
    %v3056 = vpack.c.bf16 %v2947, %v2944
    %v3057 = vpack.c.bf16 %v2955, %v2952
    %v3058 = vpack.c.bf16 %v2963, %v2960
    %v3059 = vpack.c.bf16 %v2971, %v2968
    %v3060 = vpack.c.bf16 %v2979, %v2976
    %v3061 = vpack.c.bf16 %v2987, %v2984
    %v3062 = vpack.c.bf16 %v2995, %v2992
    %v3063 = vpack.c.bf16 %v3003, %v3000
    %v3064 = vpack.c.bf16 %v3011, %v3008
    %v3065 = vpack.c.bf16 %v3019, %v3016
    %v3066 = vpack.c.bf16 %v3027, %v3024
    %v3067 = vpack.c.bf16 %v3035, %v3032
    %v3068 = vpack.c.bf16 %v3043, %v3040
    %v3069 = vpack.c.bf16 %v3051, %v3048
    %v3070 = vld [vmem:[%s12] sm:$0x1]
    %v3072 = vpack.i.b16 %v3070, %v3070
    %v3074 = vlaneseq
    %v3075 = vshrl.u32 %v3074, 7
    %v3076 = vsub.s32 0, %v3075
    %v3077 = vrot.slane %v3072, %v3076
    %v3078 = vadd.bf16 %v3054, %v3077
    %v3079 = vadd.bf16 %v3055, %v3077
    %v3080 = vadd.bf16 %v3056, %v3077
    %v3081 = vadd.bf16 %v3057, %v3077
    %v3082 = vadd.bf16 %v3058, %v3077
    %v3083 = vadd.bf16 %v3059, %v3077
    %v3084 = vadd.bf16 %v3060, %v3077
    %v3085 = vadd.bf16 %v3061, %v3077
    %v3086 = vadd.bf16 %v3062, %v3077
    %v3087 = vadd.bf16 %v3063, %v3077
    %v3088 = vadd.bf16 %v3064, %v3077
    %v3089 = vadd.bf16 %v3065, %v3077
    %v3090 = vadd.bf16 %v3066, %v3077
    %v3091 = vadd.bf16 %v3067, %v3077
    %v3092 = vadd.bf16 %v3068, %v3077
    %v3093 = vadd.bf16 %v3069, %v3077
    %v3094 = vmax.bf16 %v3078, 0
    %v3095 = vmax.bf16 %v3079, 0
    %v3096 = vmax.bf16 %v3080, 0
    %v3097 = vmax.bf16 %v3081, 0
    %v3098 = vmax.bf16 %v3082, 0
    %v3099 = vmax.bf16 %v3083, 0
    %v3100 = vmax.bf16 %v3084, 0
    %v3101 = vmax.bf16 %v3085, 0
    %v3102 = vmax.bf16 %v3086, 0
    %v3103 = vmax.bf16 %v3087, 0
    %v3104 = vmax.bf16 %v3088, 0
    %v3105 = vmax.bf16 %v3089, 0
    %v3106 = vmax.bf16 %v3090, 0
    %v3107 = vmax.bf16 %v3091, 0
    %v3108 = vmax.bf16 %v3092, 0
    %v3109 = vmax.bf16 %v3093, 0
    %v3110 = vld [vmem:[%s13] sm:$0xf]
    %v3111 = vld [vmem:[%s13 + $0x4] sm:$0xf]
    %v3112 = vld [vmem:[%s13 + $0x8] sm:$0xf]
    %v3113 = vld [vmem:[%s13 + $0xc] sm:$0xf]
    %v3114 = vld [vmem:[%s13 + $0x10] sm:$0xf]
    %v3115 = vld [vmem:[%s13 + $0x14] sm:$0xf]
    %v3116 = vld [vmem:[%s13 + $0x18] sm:$0xf]
    %v3117 = vld [vmem:[%s13 + $0x1c] sm:$0xf]
    %v3118 = vld [vmem:[%s13 + $0x20] sm:$0xf]
    %v3119 = vld [vmem:[%s13 + $0x24] sm:$0xf]
    %v3120 = vld [vmem:[%s13 + $0x28] sm:$0xf]
    %v3121 = vld [vmem:[%s13 + $0x2c] sm:$0xf]
    %v3122 = vld [vmem:[%s13 + $0x30] sm:$0xf]
    %v3123 = vld [vmem:[%s13 + $0x34] sm:$0xf]
    %v3124 = vld [vmem:[%s13 + $0x38] sm:$0xf]
    %v3125 = vld [vmem:[%s13 + $0x3c] sm:$0xf]
    %v3142 = vunpack.c.l.b16 %v3110
    %v3143 = vunpack.c.l.b16 %v3111
    %v3144 = vunpack.c.l.b16 %v3112
    %v3145 = vunpack.c.l.b16 %v3113
    %v3146 = vunpack.c.l.b16 %v3114
    %v3147 = vunpack.c.l.b16 %v3115
    %v3148 = vunpack.c.l.b16 %v3116
    %v3149 = vunpack.c.l.b16 %v3117
    %v3150 = vunpack.c.l.b16 %v3118
    %v3151 = vunpack.c.l.b16 %v3119
    %v3152 = vunpack.c.l.b16 %v3120
    %v3153 = vunpack.c.l.b16 %v3121
    %v3154 = vunpack.c.l.b16 %v3122
    %v3155 = vunpack.c.l.b16 %v3123
    %v3156 = vunpack.c.l.b16 %v3124
    %v3157 = vunpack.c.l.b16 %v3125
    %v3158 = vpack.c.b16 %v3143, %v3142
    %v3159 = vpack.c.b16 %v3145, %v3144
    %v3160 = vpack.c.b16 %v3147, %v3146
    %v3161 = vpack.c.b16 %v3149, %v3148
    %v3162 = vpack.c.b16 %v3151, %v3150
    %v3163 = vpack.c.b16 %v3153, %v3152
    %v3164 = vpack.c.b16 %v3155, %v3154
    %v3165 = vpack.c.b16 %v3157, %v3156
    %3174 = vmatprep.subr.bf16.mxu0 0
    %3175 = vmatpush1.bf16.msra.mxu0 %v3158
    %3176 = vmatprep.subr.bf16.mxu0 0
    %3177 = vmatpush1.bf16.msra.mxu0 %v3159
    %3178 = vmatprep.subr.bf16.mxu0 0
    %3179 = vmatpush1.bf16.msra.mxu0 %v3160
    %3180 = vmatprep.subr.bf16.mxu0 0
    %3181 = vmatpush1.bf16.msra.mxu0 %v3161
    %3182 = vmatprep.subr.bf16.mxu0 0
    %3183 = vmatpush1.bf16.msra.mxu0 %v3162
    %3184 = vmatprep.subr.bf16.mxu0 0
    %3185 = vmatpush1.bf16.msra.mxu0 %v3163
    %3186 = vmatprep.subr.bf16.mxu0 0
    %3187 = vmatpush1.bf16.msra.mxu0 %v3164
    %3188 = vmatprep.subr.bf16.mxu0 0
    %3189 = vmatpush1.bf16.msra.mxu0 %v3165
    %3190 = vmatprep.subr.bf16.mxu0 0
    %3191 = vmatpush1.bf16.msra.mxu0 0
    %3192 = vmatprep.subr.bf16.mxu0 0
    %3193 = vmatpush1.bf16.msra.mxu0 0
    %3194 = vmatprep.subr.bf16.mxu0 0
    %3195 = vmatpush1.bf16.msra.mxu0 0
    %3196 = vmatprep.subr.bf16.mxu0 0
    %3197 = vmatpush1.bf16.msra.mxu0 0
    %3198 = vmatprep.subr.bf16.mxu0 0
    %3199 = vmatpush1.bf16.msra.mxu0 0
    %3200 = vmatprep.subr.bf16.mxu0 0
    %3201 = vmatpush1.bf16.msra.mxu0 0
    %3202 = vmatprep.subr.bf16.mxu0 0
    %3203 = vmatpush1.bf16.msra.mxu0 0
    %3204 = vmatprep.subr.bf16.mxu0 0
    %3205 = vmatpush1.bf16.msra.mxu0 0
    %3206 = vmatprep.mubr.bf16.mxu0 0
    %3207 = vmatmul.mubr.bf16.gmra.mrb[0].mxu0 %v3094
    %v3208 = vpop.f32.mrb[0].mxu0
    %v3209 = vadd.f32 0.0, %v3208
    %v3210 = vpop.f32.mrb[0].mxu0
    %v3211 = vpop.f32.mrb[0].mxu0
    %v3212 = vadd.f32 0.0, %v3211
    %v3213 = vpop.f32.mrb[0].mxu0
    %3214 = vmatprep.mubr.bf16.mxu0 0
    %3215 = vmatmul.mubr.bf16.gmra.mrb[0].mxu0 %v3095
    %v3216 = vpop.f32.mrb[0].mxu0
    %v3217 = vadd.f32 0.0, %v3216
    %v3218 = vpop.f32.mrb[0].mxu0
    %v3219 = vpop.f32.mrb[0].mxu0
    %v3220 = vadd.f32 0.0, %v3219
    %v3221 = vpop.f32.mrb[0].mxu0
    %3222 = vmatprep.mubr.bf16.mxu0 0
    %3223 = vmatmul.mubr.bf16.gmra.mrb[0].mxu0 %v3096
    %v3224 = vpop.f32.mrb[0].mxu0
    %v3225 = vadd.f32 0.0, %v3224
    %v3226 = vpop.f32.mrb[0].mxu0
    %v3227 = vpop.f32.mrb[0].mxu0
    %v3228 = vadd.f32 0.0, %v3227
    %v3229 = vpop.f32.mrb[0].mxu0
    %3230 = vmatprep.mubr.bf16.mxu0 0
    %3231 = vmatmul.mubr.bf16.gmra.mrb[0].mxu0 %v3097
    %v3232 = vpop.f32.mrb[0].mxu0
    %v3233 = vadd.f32 0.0, %v3232
    %v3234 = vpop.f32.mrb[0].mxu0
    %v3235 = vpop.f32.mrb[0].mxu0
    %v3236 = vadd.f32 0.0, %v3235
    %v3237 = vpop.f32.mrb[0].mxu0
    %3238 = vmatprep.mubr.bf16.mxu0 0
    %3239 = vmatmul.mubr.bf16.gmra.mrb[0].mxu0 %v3098
    %v3240 = vpop.f32.mrb[0].mxu0
    %v3241 = vadd.f32 0.0, %v3240
    %v3242 = vpop.f32.mrb[0].mxu0
    %v3243 = vpop.f32.mrb[0].mxu0
    %v3244 = vadd.f32 0.0, %v3243
    %v3245 = vpop.f32.mrb[0].mxu0
    %3246 = vmatprep.mubr.bf16.mxu0 0
    %3247 = vmatmul.mubr.bf16.gmra.mrb[0].mxu0 %v3099
    %v3248 = vpop.f32.mrb[0].mxu0
    %v3249 = vadd.f32 0.0, %v3248
    %v3250 = vpop.f32.mrb[0].mxu0
    %v3251 = vpop.f32.mrb[0].mxu0
    %v3252 = vadd.f32 0.0, %v3251
    %v3253 = vpop.f32.mrb[0].mxu0
    %3254 = vmatprep.mubr.bf16.mxu0 0
    %3255 = vmatmul.mubr.bf16.gmra.mrb[0].mxu0 %v3100
    %v3256 = vpop.f32.mrb[0].mxu0
    %v3257 = vadd.f32 0.0, %v3256
    %v3258 = vpop.f32.mrb[0].mxu0
    %v3259 = vpop.f32.mrb[0].mxu0
    %v3260 = vadd.f32 0.0, %v3259
    %v3261 = vpop.f32.mrb[0].mxu0
    %3262 = vmatprep.mubr.bf16.mxu0 0
    %3263 = vmatmul.mubr.bf16.gmra.mrb[0].mxu0 %v3101
    %v3264 = vpop.f32.mrb[0].mxu0
    %v3265 = vadd.f32 0.0, %v3264
    %v3266 = vpop.f32.mrb[0].mxu0
    %v3267 = vpop.f32.mrb[0].mxu0
    %v3268 = vadd.f32 0.0, %v3267
    %v3269 = vpop.f32.mrb[0].mxu0
    %3270 = vmatprep.mubr.bf16.mxu0 0
    %3271 = vmatmul.mubr.bf16.gmra.mrb[0].mxu0 %v3102
    %v3272 = vpop.f32.mrb[0].mxu0
    %v3273 = vadd.f32 0.0, %v3272
    %v3274 = vpop.f32.mrb[0].mxu0
    %v3275 = vpop.f32.mrb[0].mxu0
    %v3276 = vadd.f32 0.0, %v3275
    %v3277 = vpop.f32.mrb[0].mxu0
    %3278 = vmatprep.mubr.bf16.mxu0 0
    %3279 = vmatmul.mubr.bf16.gmra.mrb[0].mxu0 %v3103
    %v3280 = vpop.f32.mrb[0].mxu0
    %v3281 = vadd.f32 0.0, %v3280
    %v3282 = vpop.f32.mrb[0].mxu0
    %v3283 = vpop.f32.mrb[0].mxu0
    %v3284 = vadd.f32 0.0, %v3283
    %v3285 = vpop.f32.mrb[0].mxu0
    %3286 = vmatprep.mubr.bf16.mxu0 0
    %3287 = vmatmul.mubr.bf16.gmra.mrb[0].mxu0 %v3104
    %v3288 = vpop.f32.mrb[0].mxu0
    %v3289 = vadd.f32 0.0, %v3288
    %v3290 = vpop.f32.mrb[0].mxu0
    %v3291 = vpop.f32.mrb[0].mxu0
    %v3292 = vadd.f32 0.0, %v3291
    %v3293 = vpop.f32.mrb[0].mxu0
    %3294 = vmatprep.mubr.bf16.mxu0 0
    %3295 = vmatmul.mubr.bf16.gmra.mrb[0].mxu0 %v3105
    %v3296 = vpop.f32.mrb[0].mxu0
    %v3297 = vadd.f32 0.0, %v3296
    %v3298 = vpop.f32.mrb[0].mxu0
    %v3299 = vpop.f32.mrb[0].mxu0
    %v3300 = vadd.f32 0.0, %v3299
    %v3301 = vpop.f32.mrb[0].mxu0
    %3302 = vmatprep.mubr.bf16.mxu0 0
    %3303 = vmatmul.mubr.bf16.gmra.mrb[0].mxu0 %v3106
    %v3304 = vpop.f32.mrb[0].mxu0
    %v3305 = vadd.f32 0.0, %v3304
    %v3306 = vpop.f32.mrb[0].mxu0
    %v3307 = vpop.f32.mrb[0].mxu0
    %v3308 = vadd.f32 0.0, %v3307
    %v3309 = vpop.f32.mrb[0].mxu0
    %3310 = vmatprep.mubr.bf16.mxu0 0
    %3311 = vmatmul.mubr.bf16.gmra.mrb[0].mxu0 %v3107
    %v3312 = vpop.f32.mrb[0].mxu0
    %v3313 = vadd.f32 0.0, %v3312
    %v3314 = vpop.f32.mrb[0].mxu0
    %v3315 = vpop.f32.mrb[0].mxu0
    %v3316 = vadd.f32 0.0, %v3315
    %v3317 = vpop.f32.mrb[0].mxu0
    %3318 = vmatprep.mubr.bf16.mxu0 0
    %3319 = vmatmul.mubr.bf16.gmra.mrb[0].mxu0 %v3108
    %v3320 = vpop.f32.mrb[0].mxu0
    %v3321 = vadd.f32 0.0, %v3320
    %v3322 = vpop.f32.mrb[0].mxu0
    %v3323 = vpop.f32.mrb[0].mxu0
    %v3324 = vadd.f32 0.0, %v3323
    %v3325 = vpop.f32.mrb[0].mxu0
    %3326 = vmatprep.mubr.bf16.mxu0 0
    %3327 = vmatmul.mubr.bf16.gmra.mrb[0].mxu0 %v3109
    %v3328 = vpop.f32.mrb[0].mxu0
    %v3329 = vadd.f32 0.0, %v3328
    %v3330 = vpop.f32.mrb[0].mxu0
    %v3331 = vpop.f32.mrb[0].mxu0
    %v3332 = vadd.f32 0.0, %v3331
    %v3333 = vpop.f32.mrb[0].mxu0
    %3334 = vdwg.mxu0
    %v3335 = vpack.c.bf16 %v3212, %v3209
    %v3336 = vpack.c.bf16 %v3220, %v3217
    %v3337 = vpack.c.bf16 %v3228, %v3225
    %v3338 = vpack.c.bf16 %v3236, %v3233
    %v3339 = vpack.c.bf16 %v3244, %v3241
    %v3340 = vpack.c.bf16 %v3252, %v3249
    %v3341 = vpack.c.bf16 %v3260, %v3257
    %v3342 = vpack.c.bf16 %v3268, %v3265
    %v3343 = vpack.c.bf16 %v3276, %v3273
    %v3344 = vpack.c.bf16 %v3284, %v3281
    %v3345 = vpack.c.bf16 %v3292, %v3289
    %v3346 = vpack.c.bf16 %v3300, %v3297
    %v3347 = vpack.c.bf16 %v3308, %v3305
    %v3348 = vpack.c.bf16 %v3316, %v3313
    %v3349 = vpack.c.bf16 %v3324, %v3321
    %v3350 = vpack.c.bf16 %v3332, %v3329
    %v3351 = vld [vmem:[%s14] sm:$0x1]
    %v3353 = vpack.i.b16 %v3351, %v3351
    %v3355 = vlaneseq
    %v3356 = vshrl.u32 %v3355, 7
    %v3357 = vsub.s32 0, %v3356
    %v3358 = vrot.slane %v3353, %v3357
    %v3359 = vadd.bf16 %v3335, %v3358
    %v3360 = vadd.bf16 %v3336, %v3358
    %v3361 = vadd.bf16 %v3337, %v3358
    %v3362 = vadd.bf16 %v3338, %v3358
    %v3363 = vadd.bf16 %v3339, %v3358
    %v3364 = vadd.bf16 %v3340, %v3358
    %v3365 = vadd.bf16 %v3341, %v3358
    %v3366 = vadd.bf16 %v3342, %v3358
    %v3367 = vadd.bf16 %v3343, %v3358
    %v3368 = vadd.bf16 %v3344, %v3358
    %v3369 = vadd.bf16 %v3345, %v3358
    %v3370 = vadd.bf16 %v3346, %v3358
    %v3371 = vadd.bf16 %v3347, %v3358
    %v3372 = vadd.bf16 %v3348, %v3358
    %v3373 = vadd.bf16 %v3349, %v3358
    %v3374 = vadd.bf16 %v3350, %v3358
    %v3375 = vunpack.c.l.bf16 %v3359
    %v3376 = vunpack.c.h.bf16 %v3359
    %v3377 = vunpack.c.l.bf16 %v3360
    %v3378 = vunpack.c.h.bf16 %v3360
    %v3379 = vunpack.c.l.bf16 %v3361
    %v3380 = vunpack.c.h.bf16 %v3361
    %v3381 = vunpack.c.l.bf16 %v3362
    %v3382 = vunpack.c.h.bf16 %v3362
    %v3383 = vunpack.c.l.bf16 %v3363
    %v3384 = vunpack.c.h.bf16 %v3363
    %v3385 = vunpack.c.l.bf16 %v3364
    %v3386 = vunpack.c.h.bf16 %v3364
    %v3387 = vunpack.c.l.bf16 %v3365
    %v3388 = vunpack.c.h.bf16 %v3365
    %v3389 = vunpack.c.l.bf16 %v3366
    %v3390 = vunpack.c.h.bf16 %v3366
    %v3391 = vunpack.c.l.bf16 %v3367
    %v3392 = vunpack.c.h.bf16 %v3367
    %v3393 = vunpack.c.l.bf16 %v3368
    %v3394 = vunpack.c.h.bf16 %v3368
    %v3395 = vunpack.c.l.bf16 %v3369
    %v3396 = vunpack.c.h.bf16 %v3369
    %v3397 = vunpack.c.l.bf16 %v3370
    %v3398 = vunpack.c.h.bf16 %v3370
    %v3399 = vunpack.c.l.bf16 %v3371
    %v3400 = vunpack.c.h.bf16 %v3371
    %v3401 = vunpack.c.l.bf16 %v3372
    %v3402 = vunpack.c.h.bf16 %v3372
    %v3403 = vunpack.c.l.bf16 %v3373
    %v3404 = vunpack.c.h.bf16 %v3373
    %v3405 = vunpack.c.l.bf16 %v3374
    %v3406 = vunpack.c.h.bf16 %v3374
    %3407 = vst.msk [vmem:[%s15] sm:$0xff] %vm205, %v3375
    %3408 = vst.msk [vmem:[%s15 + $0x8] sm:$0xff] %vm205, %v3376
    %3409 = vst.msk [vmem:[%s15 + $0x10] sm:$0xff] %vm205, %v3377
    %3410 = vst.msk [vmem:[%s15 + $0x18] sm:$0xff] %vm205, %v3378
    %3411 = vst.msk [vmem:[%s15 + $0x20] sm:$0xff] %vm205, %v3379
    %3412 = vst.msk [vmem:[%s15 + $0x28] sm:$0xff] %vm205, %v3380
    %3413 = vst.msk [vmem:[%s15 + $0x30] sm:$0xff] %vm205, %v3381
    %3414 = vst.msk [vmem:[%s15 + $0x38] sm:$0xff] %vm205, %v3382
    %3415 = vst.msk [vmem:[%s15 + $0x40] sm:$0xff] %vm205, %v3383
    %3416 = vst.msk [vmem:[%s15 + $0x48] sm:$0xff] %vm205, %v3384
    %3417 = vst.msk [vmem:[%s15 + $0x50] sm:$0xff] %vm205, %v3385
    %3418 = vst.msk [vmem:[%s15 + $0x58] sm:$0xff] %vm205, %v3386
    %3419 = vst.msk [vmem:[%s15 + $0x60] sm:$0xff] %vm205, %v3387
    %3420 = vst.msk [vmem:[%s15 + $0x68] sm:$0xff] %vm205, %v3388
    %3421 = vst.msk [vmem:[%s15 + $0x70] sm:$0xff] %vm205, %v3389
    %3422 = vst.msk [vmem:[%s15 + $0x78] sm:$0xff] %vm205, %v3390
    %3423 = vst.msk [vmem:[%s15 + $0x80] sm:$0xff] %vm205, %v3391
    %3424 = vst.msk [vmem:[%s15 + $0x88] sm:$0xff] %vm205, %v3392
    %3425 = vst.msk [vmem:[%s15 + $0x90] sm:$0xff] %vm205, %v3393
    %3426 = vst.msk [vmem:[%s15 + $0x98] sm:$0xff] %vm205, %v3394
    %3427 = vst.msk [vmem:[%s15 + $0xa0] sm:$0xff] %vm205, %v3395
    %3428 = vst.msk [vmem:[%s15 + $0xa8] sm:$0xff] %vm205, %v3396
    %3429 = vst.msk [vmem:[%s15 + $0xb0] sm:$0xff] %vm205, %v3397
    %3430 = vst.msk [vmem:[%s15 + $0xb8] sm:$0xff] %vm205, %v3398
    %3431 = vst.msk [vmem:[%s15 + $0xc0] sm:$0xff] %vm205, %v3399
    %3432 = vst.msk [vmem:[%s15 + $0xc8] sm:$0xff] %vm205, %v3400
    %3433 = vst.msk [vmem:[%s15 + $0xd0] sm:$0xff] %vm205, %v3401
    %3434 = vst.msk [vmem:[%s15 + $0xd8] sm:$0xff] %vm205, %v3402
    %3435 = vst.msk [vmem:[%s15 + $0xe0] sm:$0xff] %vm205, %v3403
    %3436 = vst.msk [vmem:[%s15 + $0xe8] sm:$0xff] %vm205, %v3404
    %3437 = vst.msk [vmem:[%s15 + $0xf0] sm:$0xff] %vm205, %v3405
    %3438 = vst.msk [vmem:[%s15 + $0xf8] sm:$0xff] %vm205, %v3406
    // Predicated region
    $region74: #{feedforward_nn.1} parent=1 // pred_check
      _
    $region75: #{feedforward_nn.1} parent=1 // pred_check_branch
      %3440 = sbr.rel (0) target = $region77
    $region76: #{feedforward_nn.1} parent=1 // pred_region
      _
    $region77: #{feedforward_nn.1} parent=1 // pred_fallthru
      _
    // Predicated region
    $region78: #{feedforward_nn.1} parent=1 // pred_check
      _
    $region79: #{feedforward_nn.1} parent=1 // pred_check_branch
      %3442 = sbr.rel (0) target = $region81
    $region80: #{feedforward_nn.1} parent=1 // pred_region
      _
    $region81: #{feedforward_nn.1} parent=1 // pred_fallthru
      _
    %3443 = vsyncpa [#allocation3], 1
    %3444 = vsyncpa [#allocation5], 1

</llo_original>
